<compile_context>
chip_gen: v6e
topology: v6e:2x2x1
jax: 0.10.0
libtpu: 0.0.40
codegen_flags: <defaults>
</compile_context>

<pallas_src>
import functools

import numpy as np
import jax
import jax.numpy as jnp
from jax import lax
from jax.experimental import pallas as pl
from jax.experimental.pallas import tpu as pltpu


def _attention_dec_kernel(qk_ref, mask_ref, x_ref, wv_ref, wp_ref, bp_ref,
                          o_ref, *, approx_recip):
    """One grid step: `bb` batches, ALL heads stacked along rows.

    qk_ref   : (H*N, C)      pre-scaled per-head-masked Q @ Wk (batch-invariant, resident)
    mask_ref : (H, 1, C)     0/1 head->channel masks, f32 (resident)
    x_ref    : (bb, N, C)    tokens for this batch block (compute dtype)
    wv_ref   : (C, C)        V projection weight, pre-transposed (resident)
    wp_ref   : (C, C)        output projection weight, pre-transposed (resident)
    bp_ref   : (1, C)        output projection bias, f32 (resident)
    o_ref    : (1, N, bb*C)  output slab; local batch b -> columns [b*C, (b+1)*C)
    """
    bb, N, C = x_ref.shape
    H = mask_ref.shape[0]
    cdt = qk_ref.dtype                      # MXU operand dtype (bf16 or f32)

    qk = qk_ref[...]                        # (H*N, C)
    mask = mask_ref[...]                    # (H, 1, C) f32
    wv = wv_ref[...]                        # (C, C)
    wp = wp_ref[...]                        # (C, C)
    bias = bp_ref[...]                      # (1, C) f32

    outs = []
    for b in range(bb):                     # tiny static loop (bb is 1 or 2 here)
        xb = x_ref[b]                                                       # (N, C)
        # all-head scores in one matmul: (H*N, C) x (N, C)^T -> (H*N, N)
        s = lax.dot_general(qk, xb, (((1,), (1,)), ((), ())),
                            preferred_element_type=jnp.float32)
        s = s - jnp.max(s, axis=-1, keepdims=True)
        p = jnp.exp(s)                                                      # f32
        inv_l = pl.reciprocal(jnp.sum(p, axis=-1, keepdims=True),
                              approx=approx_recip)                          # (H*N, 1)

        # V projection only (K projection was hoisted into the wrapper via qk)
        v = jnp.dot(xb, wv, preferred_element_type=jnp.float32).astype(cdt)   # (N, C)
        pv = jnp.dot(p.astype(cdt), v, preferred_element_type=jnp.float32)    # (H*N, C)

        # deferred softmax normalisation + head recombination (masked sum over H)
        y = jnp.sum((pv * inv_l).reshape(H, N, C) * mask, axis=0)           # (N, C) f32

        # output projection + bias (kept f32 accumulation)
        outs.append(jnp.dot(y.astype(cdt), wp,
                            preferred_element_type=jnp.float32) + bias)     # (N, C)

    slab = outs[0] if bb == 1 else jnp.concatenate(outs, axis=-1)           # (N, bb*C)
    o_ref[0] = slab.astype(o_ref.dtype)     # single lane-dense store


def _default_batch_block(B):
    """v7x has 2 TensorCores/chip -> one batch block per core; single-TC
    v5e/v6e prefer a single grid step with batch folded into the kernel."""
    try:
        kind = jax.devices()[0].device_kind.lower()
    except Exception:
        kind = ""
    if "v7" in kind and B % 2 == 0:
        return B // 2
    return B


def attention_dec_forward(x, H, W, params, num_heads, sr_ratio=1,
                          compute_dtype=jnp.bfloat16, batch_block=None):
    """JAX/Pallas forward equivalent to Attention_dec.forward(x, H, W).

    Dropouts are identity (inference).  `compute_dtype` is the MXU operand
    dtype (accumulation is always f32); bf16 recommended on v6e/v7x.
    """
    if sr_ratio != 1:
        # TODO(synk): sr_ratio > 1 (strided Conv2d + LayerNorm) not implemented.
        raise NotImplementedError("sr_ratio > 1 not supported")

    B, N, C = x.shape
    assert C % num_heads == 0
    d = C // num_heads
    scale = d ** -0.5

    bb = batch_block if batch_block is not None else _default_batch_block(B)
    if bb <= 0 or B % bb != 0:
        bb = B                      # fall back to a single grid step
    G = B // bb

    # ---- batch-invariant Q / K-side work, hoisted out of the kernel --------
    task_query = params["task_query"][0]                    # (nq, C)
    nq = task_query.shape[0]
    q_full = task_query @ params["wq"].T                    # (nq, C)  (q Linear, no bias)
    # F.interpolate(mode='nearest') over the token axis is a row gather with
    # idx = floor(i * nq / N); it commutes with the head split and the Linear.
    idx = (jnp.arange(N) * nq) // N
    q_int = q_full[idx]                                     # (N, C)

    head_of_col = jnp.arange(C) // d
    mask2 = (head_of_col[None, :] ==
             jnp.arange(num_heads)[:, None]).astype(jnp.float32)   # (H, C) exact 0/1

    # scale * q_h @ k_h^T == ((q * mask_h * scale) @ Wk) @ x^T, so the entire
    # K side collapses into one resident stacked operand.
    wk = params["wkv"][:C]                                  # (C, C) [out, in]
    q_masked = q_int[None, :, :] * mask2[:, None, :]        # (H, N, C)
    qk = (q_masked.reshape(num_heads * N, C) @ wk) * scale  # (H*N, C) f32
    qk = qk.astype(compute_dtype)

    mask3 = mask2.reshape(num_heads, 1, C)                  # f32 recombination mask
    wv_t = params["wkv"][C:].T.astype(compute_dtype)        # (C, C)
    wp_t = params["wp"].T.astype(compute_dtype)             # (C, C)
    bp = params["bp"].reshape(1, C).astype(jnp.float32)     # (1, C)
    x_cd = x.astype(compute_dtype)                          # halves x DMA bytes on bf16

    approx_recip = jnp.dtype(compute_dtype) == jnp.dtype(jnp.bfloat16)
    kernel = functools.partial(_attention_dec_kernel, approx_recip=approx_recip)

    out = pl.pallas_call(
        kernel,
        out_shape=jax.ShapeDtypeStruct((G, N, bb * C), jnp.float32),
        grid_spec=pltpu.PrefetchScalarGridSpec(
            num_scalar_prefetch=0,
            grid=(G,),
            in_specs=[
                pl.BlockSpec((num_heads * N, C), lambda g: (0, 0)),     # qk (resident)
                pl.BlockSpec((num_heads, 1, C), lambda g: (0, 0, 0)),   # head masks
                pl.BlockSpec((bb, N, C), lambda g: (g, 0, 0)),          # x batch block
                pl.BlockSpec((C, C), lambda g: (0, 0)),                 # W_v^T
                pl.BlockSpec((C, C), lambda g: (0, 0)),                 # W_proj^T
                pl.BlockSpec((1, C), lambda g: (0, 0)),                 # b_proj
            ],
            out_specs=pl.BlockSpec((1, N, bb * C), lambda g: (g, 0, 0)),
        ),
        compiler_params=pltpu.CompilerParams(
            dimension_semantics=("parallel",)),        # shards batch blocks on v7x
    )(qk, mask3, x_cd, wv_t, wp_t, bp)

    # (G, N, bb*C) slab -> (B, N, C)
    out = out.reshape(G, N, bb, C).transpose(0, 2, 1, 3).reshape(B, N, C)
    return out


def reference(x, params, num_heads):
    """Pure-JAX reference mirroring the PyTorch forward (sr_ratio=1)."""
    B, N, C = x.shape
    d = C // num_heads
    scale = d ** -0.5
    task_query = params["task_query"]
    nq = task_query.shape[1]
    tq = jnp.broadcast_to(task_query, (B, nq, C))
    q = (tq @ params["wq"].T).reshape(B, nq, num_heads, d).transpose(0, 2, 1, 3)
    kv = (x @ params["wkv"].T).reshape(B, N, 2, num_heads, d).transpose(2, 0, 3, 1, 4)
    k, v = kv[0], kv[1]
    idx = (jnp.arange(N) * nq) // N
    q = q[:, :, idx, :]                                   # nearest interpolate
    attn = jax.nn.softmax((q @ jnp.swapaxes(k, -1, -2)) * scale, axis=-1)
    y = (attn @ v).transpose(0, 2, 1, 3).reshape(B, N, C)
    return y @ params["wp"].T + params["bp"]


if __name__ == "__main__":
    key = jax.random.PRNGKey(0)
    B, Hs, Ws, C, num_heads = 2, 8, 8, 64, 8        # dim=64, head_dim=8, N=64
    N = Hs * Ws

    ks = jax.random.split(key, 5)
    params = {
        # task_query ~ randn(1, 48, dim)
        "task_query": jax.random.normal(ks[0], (1, 48, C), jnp.float32),
        # Linear weights: trunc_normal(std=0.02) ~ 0.02 * normal; biases = 0
        "wq": 0.02 * jax.random.normal(ks[1], (C, C), jnp.float32),
        "wkv": 0.02 * jax.random.normal(ks[2], (2 * C, C), jnp.float32),
        "wp": 0.02 * jax.random.normal(ks[3], (C, C), jnp.float32),
        "bp": jnp.zeros((C,), jnp.float32),
    }
    x = jax.random.normal(ks[4], (B, N, C), jnp.float32)

    ref = reference(x, params, num_heads)

    # f32 MXU-operand path, tight tolerance (auto grid shaping).
    out_f32 = attention_dec_forward(x, Hs, Ws, params, num_heads,
                                    compute_dtype=jnp.float32)
    out_f32 = jax.block_until_ready(out_f32)
    assert out_f32.shape == (B, N, C)
    np.testing.assert_allclose(np.asarray(out_f32), np.asarray(ref),
                               rtol=1e-4, atol=1e-4)

    # default bf16 MXU-operand path (recommended on v6e/v7x); f32 accumulation.
    out_bf16 = attention_dec_forward(x, Hs, Ws, params, num_heads)
    out_bf16 = jax.block_until_ready(out_bf16)
    np.testing.assert_allclose(np.asarray(out_bf16), np.asarray(ref),
                               rtol=5e-2, atol=5e-3)

    # explicit per-batch grid split (the layout v7x megacore prefers).
    out_split = attention_dec_forward(x, Hs, Ws, params, num_heads,
                                      compute_dtype=jnp.float32, batch_block=1)
    out_split = jax.block_until_ready(out_split)
    np.testing.assert_allclose(np.asarray(out_split), np.asarray(ref),
                               rtol=1e-4, atol=1e-4)

    print("KERNEL_OK")
</pallas_src>

<mosaic_0001>
module attributes {stable_mosaic.version = 11 : i64} {
  func.func @_attention_dec_kernel(%arg0: i32, %arg1: memref<512x64xf32, #tpu.memory_space<vmem>>, %arg2: memref<8x1x64xf32, #tpu.memory_space<vmem>>, %arg3: memref<2x64x64xf32, #tpu.memory_space<vmem>>, %arg4: memref<64x64xf32, #tpu.memory_space<vmem>>, %arg5: memref<64x64xf32, #tpu.memory_space<vmem>>, %arg6: memref<1x64xf32, #tpu.memory_space<vmem>>, %arg7: memref<1x64x128xf32, #tpu.memory_space<vmem>>) attributes {dimension_semantics = [#tpu.dimension_semantics<parallel>], iteration_bounds = array<i64: 1>, scalar_prefetch = 0 : i64, scratch_operands = 0 : i64, tpu.core_type = #tpu.core_type<tc>, window_params = [{pipeline_mode = #tpu.pipeline_mode<synchronous>, transform_indices = @transform_0, window_bounds = array<i64: 512, 64>}, {pipeline_mode = #tpu.pipeline_mode<synchronous>, transform_indices = @transform_1, window_bounds = array<i64: 8, 1, 64>}, {transform_indices = @transform_2, window_bounds = array<i64: 2, 64, 64>}, {pipeline_mode = #tpu.pipeline_mode<synchronous>, transform_indices = @transform_3, window_bounds = array<i64: 64, 64>}, {pipeline_mode = #tpu.pipeline_mode<synchronous>, transform_indices = @transform_4, window_bounds = array<i64: 64, 64>}, {pipeline_mode = #tpu.pipeline_mode<synchronous>, transform_indices = @transform_5, window_bounds = array<i64: 1, 64>}, {transform_indices = @transform_6, window_bounds = array<i64: 1, 64, 128>}]} {
    %c0 = arith.constant 0 : index
    %c0_0 = arith.constant 0 : index
    %0 = vector.load %arg1[%c0, %c0_0] : memref<512x64xf32, #tpu.memory_space<vmem>>, vector<512x64xf32>
    %c0_1 = arith.constant 0 : index
    %c0_2 = arith.constant 0 : index
    %c0_3 = arith.constant 0 : index
    %1 = vector.load %arg2[%c0_1, %c0_2, %c0_3] : memref<8x1x64xf32, #tpu.memory_space<vmem>>, vector<8x1x64xf32>
    %c0_4 = arith.constant 0 : index
    %c0_5 = arith.constant 0 : index
    %2 = vector.load %arg4[%c0_4, %c0_5] : memref<64x64xf32, #tpu.memory_space<vmem>>, vector<64x64xf32>
    %c0_6 = arith.constant 0 : index
    %c0_7 = arith.constant 0 : index
    %3 = vector.load %arg5[%c0_6, %c0_7] : memref<64x64xf32, #tpu.memory_space<vmem>>, vector<64x64xf32>
    %c0_8 = arith.constant 0 : index
    %c0_9 = arith.constant 0 : index
    %4 = vector.load %arg6[%c0_8, %c0_9] : memref<1x64xf32, #tpu.memory_space<vmem>>, vector<1x64xf32>
    %c0_10 = arith.constant 0 : index
    %c0_11 = arith.constant 0 : index
    %c0_12 = arith.constant 0 : index
    %5 = vector.load %arg3[%c0_10, %c0_11, %c0_12] : memref<2x64x64xf32, #tpu.memory_space<vmem>>, vector<1x64x64xf32>
    %6 = vector.shape_cast %5 : vector<1x64x64xf32> to vector<64x64xf32>
    %cst = arith.constant dense<0.000000e+00> : vector<512x64xf32>
    %7 = tpu.matmul %0, %6, %cst {dimension_numbers = #tpu.dot_dimension_numbers<[1], [1], [0], [0], [0, 0, 1, 0], [], []>} : vector<512x64xf32>, vector<64x64xf32>, vector<512x64xf32> -> vector<512x64xf32>
    %cst_13 = arith.constant dense<0xFF800000> : vector<512xf32>
    %8 = vector.multi_reduction <maximumf>, %7, %cst_13 [1] : vector<512x64xf32> to vector<512xf32>
    %9 = vector.shape_cast %8 : vector<512xf32> to vector<512x1xf32>
    %10 = vector.broadcast %9 : vector<512x1xf32> to vector<512x64xf32>
    %11 = arith.subf %7, %10 : vector<512x64xf32>
    %12 = math.exp %11 : vector<512x64xf32>
    %cst_14 = arith.constant dense<0.000000e+00> : vector<512xf32>
    %13 = vector.multi_reduction <add>, %12, %cst_14 [1] : vector<512x64xf32> to vector<512xf32>
    %14 = vector.shape_cast %13 : vector<512xf32> to vector<512x1xf32>
    %15 = tpu.reciprocal %14 : vector<512x1xf32> -> vector<512x1xf32>
    %cst_15 = arith.constant dense<0.000000e+00> : vector<64x64xf32>
    %16 = tpu.matmul %6, %2, %cst_15 {dimension_numbers = #tpu.dot_dimension_numbers<[1], [0], [0], [1], [0, 0, 1, 1], [], []>} : vector<64x64xf32>, vector<64x64xf32>, vector<64x64xf32> -> vector<64x64xf32>
    %cst_16 = arith.constant dense<0.000000e+00> : vector<512x64xf32>
    %17 = tpu.matmul %12, %16, %cst_16 {dimension_numbers = #tpu.dot_dimension_numbers<[1], [0], [0], [1], [0, 0, 1, 1], [], []>} : vector<512x64xf32>, vector<64x64xf32>, vector<512x64xf32> -> vector<512x64xf32>
    %18 = vector.broadcast %15 : vector<512x1xf32> to vector<512x64xf32>
    %19 = arith.mulf %17, %18 : vector<512x64xf32>
    %20 = vector.shape_cast %19 : vector<512x64xf32> to vector<8x64x64xf32>
    %21 = vector.broadcast %1 : vector<8x1x64xf32> to vector<8x64x64xf32>
    %22 = arith.mulf %20, %21 : vector<8x64x64xf32>
    %cst_17 = arith.constant dense<0.000000e+00> : vector<64x64xf32>
    %23 = vector.multi_reduction <add>, %22, %cst_17 [0] : vector<8x64x64xf32> to vector<64x64xf32>
    %cst_18 = arith.constant dense<0.000000e+00> : vector<64x64xf32>
    %24 = tpu.matmul %23, %3, %cst_18 {dimension_numbers = #tpu.dot_dimension_numbers<[1], [0], [0], [1], [0, 0, 1, 1], [], []>} : vector<64x64xf32>, vector<64x64xf32>, vector<64x64xf32> -> vector<64x64xf32>
    %25 = vector.broadcast %4 : vector<1x64xf32> to vector<64x64xf32>
    %26 = arith.addf %24, %25 : vector<64x64xf32>
    %c1 = arith.constant 1 : index
    %c0_19 = arith.constant 0 : index
    %c0_20 = arith.constant 0 : index
    %27 = vector.load %arg3[%c1, %c0_19, %c0_20] : memref<2x64x64xf32, #tpu.memory_space<vmem>>, vector<1x64x64xf32>
    %28 = vector.shape_cast %27 : vector<1x64x64xf32> to vector<64x64xf32>
    %cst_21 = arith.constant dense<0.000000e+00> : vector<512x64xf32>
    %29 = tpu.matmul %0, %28, %cst_21 {dimension_numbers = #tpu.dot_dimension_numbers<[1], [1], [0], [0], [0, 0, 1, 0], [], []>} : vector<512x64xf32>, vector<64x64xf32>, vector<512x64xf32> -> vector<512x64xf32>
    %cst_22 = arith.constant dense<0xFF800000> : vector<512xf32>
    %30 = vector.multi_reduction <maximumf>, %29, %cst_22 [1] : vector<512x64xf32> to vector<512xf32>
    %31 = vector.shape_cast %30 : vector<512xf32> to vector<512x1xf32>
    %32 = vector.broadcast %31 : vector<512x1xf32> to vector<512x64xf32>
    %33 = arith.subf %29, %32 : vector<512x64xf32>
    %34 = math.exp %33 : vector<512x64xf32>
    %cst_23 = arith.constant dense<0.000000e+00> : vector<512xf32>
    %35 = vector.multi_reduction <add>, %34, %cst_23 [1] : vector<512x64xf32> to vector<512xf32>
    %36 = vector.shape_cast %35 : vector<512xf32> to vector<512x1xf32>
    %37 = tpu.reciprocal %36 : vector<512x1xf32> -> vector<512x1xf32>
    %cst_24 = arith.constant dense<0.000000e+00> : vector<64x64xf32>
    %38 = tpu.matmul %28, %2, %cst_24 {dimension_numbers = #tpu.dot_dimension_numbers<[1], [0], [0], [1], [0, 0, 1, 1], [], []>} : vector<64x64xf32>, vector<64x64xf32>, vector<64x64xf32> -> vector<64x64xf32>
    %cst_25 = arith.constant dense<0.000000e+00> : vector<512x64xf32>
    %39 = tpu.matmul %34, %38, %cst_25 {dimension_numbers = #tpu.dot_dimension_numbers<[1], [0], [0], [1], [0, 0, 1, 1], [], []>} : vector<512x64xf32>, vector<64x64xf32>, vector<512x64xf32> -> vector<512x64xf32>
    %40 = vector.broadcast %37 : vector<512x1xf32> to vector<512x64xf32>
    %41 = arith.mulf %39, %40 : vector<512x64xf32>
    %42 = vector.shape_cast %41 : vector<512x64xf32> to vector<8x64x64xf32>
    %43 = vector.broadcast %1 : vector<8x1x64xf32> to vector<8x64x64xf32>
    %44 = arith.mulf %42, %43 : vector<8x64x64xf32>
    %cst_26 = arith.constant dense<0.000000e+00> : vector<64x64xf32>
    %45 = vector.multi_reduction <add>, %44, %cst_26 [0] : vector<8x64x64xf32> to vector<64x64xf32>
    %cst_27 = arith.constant dense<0.000000e+00> : vector<64x64xf32>
    %46 = tpu.matmul %45, %3, %cst_27 {dimension_numbers = #tpu.dot_dimension_numbers<[1], [0], [0], [1], [0, 0, 1, 1], [], []>} : vector<64x64xf32>, vector<64x64xf32>, vector<64x64xf32> -> vector<64x64xf32>
    %47 = vector.broadcast %4 : vector<1x64xf32> to vector<64x64xf32>
    %48 = arith.addf %46, %47 : vector<64x64xf32>
    %49 = tpu.concatenate %26, %48 in 1 : vector<64x64xf32>, vector<64x64xf32> -> vector<64x128xf32>
    %c0_28 = arith.constant 0 : index
    %c0_29 = arith.constant 0 : index
    %c0_30 = arith.constant 0 : index
    %50 = vector.load %arg7[%c0_28, %c0_29, %c0_30] : memref<1x64x128xf32, #tpu.memory_space<vmem>>, vector<1x64x128xf32>
    %51 = vector.shape_cast %50 : vector<1x64x128xf32> to vector<64x128xf32>
    %52 = vector.shape_cast %49 : vector<64x128xf32> to vector<1x64x128xf32>
    tpu.vector_store %arg7[%c0_28, %c0_29, %c0_30], %52 {strides = array<i32>} : memref<1x64x128xf32, #tpu.memory_space<vmem>>, vector<1x64x128xf32>,
    return
  }
  func.func @transform_0(%arg0: i32) -> (i32, i32) {
    %c0_i32 = arith.constant 0 : i32
    %c0_i32_0 = arith.constant 0 : i32
    %c0_i32_1 = arith.constant 0 : i32
    return %c0_i32, %c0_i32_0 : i32, i32
  }
  func.func @transform_1(%arg0: i32) -> (i32, i32, i32) {
    %c0_i32 = arith.constant 0 : i32
    %c0_i32_0 = arith.constant 0 : i32
    %c0_i32_1 = arith.constant 0 : i32
    %c0_i32_2 = arith.constant 0 : i32
    return %c0_i32, %c0_i32_0, %c0_i32_1 : i32, i32, i32
  }
  func.func @transform_2(%arg0: i32) -> (i32, i32, i32) {
    %c0_i32 = arith.constant 0 : i32
    %c0_i32_0 = arith.constant 0 : i32
    %c0_i32_1 = arith.constant 0 : i32
    return %arg0, %c0_i32, %c0_i32_0 : i32, i32, i32
  }
  func.func @transform_3(%arg0: i32) -> (i32, i32) {
    %c0_i32 = arith.constant 0 : i32
    %c0_i32_0 = arith.constant 0 : i32
    %c0_i32_1 = arith.constant 0 : i32
    return %c0_i32, %c0_i32_0 : i32, i32
  }
  func.func @transform_4(%arg0: i32) -> (i32, i32) {
    %c0_i32 = arith.constant 0 : i32
    %c0_i32_0 = arith.constant 0 : i32
    %c0_i32_1 = arith.constant 0 : i32
    return %c0_i32, %c0_i32_0 : i32, i32
  }
  func.func @transform_5(%arg0: i32) -> (i32, i32) {
    %c0_i32 = arith.constant 0 : i32
    %c0_i32_0 = arith.constant 0 : i32
    %c0_i32_1 = arith.constant 0 : i32
    return %c0_i32, %c0_i32_0 : i32, i32
  }
  func.func @transform_6(%arg0: i32) -> (i32, i32, i32) {
    %c0_i32 = arith.constant 0 : i32
    %c0_i32_0 = arith.constant 0 : i32
    %c0_i32_1 = arith.constant 0 : i32
    return %arg0, %c0_i32, %c0_i32_0 : i32, i32, i32
  }
}

</mosaic_0001>

<llo_original>
// kernel: tpu_custom_call.1
$region0: #{tpu_custom_call.1}
  #allocation0 [shape = 'u32[]', space=smem, size = 0x4, offset = 0x4, fixed_abs, tag = 'smem constant byte address 0x4 - core index']
  #allocation1 [shape = 'u32[144,128]{1,0:T(1,128)}', space=vmem, size = 0x12000, scoped, tag = 'internal scratch']
  %s0 = inlined_call_operand.vmem [shape: f32[512,64], index: 0, kind: input, shape index: {}]
  %s1 = inlined_call_operand.vmem [shape: f32[8,1,64], index: 1, kind: input, shape index: {}]
  %s2 = inlined_call_operand.vmem [shape: f32[2,64,64], index: 2, kind: input, shape index: {}]
  %s3 = inlined_call_operand.vmem [shape: f32[64,64], index: 3, kind: input, shape index: {}]
  %s4 = inlined_call_operand.vmem [shape: f32[64,64], index: 4, kind: input, shape index: {}]
  %s5 = inlined_call_operand.vmem [shape: f32[1,64], index: 5, kind: input, shape index: {}]
  %s6 = inlined_call_operand.hbm [shape: f32[1,64,128], index: 6, kind: output, shape index: {}]
  %s7 = sld [smem:[#allocation0]]
  $region34: #{tpu_custom_call.1} parent=0
    _
  %s9 = ssub.s32 1, %s7
  %s10 = scalar_select 0, %s9, %s7
  $region1: #{tpu_custom_call.1} parent=0
    #allocation2 [shape = 'u8[32768]{0}', space=vmem, size = 0x8000, scoped, tag = 'output window, operand 0, single buffered']
    #allocation3 [shape = 's32[1]{0}', space=sflag, size = 0x4, scoped, tag = 'scoped memory for tpu_custom_call.1']
    %11 = vsyncpa [#allocation3], 0
    // Predicated region
    $region2: #{tpu_custom_call.1} parent=1 // pred_check
      _
    $region3: #{tpu_custom_call.1} parent=1 // pred_check_branch
      %13 = sbr.rel (0) target = $region5
    $region4: #{tpu_custom_call.1} parent=1 // pred_region
      _
    $region5: #{tpu_custom_call.1} parent=1 // pred_fallthru
      _
    // Predicated region
    $region6: #{tpu_custom_call.1} parent=1 // pred_check
      _
    $region7: #{tpu_custom_call.1} parent=1 // pred_check_branch
      %15 = sbr.rel (0) target = $region9
    $region8: #{tpu_custom_call.1} parent=1 // pred_region
      _
    $region9: #{tpu_custom_call.1} parent=1 // pred_fallthru
      _
    // Predicated region
    $region10: #{tpu_custom_call.1} parent=1 // pred_check
      _
    $region11: #{tpu_custom_call.1} parent=1 // pred_check_branch
      %17 = sbr.rel (0) target = $region13
    $region12: #{tpu_custom_call.1} parent=1 // pred_region
      _
    $region13: #{tpu_custom_call.1} parent=1 // pred_fallthru
      _
    // Predicated region
    $region14: #{tpu_custom_call.1} parent=1 // pred_check
      _
    $region15: #{tpu_custom_call.1} parent=1 // pred_check_branch
      %19 = sbr.rel (0) target = $region17
    $region16: #{tpu_custom_call.1} parent=1 // pred_region
      _
    $region17: #{tpu_custom_call.1} parent=1 // pred_fallthru
      _
    // Predicated region
    $region18: #{tpu_custom_call.1} parent=1 // pred_check
      _
    $region19: #{tpu_custom_call.1} parent=1 // pred_check_branch
      %21 = sbr.rel (0) target = $region21
    $region20: #{tpu_custom_call.1} parent=1 // pred_region
      _
    $region21: #{tpu_custom_call.1} parent=1 // pred_fallthru
      _
    // Predicated region
    $region22: #{tpu_custom_call.1} parent=1 // pred_check
      _
    $region23: #{tpu_custom_call.1} parent=1 // pred_check_branch
      %23 = sbr.rel (0) target = $region25
    $region24: #{tpu_custom_call.1} parent=1 // pred_region
      _
    $region25: #{tpu_custom_call.1} parent=1 // pred_fallthru
      _
    %v24 = vld [vmem:[%s0] sm:$0xff]
    %v25 = vld [vmem:[%s0 + $0x8] sm:$0xff]
    %v26 = vld [vmem:[%s0 + $0x10] sm:$0xff]
    %v27 = vld [vmem:[%s0 + $0x18] sm:$0xff]
    %v28 = vld [vmem:[%s0 + $0x20] sm:$0xff]
    %v29 = vld [vmem:[%s0 + $0x28] sm:$0xff]
    %v30 = vld [vmem:[%s0 + $0x30] sm:$0xff]
    %v31 = vld [vmem:[%s0 + $0x38] sm:$0xff]
    %v32 = vld [vmem:[%s0 + $0x40] sm:$0xff]
    %v33 = vld [vmem:[%s0 + $0x48] sm:$0xff]
    %v34 = vld [vmem:[%s0 + $0x50] sm:$0xff]
    %v35 = vld [vmem:[%s0 + $0x58] sm:$0xff]
    %v36 = vld [vmem:[%s0 + $0x60] sm:$0xff]
    %v37 = vld [vmem:[%s0 + $0x68] sm:$0xff]
    %v38 = vld [vmem:[%s0 + $0x70] sm:$0xff]
    %v39 = vld [vmem:[%s0 + $0x78] sm:$0xff]
    %v40 = vld [vmem:[%s0 + $0x80] sm:$0xff]
    %v41 = vld [vmem:[%s0 + $0x88] sm:$0xff]
    %v42 = vld [vmem:[%s0 + $0x90] sm:$0xff]
    %v43 = vld [vmem:[%s0 + $0x98] sm:$0xff]
    %v44 = vld [vmem:[%s0 + $0xa0] sm:$0xff]
    %v45 = vld [vmem:[%s0 + $0xa8] sm:$0xff]
    %v46 = vld [vmem:[%s0 + $0xb0] sm:$0xff]
    %v47 = vld [vmem:[%s0 + $0xb8] sm:$0xff]
    %v48 = vld [vmem:[%s0 + $0xc0] sm:$0xff]
    %v49 = vld [vmem:[%s0 + $0xc8] sm:$0xff]
    %v50 = vld [vmem:[%s0 + $0xd0] sm:$0xff]
    %v51 = vld [vmem:[%s0 + $0xd8] sm:$0xff]
    %v52 = vld [vmem:[%s0 + $0xe0] sm:$0xff]
    %v53 = vld [vmem:[%s0 + $0xe8] sm:$0xff]
    %v54 = vld [vmem:[%s0 + $0xf0] sm:$0xff]
    %v55 = vld [vmem:[%s0 + $0xf8] sm:$0xff]
    %v56 = vld [vmem:[%s0 + $0x100] sm:$0xff]
    %v57 = vld [vmem:[%s0 + $0x108] sm:$0xff]
    %v58 = vld [vmem:[%s0 + $0x110] sm:$0xff]
    %v59 = vld [vmem:[%s0 + $0x118] sm:$0xff]
    %v60 = vld [vmem:[%s0 + $0x120] sm:$0xff]
    %v61 = vld [vmem:[%s0 + $0x128] sm:$0xff]
    %v62 = vld [vmem:[%s0 + $0x130] sm:$0xff]
    %v63 = vld [vmem:[%s0 + $0x138] sm:$0xff]
    %v64 = vld [vmem:[%s0 + $0x140] sm:$0xff]
    %v65 = vld [vmem:[%s0 + $0x148] sm:$0xff]
    %v66 = vld [vmem:[%s0 + $0x150] sm:$0xff]
    %v67 = vld [vmem:[%s0 + $0x158] sm:$0xff]
    %v68 = vld [vmem:[%s0 + $0x160] sm:$0xff]
    %v69 = vld [vmem:[%s0 + $0x168] sm:$0xff]
    %v70 = vld [vmem:[%s0 + $0x170] sm:$0xff]
    %v71 = vld [vmem:[%s0 + $0x178] sm:$0xff]
    %v72 = vld [vmem:[%s0 + $0x180] sm:$0xff]
    %v73 = vld [vmem:[%s0 + $0x188] sm:$0xff]
    %v74 = vld [vmem:[%s0 + $0x190] sm:$0xff]
    %v75 = vld [vmem:[%s0 + $0x198] sm:$0xff]
    %v76 = vld [vmem:[%s0 + $0x1a0] sm:$0xff]
    %v77 = vld [vmem:[%s0 + $0x1a8] sm:$0xff]
    %v78 = vld [vmem:[%s0 + $0x1b0] sm:$0xff]
    %v79 = vld [vmem:[%s0 + $0x1b8] sm:$0xff]
    %v80 = vld [vmem:[%s0 + $0x1c0] sm:$0xff]
    %v81 = vld [vmem:[%s0 + $0x1c8] sm:$0xff]
    %v82 = vld [vmem:[%s0 + $0x1d0] sm:$0xff]
    %v83 = vld [vmem:[%s0 + $0x1d8] sm:$0xff]
    %v84 = vld [vmem:[%s0 + $0x1e0] sm:$0xff]
    %v85 = vld [vmem:[%s0 + $0x1e8] sm:$0xff]
    %v86 = vld [vmem:[%s0 + $0x1f0] sm:$0xff]
    %v87 = vld [vmem:[%s0 + $0x1f8] sm:$0xff]
    %v88 = vld [vmem:[%s1] sm:$0x1]
    %v89 = vld [vmem:[%s1 + $0x1] sm:$0x1]
    %v90 = vld [vmem:[%s1 + $0x2] sm:$0x1]
    %v91 = vld [vmem:[%s1 + $0x3] sm:$0x1]
    %v92 = vld [vmem:[%s1 + $0x4] sm:$0x1]
    %v93 = vld [vmem:[%s1 + $0x5] sm:$0x1]
    %v94 = vld [vmem:[%s1 + $0x6] sm:$0x1]
    %v95 = vld [vmem:[%s1 + $0x7] sm:$0x1]
    %v96 = vld [vmem:[%s3] sm:$0xff]
    %v97 = vld [vmem:[%s3 + $0x8] sm:$0xff]
    %v98 = vld [vmem:[%s3 + $0x10] sm:$0xff]
    %v99 = vld [vmem:[%s3 + $0x18] sm:$0xff]
    %v100 = vld [vmem:[%s3 + $0x20] sm:$0xff]
    %v101 = vld [vmem:[%s3 + $0x28] sm:$0xff]
    %v102 = vld [vmem:[%s3 + $0x30] sm:$0xff]
    %v103 = vld [vmem:[%s3 + $0x38] sm:$0xff]
    %v104 = vld [vmem:[%s4] sm:$0xff]
    %v105 = vld [vmem:[%s4 + $0x8] sm:$0xff]
    %v106 = vld [vmem:[%s4 + $0x10] sm:$0xff]
    %v107 = vld [vmem:[%s4 + $0x18] sm:$0xff]
    %v108 = vld [vmem:[%s4 + $0x20] sm:$0xff]
    %v109 = vld [vmem:[%s4 + $0x28] sm:$0xff]
    %v110 = vld [vmem:[%s4 + $0x30] sm:$0xff]
    %v111 = vld [vmem:[%s4 + $0x38] sm:$0xff]
    %v112 = vld [vmem:[%s5] sm:$0x1]
    %v113 = vld [vmem:[%s2] sm:$0xff]
    %v114 = vld [vmem:[%s2 + $0x8] sm:$0xff]
    %v115 = vld [vmem:[%s2 + $0x10] sm:$0xff]
    %v116 = vld [vmem:[%s2 + $0x18] sm:$0xff]
    %v117 = vld [vmem:[%s2 + $0x20] sm:$0xff]
    %v118 = vld [vmem:[%s2 + $0x28] sm:$0xff]
    %v119 = vld [vmem:[%s2 + $0x30] sm:$0xff]
    %v120 = vld [vmem:[%s2 + $0x38] sm:$0xff]
    %vm121 = vcmask 523264
    %v123 = vsel %vm121, %v24, 0
    %v126 = vsel %vm121, %v25, 0
    %v129 = vsel %vm121, %v26, 0
    %v132 = vsel %vm121, %v27, 0
    %v135 = vsel %vm121, %v28, 0
    %v138 = vsel %vm121, %v29, 0
    %v141 = vsel %vm121, %v30, 0
    %v144 = vsel %vm121, %v31, 0
    %v147 = vsel %vm121, %v32, 0
    %v150 = vsel %vm121, %v33, 0
    %v153 = vsel %vm121, %v34, 0
    %v156 = vsel %vm121, %v35, 0
    %v159 = vsel %vm121, %v36, 0
    %v162 = vsel %vm121, %v37, 0
    %v165 = vsel %vm121, %v38, 0
    %v168 = vsel %vm121, %v39, 0
    %v171 = vsel %vm121, %v40, 0
    %v174 = vsel %vm121, %v41, 0
    %v177 = vsel %vm121, %v42, 0
    %v180 = vsel %vm121, %v43, 0
    %v183 = vsel %vm121, %v44, 0
    %v186 = vsel %vm121, %v45, 0
    %v189 = vsel %vm121, %v46, 0
    %v192 = vsel %vm121, %v47, 0
    %v195 = vsel %vm121, %v48, 0
    %v198 = vsel %vm121, %v49, 0
    %v201 = vsel %vm121, %v50, 0
    %v204 = vsel %vm121, %v51, 0
    %v207 = vsel %vm121, %v52, 0
    %v210 = vsel %vm121, %v53, 0
    %v213 = vsel %vm121, %v54, 0
    %v216 = vsel %vm121, %v55, 0
    %v219 = vsel %vm121, %v56, 0
    %v222 = vsel %vm121, %v57, 0
    %v225 = vsel %vm121, %v58, 0
    %v228 = vsel %vm121, %v59, 0
    %v231 = vsel %vm121, %v60, 0
    %v234 = vsel %vm121, %v61, 0
    %v237 = vsel %vm121, %v62, 0
    %v240 = vsel %vm121, %v63, 0
    %v243 = vsel %vm121, %v64, 0
    %v246 = vsel %vm121, %v65, 0
    %v249 = vsel %vm121, %v66, 0
    %v252 = vsel %vm121, %v67, 0
    %v255 = vsel %vm121, %v68, 0
    %v258 = vsel %vm121, %v69, 0
    %v261 = vsel %vm121, %v70, 0
    %v264 = vsel %vm121, %v71, 0
    %v267 = vsel %vm121, %v72, 0
    %v270 = vsel %vm121, %v73, 0
    %v273 = vsel %vm121, %v74, 0
    %v276 = vsel %vm121, %v75, 0
    %v279 = vsel %vm121, %v76, 0
    %v282 = vsel %vm121, %v77, 0
    %v285 = vsel %vm121, %v78, 0
    %v288 = vsel %vm121, %v79, 0
    %v291 = vsel %vm121, %v80, 0
    %v294 = vsel %vm121, %v81, 0
    %v297 = vsel %vm121, %v82, 0
    %v300 = vsel %vm121, %v83, 0
    %v303 = vsel %vm121, %v84, 0
    %v306 = vsel %vm121, %v85, 0
    %v309 = vsel %vm121, %v86, 0
    %v312 = vsel %vm121, %v87, 0
    %v315 = vsel %vm121, %v113, 0
    %v318 = vsel %vm121, %v114, 0
    %v321 = vsel %vm121, %v115, 0
    %v324 = vsel %vm121, %v116, 0
    %v327 = vsel %vm121, %v117, 0
    %v330 = vsel %vm121, %v118, 0
    %v333 = vsel %vm121, %v119, 0
    %v336 = vsel %vm121, %v120, 0
    %338 = vmatprep.subr.mxu0 0.0
    %339 = vmatpush1.xpose.msra.mxu0 0.0
    %340 = vmatprep.subr.mxu0 0.0
    %341 = vmatpush1.xpose.msra.mxu0 0.0
    %342 = vmatprep.subr.mxu0 0.0
    %343 = vmatpush1.xpose.msra.mxu0 0.0
    %344 = vmatprep.subr.mxu0 0.0
    %345 = vmatpush1.xpose.msra.mxu0 0.0
    %346 = vmatprep.subr.mxu0 0.0
    %347 = vmatpush1.xpose.msra.mxu0 0.0
    %348 = vmatprep.subr.mxu0 0.0
    %349 = vmatpush1.xpose.msra.mxu0 0.0
    %350 = vmatprep.subr.mxu0 0.0
    %351 = vmatpush1.xpose.msra.mxu0 0.0
    %352 = vmatprep.subr.mxu0 0.0
    %353 = vmatpush1.xpose.msra.mxu0 0.0
    %354 = vmatprep.subr.mxu0 0.0
    %355 = vmatpush1.xpose.msra.mxu0 %v336
    %356 = vmatprep.subr.mxu0 0.0
    %357 = vmatpush1.xpose.msra.mxu0 %v333
    %358 = vmatprep.subr.mxu0 0.0
    %359 = vmatpush1.xpose.msra.mxu0 %v330
    %360 = vmatprep.subr.mxu0 0.0
    %361 = vmatpush1.xpose.msra.mxu0 %v327
    %362 = vmatprep.subr.mxu0 0.0
    %363 = vmatpush1.xpose.msra.mxu0 %v324
    %364 = vmatprep.subr.mxu0 0.0
    %365 = vmatpush1.xpose.msra.mxu0 %v321
    %366 = vmatprep.subr.mxu0 0.0
    %367 = vmatpush1.xpose.msra.mxu0 %v318
    %368 = vmatprep.subr.mxu0 0.0
    %369 = vmatpush1.xpose.msra.mxu0 %v315
    %370 = vmatprep.subr.mxu0 0.0
    %371 = vmatpush2.xpose.msra.mxu0 0.0
    %372 = vmatprep.subr.mxu0 0.0
    %373 = vmatpush2.xpose.msra.mxu0 0.0
    %374 = vmatprep.subr.mxu0 0.0
    %375 = vmatpush2.xpose.msra.mxu0 0.0
    %376 = vmatprep.subr.mxu0 0.0
    %377 = vmatpush2.xpose.msra.mxu0 0.0
    %378 = vmatprep.subr.mxu0 0.0
    %379 = vmatpush2.xpose.msra.mxu0 0.0
    %380 = vmatprep.subr.mxu0 0.0
    %381 = vmatpush2.xpose.msra.mxu0 0.0
    %382 = vmatprep.subr.mxu0 0.0
    %383 = vmatpush2.xpose.msra.mxu0 0.0
    %384 = vmatprep.subr.mxu0 0.0
    %385 = vmatpush2.xpose.msra.mxu0 0.0
    %386 = vmatprep.subr.mxu0 0.0
    %387 = vmatpush2.xpose.msra.mxu0 0.0
    %388 = vmatprep.subr.mxu0 0.0
    %389 = vmatpush2.xpose.msra.mxu0 0.0
    %390 = vmatprep.subr.mxu0 0.0
    %391 = vmatpush2.xpose.msra.mxu0 0.0
    %392 = vmatprep.subr.mxu0 0.0
    %393 = vmatpush2.xpose.msra.mxu0 0.0
    %394 = vmatprep.subr.mxu0 0.0
    %395 = vmatpush2.xpose.msra.mxu0 0.0
    %396 = vmatprep.subr.mxu0 0.0
    %397 = vmatpush2.xpose.msra.mxu0 0.0
    %398 = vmatprep.subr.mxu0 0.0
    %399 = vmatpush2.xpose.msra.mxu0 0.0
    %400 = vmatprep.subr.mxu0 0.0
    %401 = vmatpush2.xpose.msra.mxu0 0.0
    %402 = vmatprep.mubr.f32.mxu0 0.0
    %403 = vmatmul.mubr.f32.gmra.mxu0 %v123
    %v404 = vpop.f32.mrf.mxu0
    %v405 = vadd.f32 0.0, %v404
    %v406 = vpop.f32.mrf.mxu0
    %407 = vmatprep.mubr.f32.mxu0 0.0
    %408 = vmatmul.mubr.f32.gmra.mxu0 %v126
    %v409 = vpop.f32.mrf.mxu0
    %v410 = vadd.f32 0.0, %v409
    %v411 = vpop.f32.mrf.mxu0
    %412 = vmatprep.mubr.f32.mxu0 0.0
    %413 = vmatmul.mubr.f32.gmra.mxu0 %v129
    %v414 = vpop.f32.mrf.mxu0
    %v415 = vadd.f32 0.0, %v414
    %v416 = vpop.f32.mrf.mxu0
    %417 = vmatprep.mubr.f32.mxu0 0.0
    %418 = vmatmul.mubr.f32.gmra.mxu0 %v132
    %v419 = vpop.f32.mrf.mxu0
    %v420 = vadd.f32 0.0, %v419
    %v421 = vpop.f32.mrf.mxu0
    %422 = vmatprep.mubr.f32.mxu0 0.0
    %423 = vmatmul.mubr.f32.gmra.mxu0 %v135
    %v424 = vpop.f32.mrf.mxu0
    %v425 = vadd.f32 0.0, %v424
    %v426 = vpop.f32.mrf.mxu0
    %427 = vmatprep.mubr.f32.mxu0 0.0
    %428 = vmatmul.mubr.f32.gmra.mxu0 %v138
    %v429 = vpop.f32.mrf.mxu0
    %v430 = vadd.f32 0.0, %v429
    %v431 = vpop.f32.mrf.mxu0
    %432 = vmatprep.mubr.f32.mxu0 0.0
    %433 = vmatmul.mubr.f32.gmra.mxu0 %v141
    %v434 = vpop.f32.mrf.mxu0
    %v435 = vadd.f32 0.0, %v434
    %v436 = vpop.f32.mrf.mxu0
    %437 = vmatprep.mubr.f32.mxu0 0.0
    %438 = vmatmul.mubr.f32.gmra.mxu0 %v144
    %v439 = vpop.f32.mrf.mxu0
    %v440 = vadd.f32 0.0, %v439
    %v441 = vpop.f32.mrf.mxu0
    %442 = vmatprep.mubr.f32.mxu0 0.0
    %443 = vmatmul.mubr.f32.gmra.mxu0 %v147
    %v444 = vpop.f32.mrf.mxu0
    %v445 = vadd.f32 0.0, %v444
    %v446 = vpop.f32.mrf.mxu0
    %447 = vmatprep.mubr.f32.mxu0 0.0
    %448 = vmatmul.mubr.f32.gmra.mxu0 %v150
    %v449 = vpop.f32.mrf.mxu0
    %v450 = vadd.f32 0.0, %v449
    %v451 = vpop.f32.mrf.mxu0
    %452 = vmatprep.mubr.f32.mxu0 0.0
    %453 = vmatmul.mubr.f32.gmra.mxu0 %v153
    %v454 = vpop.f32.mrf.mxu0
    %v455 = vadd.f32 0.0, %v454
    %v456 = vpop.f32.mrf.mxu0
    %457 = vmatprep.mubr.f32.mxu0 0.0
    %458 = vmatmul.mubr.f32.gmra.mxu0 %v156
    %v459 = vpop.f32.mrf.mxu0
    %v460 = vadd.f32 0.0, %v459
    %v461 = vpop.f32.mrf.mxu0
    %462 = vmatprep.mubr.f32.mxu0 0.0
    %463 = vmatmul.mubr.f32.gmra.mxu0 %v159
    %v464 = vpop.f32.mrf.mxu0
    %v465 = vadd.f32 0.0, %v464
    %v466 = vpop.f32.mrf.mxu0
    %467 = vmatprep.mubr.f32.mxu0 0.0
    %468 = vmatmul.mubr.f32.gmra.mxu0 %v162
    %v469 = vpop.f32.mrf.mxu0
    %v470 = vadd.f32 0.0, %v469
    %v471 = vpop.f32.mrf.mxu0
    %472 = vmatprep.mubr.f32.mxu0 0.0
    %473 = vmatmul.mubr.f32.gmra.mxu0 %v165
    %v474 = vpop.f32.mrf.mxu0
    %v475 = vadd.f32 0.0, %v474
    %v476 = vpop.f32.mrf.mxu0
    %477 = vmatprep.mubr.f32.mxu0 0.0
    %478 = vmatmul.mubr.f32.gmra.mxu0 %v168
    %v479 = vpop.f32.mrf.mxu0
    %v480 = vadd.f32 0.0, %v479
    %v481 = vpop.f32.mrf.mxu0
    %482 = vmatprep.mubr.f32.mxu0 0.0
    %483 = vmatmul.mubr.f32.gmra.mxu0 %v171
    %v484 = vpop.f32.mrf.mxu0
    %v485 = vadd.f32 0.0, %v484
    %v486 = vpop.f32.mrf.mxu0
    %487 = vmatprep.mubr.f32.mxu0 0.0
    %488 = vmatmul.mubr.f32.gmra.mxu0 %v174
    %v489 = vpop.f32.mrf.mxu0
    %v490 = vadd.f32 0.0, %v489
    %v491 = vpop.f32.mrf.mxu0
    %492 = vmatprep.mubr.f32.mxu0 0.0
    %493 = vmatmul.mubr.f32.gmra.mxu0 %v177
    %v494 = vpop.f32.mrf.mxu0
    %v495 = vadd.f32 0.0, %v494
    %v496 = vpop.f32.mrf.mxu0
    %497 = vmatprep.mubr.f32.mxu0 0.0
    %498 = vmatmul.mubr.f32.gmra.mxu0 %v180
    %v499 = vpop.f32.mrf.mxu0
    %v500 = vadd.f32 0.0, %v499
    %v501 = vpop.f32.mrf.mxu0
    %502 = vmatprep.mubr.f32.mxu0 0.0
    %503 = vmatmul.mubr.f32.gmra.mxu0 %v183
    %v504 = vpop.f32.mrf.mxu0
    %v505 = vadd.f32 0.0, %v504
    %v506 = vpop.f32.mrf.mxu0
    %507 = vmatprep.mubr.f32.mxu0 0.0
    %508 = vmatmul.mubr.f32.gmra.mxu0 %v186
    %v509 = vpop.f32.mrf.mxu0
    %v510 = vadd.f32 0.0, %v509
    %v511 = vpop.f32.mrf.mxu0
    %512 = vmatprep.mubr.f32.mxu0 0.0
    %513 = vmatmul.mubr.f32.gmra.mxu0 %v189
    %v514 = vpop.f32.mrf.mxu0
    %v515 = vadd.f32 0.0, %v514
    %v516 = vpop.f32.mrf.mxu0
    %517 = vmatprep.mubr.f32.mxu0 0.0
    %518 = vmatmul.mubr.f32.gmra.mxu0 %v192
    %v519 = vpop.f32.mrf.mxu0
    %v520 = vadd.f32 0.0, %v519
    %v521 = vpop.f32.mrf.mxu0
    %522 = vmatprep.mubr.f32.mxu0 0.0
    %523 = vmatmul.mubr.f32.gmra.mxu0 %v195
    %v524 = vpop.f32.mrf.mxu0
    %v525 = vadd.f32 0.0, %v524
    %v526 = vpop.f32.mrf.mxu0
    %527 = vmatprep.mubr.f32.mxu0 0.0
    %528 = vmatmul.mubr.f32.gmra.mxu0 %v198
    %v529 = vpop.f32.mrf.mxu0
    %v530 = vadd.f32 0.0, %v529
    %v531 = vpop.f32.mrf.mxu0
    %532 = vmatprep.mubr.f32.mxu0 0.0
    %533 = vmatmul.mubr.f32.gmra.mxu0 %v201
    %v534 = vpop.f32.mrf.mxu0
    %v535 = vadd.f32 0.0, %v534
    %v536 = vpop.f32.mrf.mxu0
    %537 = vmatprep.mubr.f32.mxu0 0.0
    %538 = vmatmul.mubr.f32.gmra.mxu0 %v204
    %v539 = vpop.f32.mrf.mxu0
    %v540 = vadd.f32 0.0, %v539
    %v541 = vpop.f32.mrf.mxu0
    %542 = vmatprep.mubr.f32.mxu0 0.0
    %543 = vmatmul.mubr.f32.gmra.mxu0 %v207
    %v544 = vpop.f32.mrf.mxu0
    %v545 = vadd.f32 0.0, %v544
    %v546 = vpop.f32.mrf.mxu0
    %547 = vmatprep.mubr.f32.mxu0 0.0
    %548 = vmatmul.mubr.f32.gmra.mxu0 %v210
    %v549 = vpop.f32.mrf.mxu0
    %v550 = vadd.f32 0.0, %v549
    %v551 = vpop.f32.mrf.mxu0
    %552 = vmatprep.mubr.f32.mxu0 0.0
    %553 = vmatmul.mubr.f32.gmra.mxu0 %v213
    %v554 = vpop.f32.mrf.mxu0
    %v555 = vadd.f32 0.0, %v554
    %v556 = vpop.f32.mrf.mxu0
    %557 = vmatprep.mubr.f32.mxu0 0.0
    %558 = vmatmul.mubr.f32.gmra.mxu0 %v216
    %v559 = vpop.f32.mrf.mxu0
    %v560 = vadd.f32 0.0, %v559
    %v561 = vpop.f32.mrf.mxu0
    %562 = vmatprep.mubr.f32.mxu0 0.0
    %563 = vmatmul.mubr.f32.gmra.mxu0 %v219
    %v564 = vpop.f32.mrf.mxu0
    %v565 = vadd.f32 0.0, %v564
    %v566 = vpop.f32.mrf.mxu0
    %567 = vmatprep.mubr.f32.mxu0 0.0
    %568 = vmatmul.mubr.f32.gmra.mxu0 %v222
    %v569 = vpop.f32.mrf.mxu0
    %v570 = vadd.f32 0.0, %v569
    %v571 = vpop.f32.mrf.mxu0
    %572 = vmatprep.mubr.f32.mxu0 0.0
    %573 = vmatmul.mubr.f32.gmra.mxu0 %v225
    %v574 = vpop.f32.mrf.mxu0
    %v575 = vadd.f32 0.0, %v574
    %v576 = vpop.f32.mrf.mxu0
    %577 = vmatprep.mubr.f32.mxu0 0.0
    %578 = vmatmul.mubr.f32.gmra.mxu0 %v228
    %v579 = vpop.f32.mrf.mxu0
    %v580 = vadd.f32 0.0, %v579
    %v581 = vpop.f32.mrf.mxu0
    %582 = vmatprep.mubr.f32.mxu0 0.0
    %583 = vmatmul.mubr.f32.gmra.mxu0 %v231
    %v584 = vpop.f32.mrf.mxu0
    %v585 = vadd.f32 0.0, %v584
    %v586 = vpop.f32.mrf.mxu0
    %587 = vmatprep.mubr.f32.mxu0 0.0
    %588 = vmatmul.mubr.f32.gmra.mxu0 %v234
    %v589 = vpop.f32.mrf.mxu0
    %v590 = vadd.f32 0.0, %v589
    %v591 = vpop.f32.mrf.mxu0
    %592 = vmatprep.mubr.f32.mxu0 0.0
    %593 = vmatmul.mubr.f32.gmra.mxu0 %v237
    %v594 = vpop.f32.mrf.mxu0
    %v595 = vadd.f32 0.0, %v594
    %v596 = vpop.f32.mrf.mxu0
    %597 = vmatprep.mubr.f32.mxu0 0.0
    %598 = vmatmul.mubr.f32.gmra.mxu0 %v240
    %v599 = vpop.f32.mrf.mxu0
    %v600 = vadd.f32 0.0, %v599
    %v601 = vpop.f32.mrf.mxu0
    %602 = vmatprep.mubr.f32.mxu0 0.0
    %603 = vmatmul.mubr.f32.gmra.mxu0 %v243
    %v604 = vpop.f32.mrf.mxu0
    %v605 = vadd.f32 0.0, %v604
    %v606 = vpop.f32.mrf.mxu0
    %607 = vmatprep.mubr.f32.mxu0 0.0
    %608 = vmatmul.mubr.f32.gmra.mxu0 %v246
    %v609 = vpop.f32.mrf.mxu0
    %v610 = vadd.f32 0.0, %v609
    %v611 = vpop.f32.mrf.mxu0
    %612 = vmatprep.mubr.f32.mxu0 0.0
    %613 = vmatmul.mubr.f32.gmra.mxu0 %v249
    %v614 = vpop.f32.mrf.mxu0
    %v615 = vadd.f32 0.0, %v614
    %v616 = vpop.f32.mrf.mxu0
    %617 = vmatprep.mubr.f32.mxu0 0.0
    %618 = vmatmul.mubr.f32.gmra.mxu0 %v252
    %v619 = vpop.f32.mrf.mxu0
    %v620 = vadd.f32 0.0, %v619
    %v621 = vpop.f32.mrf.mxu0
    %622 = vmatprep.mubr.f32.mxu0 0.0
    %623 = vmatmul.mubr.f32.gmra.mxu0 %v255
    %v624 = vpop.f32.mrf.mxu0
    %v625 = vadd.f32 0.0, %v624
    %v626 = vpop.f32.mrf.mxu0
    %627 = vmatprep.mubr.f32.mxu0 0.0
    %628 = vmatmul.mubr.f32.gmra.mxu0 %v258
    %v629 = vpop.f32.mrf.mxu0
    %v630 = vadd.f32 0.0, %v629
    %v631 = vpop.f32.mrf.mxu0
    %632 = vmatprep.mubr.f32.mxu0 0.0
    %633 = vmatmul.mubr.f32.gmra.mxu0 %v261
    %v634 = vpop.f32.mrf.mxu0
    %v635 = vadd.f32 0.0, %v634
    %v636 = vpop.f32.mrf.mxu0
    %637 = vmatprep.mubr.f32.mxu0 0.0
    %638 = vmatmul.mubr.f32.gmra.mxu0 %v264
    %v639 = vpop.f32.mrf.mxu0
    %v640 = vadd.f32 0.0, %v639
    %v641 = vpop.f32.mrf.mxu0
    %642 = vmatprep.mubr.f32.mxu0 0.0
    %643 = vmatmul.mubr.f32.gmra.mxu0 %v267
    %v644 = vpop.f32.mrf.mxu0
    %v645 = vadd.f32 0.0, %v644
    %v646 = vpop.f32.mrf.mxu0
    %647 = vmatprep.mubr.f32.mxu0 0.0
    %648 = vmatmul.mubr.f32.gmra.mxu0 %v270
    %v649 = vpop.f32.mrf.mxu0
    %v650 = vadd.f32 0.0, %v649
    %v651 = vpop.f32.mrf.mxu0
    %652 = vmatprep.mubr.f32.mxu0 0.0
    %653 = vmatmul.mubr.f32.gmra.mxu0 %v273
    %v654 = vpop.f32.mrf.mxu0
    %v655 = vadd.f32 0.0, %v654
    %v656 = vpop.f32.mrf.mxu0
    %657 = vmatprep.mubr.f32.mxu0 0.0
    %658 = vmatmul.mubr.f32.gmra.mxu0 %v276
    %v659 = vpop.f32.mrf.mxu0
    %v660 = vadd.f32 0.0, %v659
    %v661 = vpop.f32.mrf.mxu0
    %662 = vmatprep.mubr.f32.mxu0 0.0
    %663 = vmatmul.mubr.f32.gmra.mxu0 %v279
    %v664 = vpop.f32.mrf.mxu0
    %v665 = vadd.f32 0.0, %v664
    %v666 = vpop.f32.mrf.mxu0
    %667 = vmatprep.mubr.f32.mxu0 0.0
    %668 = vmatmul.mubr.f32.gmra.mxu0 %v282
    %v669 = vpop.f32.mrf.mxu0
    %v670 = vadd.f32 0.0, %v669
    %v671 = vpop.f32.mrf.mxu0
    %672 = vmatprep.mubr.f32.mxu0 0.0
    %673 = vmatmul.mubr.f32.gmra.mxu0 %v285
    %v674 = vpop.f32.mrf.mxu0
    %v675 = vadd.f32 0.0, %v674
    %v676 = vpop.f32.mrf.mxu0
    %677 = vmatprep.mubr.f32.mxu0 0.0
    %678 = vmatmul.mubr.f32.gmra.mxu0 %v288
    %v679 = vpop.f32.mrf.mxu0
    %v680 = vadd.f32 0.0, %v679
    %v681 = vpop.f32.mrf.mxu0
    %682 = vmatprep.mubr.f32.mxu0 0.0
    %683 = vmatmul.mubr.f32.gmra.mxu0 %v291
    %v684 = vpop.f32.mrf.mxu0
    %v685 = vadd.f32 0.0, %v684
    %v686 = vpop.f32.mrf.mxu0
    %687 = vmatprep.mubr.f32.mxu0 0.0
    %688 = vmatmul.mubr.f32.gmra.mxu0 %v294
    %v689 = vpop.f32.mrf.mxu0
    %v690 = vadd.f32 0.0, %v689
    %v691 = vpop.f32.mrf.mxu0
    %692 = vmatprep.mubr.f32.mxu0 0.0
    %693 = vmatmul.mubr.f32.gmra.mxu0 %v297
    %v694 = vpop.f32.mrf.mxu0
    %v695 = vadd.f32 0.0, %v694
    %v696 = vpop.f32.mrf.mxu0
    %697 = vmatprep.mubr.f32.mxu0 0.0
    %698 = vmatmul.mubr.f32.gmra.mxu0 %v300
    %v699 = vpop.f32.mrf.mxu0
    %v700 = vadd.f32 0.0, %v699
    %v701 = vpop.f32.mrf.mxu0
    %702 = vmatprep.mubr.f32.mxu0 0.0
    %703 = vmatmul.mubr.f32.gmra.mxu0 %v303
    %v704 = vpop.f32.mrf.mxu0
    %v705 = vadd.f32 0.0, %v704
    %v706 = vpop.f32.mrf.mxu0
    %707 = vmatprep.mubr.f32.mxu0 0.0
    %708 = vmatmul.mubr.f32.gmra.mxu0 %v306
    %v709 = vpop.f32.mrf.mxu0
    %v710 = vadd.f32 0.0, %v709
    %v711 = vpop.f32.mrf.mxu0
    %712 = vmatprep.mubr.f32.mxu0 0.0
    %713 = vmatmul.mubr.f32.gmra.mxu0 %v309
    %v714 = vpop.f32.mrf.mxu0
    %v715 = vadd.f32 0.0, %v714
    %v716 = vpop.f32.mrf.mxu0
    %717 = vmatprep.mubr.f32.mxu0 0.0
    %718 = vmatmul.mubr.f32.gmra.mxu0 %v312
    %v719 = vpop.f32.mrf.mxu0
    %v720 = vadd.f32 0.0, %v719
    %v721 = vpop.f32.mrf.mxu0
    %722 = vdwg.mxu0
    %v723 = vsel %vm121, %v405, -inf
    %724 = vmax.xlane.f32.xlu0 %v723
    %v725 = vpop.xlane.xlu0 %724
    %v726 = vsel %vm121, %v410, -inf
    %727 = vmax.xlane.f32.xlu0 %v726
    %v728 = vpop.xlane.xlu0 %727
    %v729 = vsel %vm121, %v415, -inf
    %730 = vmax.xlane.f32.xlu0 %v729
    %v731 = vpop.xlane.xlu0 %730
    %v732 = vsel %vm121, %v420, -inf
    %733 = vmax.xlane.f32.xlu0 %v732
    %v734 = vpop.xlane.xlu0 %733
    %v735 = vsel %vm121, %v425, -inf
    %736 = vmax.xlane.f32.xlu0 %v735
    %v737 = vpop.xlane.xlu0 %736
    %v738 = vsel %vm121, %v430, -inf
    %739 = vmax.xlane.f32.xlu0 %v738
    %v740 = vpop.xlane.xlu0 %739
    %v741 = vsel %vm121, %v435, -inf
    %742 = vmax.xlane.f32.xlu0 %v741
    %v743 = vpop.xlane.xlu0 %742
    %v744 = vsel %vm121, %v440, -inf
    %745 = vmax.xlane.f32.xlu0 %v744
    %v746 = vpop.xlane.xlu0 %745
    %v747 = vsel %vm121, %v445, -inf
    %748 = vmax.xlane.f32.xlu0 %v747
    %v749 = vpop.xlane.xlu0 %748
    %v750 = vsel %vm121, %v450, -inf
    %751 = vmax.xlane.f32.xlu0 %v750
    %v752 = vpop.xlane.xlu0 %751
    %v753 = vsel %vm121, %v455, -inf
    %754 = vmax.xlane.f32.xlu0 %v753
    %v755 = vpop.xlane.xlu0 %754
    %v756 = vsel %vm121, %v460, -inf
    %757 = vmax.xlane.f32.xlu0 %v756
    %v758 = vpop.xlane.xlu0 %757
    %v759 = vsel %vm121, %v465, -inf
    %760 = vmax.xlane.f32.xlu0 %v759
    %v761 = vpop.xlane.xlu0 %760
    %v762 = vsel %vm121, %v470, -inf
    %763 = vmax.xlane.f32.xlu0 %v762
    %v764 = vpop.xlane.xlu0 %763
    %v765 = vsel %vm121, %v475, -inf
    %766 = vmax.xlane.f32.xlu0 %v765
    %v767 = vpop.xlane.xlu0 %766
    %v768 = vsel %vm121, %v480, -inf
    %769 = vmax.xlane.f32.xlu0 %v768
    %v770 = vpop.xlane.xlu0 %769
    %v771 = vsel %vm121, %v485, -inf
    %772 = vmax.xlane.f32.xlu0 %v771
    %v773 = vpop.xlane.xlu0 %772
    %v774 = vsel %vm121, %v490, -inf
    %775 = vmax.xlane.f32.xlu0 %v774
    %v776 = vpop.xlane.xlu0 %775
    %v777 = vsel %vm121, %v495, -inf
    %778 = vmax.xlane.f32.xlu0 %v777
    %v779 = vpop.xlane.xlu0 %778
    %v780 = vsel %vm121, %v500, -inf
    %781 = vmax.xlane.f32.xlu0 %v780
    %v782 = vpop.xlane.xlu0 %781
    %v783 = vsel %vm121, %v505, -inf
    %784 = vmax.xlane.f32.xlu0 %v783
    %v785 = vpop.xlane.xlu0 %784
    %v786 = vsel %vm121, %v510, -inf
    %787 = vmax.xlane.f32.xlu0 %v786
    %v788 = vpop.xlane.xlu0 %787
    %v789 = vsel %vm121, %v515, -inf
    %790 = vmax.xlane.f32.xlu0 %v789
    %v791 = vpop.xlane.xlu0 %790
    %v792 = vsel %vm121, %v520, -inf
    %793 = vmax.xlane.f32.xlu0 %v792
    %v794 = vpop.xlane.xlu0 %793
    %v795 = vsel %vm121, %v525, -inf
    %796 = vmax.xlane.f32.xlu0 %v795
    %v797 = vpop.xlane.xlu0 %796
    %v798 = vsel %vm121, %v530, -inf
    %799 = vmax.xlane.f32.xlu0 %v798
    %v800 = vpop.xlane.xlu0 %799
    %v801 = vsel %vm121, %v535, -inf
    %802 = vmax.xlane.f32.xlu0 %v801
    %v803 = vpop.xlane.xlu0 %802
    %v804 = vsel %vm121, %v540, -inf
    %805 = vmax.xlane.f32.xlu0 %v804
    %v806 = vpop.xlane.xlu0 %805
    %v807 = vsel %vm121, %v545, -inf
    %808 = vmax.xlane.f32.xlu0 %v807
    %v809 = vpop.xlane.xlu0 %808
    %v810 = vsel %vm121, %v550, -inf
    %811 = vmax.xlane.f32.xlu0 %v810
    %v812 = vpop.xlane.xlu0 %811
    %v813 = vsel %vm121, %v555, -inf
    %814 = vmax.xlane.f32.xlu0 %v813
    %v815 = vpop.xlane.xlu0 %814
    %v816 = vsel %vm121, %v560, -inf
    %817 = vmax.xlane.f32.xlu0 %v816
    %v818 = vpop.xlane.xlu0 %817
    %v819 = vsel %vm121, %v565, -inf
    %820 = vmax.xlane.f32.xlu0 %v819
    %v821 = vpop.xlane.xlu0 %820
    %v822 = vsel %vm121, %v570, -inf
    %823 = vmax.xlane.f32.xlu0 %v822
    %v824 = vpop.xlane.xlu0 %823
    %v825 = vsel %vm121, %v575, -inf
    %826 = vmax.xlane.f32.xlu0 %v825
    %v827 = vpop.xlane.xlu0 %826
    %v828 = vsel %vm121, %v580, -inf
    %829 = vmax.xlane.f32.xlu0 %v828
    %v830 = vpop.xlane.xlu0 %829
    %v831 = vsel %vm121, %v585, -inf
    %832 = vmax.xlane.f32.xlu0 %v831
    %v833 = vpop.xlane.xlu0 %832
    %v834 = vsel %vm121, %v590, -inf
    %835 = vmax.xlane.f32.xlu0 %v834
    %v836 = vpop.xlane.xlu0 %835
    %v837 = vsel %vm121, %v595, -inf
    %838 = vmax.xlane.f32.xlu0 %v837
    %v839 = vpop.xlane.xlu0 %838
    %v840 = vsel %vm121, %v600, -inf
    %841 = vmax.xlane.f32.xlu0 %v840
    %v842 = vpop.xlane.xlu0 %841
    %v843 = vsel %vm121, %v605, -inf
    %844 = vmax.xlane.f32.xlu0 %v843
    %v845 = vpop.xlane.xlu0 %844
    %v846 = vsel %vm121, %v610, -inf
    %847 = vmax.xlane.f32.xlu0 %v846
    %v848 = vpop.xlane.xlu0 %847
    %v849 = vsel %vm121, %v615, -inf
    %850 = vmax.xlane.f32.xlu0 %v849
    %v851 = vpop.xlane.xlu0 %850
    %v852 = vsel %vm121, %v620, -inf
    %853 = vmax.xlane.f32.xlu0 %v852
    %v854 = vpop.xlane.xlu0 %853
    %v855 = vsel %vm121, %v625, -inf
    %856 = vmax.xlane.f32.xlu0 %v855
    %v857 = vpop.xlane.xlu0 %856
    %v858 = vsel %vm121, %v630, -inf
    %859 = vmax.xlane.f32.xlu0 %v858
    %v860 = vpop.xlane.xlu0 %859
    %v861 = vsel %vm121, %v635, -inf
    %862 = vmax.xlane.f32.xlu0 %v861
    %v863 = vpop.xlane.xlu0 %862
    %v864 = vsel %vm121, %v640, -inf
    %865 = vmax.xlane.f32.xlu0 %v864
    %v866 = vpop.xlane.xlu0 %865
    %v867 = vsel %vm121, %v645, -inf
    %868 = vmax.xlane.f32.xlu0 %v867
    %v869 = vpop.xlane.xlu0 %868
    %v870 = vsel %vm121, %v650, -inf
    %871 = vmax.xlane.f32.xlu0 %v870
    %v872 = vpop.xlane.xlu0 %871
    %v873 = vsel %vm121, %v655, -inf
    %874 = vmax.xlane.f32.xlu0 %v873
    %v875 = vpop.xlane.xlu0 %874
    %v876 = vsel %vm121, %v660, -inf
    %877 = vmax.xlane.f32.xlu0 %v876
    %v878 = vpop.xlane.xlu0 %877
    %v879 = vsel %vm121, %v665, -inf
    %880 = vmax.xlane.f32.xlu0 %v879
    %v881 = vpop.xlane.xlu0 %880
    %v882 = vsel %vm121, %v670, -inf
    %883 = vmax.xlane.f32.xlu0 %v882
    %v884 = vpop.xlane.xlu0 %883
    %v885 = vsel %vm121, %v675, -inf
    %886 = vmax.xlane.f32.xlu0 %v885
    %v887 = vpop.xlane.xlu0 %886
    %v888 = vsel %vm121, %v680, -inf
    %889 = vmax.xlane.f32.xlu0 %v888
    %v890 = vpop.xlane.xlu0 %889
    %v891 = vsel %vm121, %v685, -inf
    %892 = vmax.xlane.f32.xlu0 %v891
    %v893 = vpop.xlane.xlu0 %892
    %v894 = vsel %vm121, %v690, -inf
    %895 = vmax.xlane.f32.xlu0 %v894
    %v896 = vpop.xlane.xlu0 %895
    %v897 = vsel %vm121, %v695, -inf
    %898 = vmax.xlane.f32.xlu0 %v897
    %v899 = vpop.xlane.xlu0 %898
    %v900 = vsel %vm121, %v700, -inf
    %901 = vmax.xlane.f32.xlu0 %v900
    %v902 = vpop.xlane.xlu0 %901
    %v903 = vsel %vm121, %v705, -inf
    %904 = vmax.xlane.f32.xlu0 %v903
    %v905 = vpop.xlane.xlu0 %904
    %v906 = vsel %vm121, %v710, -inf
    %907 = vmax.xlane.f32.xlu0 %v906
    %v908 = vpop.xlane.xlu0 %907
    %v909 = vsel %vm121, %v715, -inf
    %910 = vmax.xlane.f32.xlu0 %v909
    %v911 = vpop.xlane.xlu0 %910
    %v912 = vsel %vm121, %v720, -inf
    %913 = vmax.xlane.f32.xlu0 %v912
    %v914 = vpop.xlane.xlu0 %913
    %v915 = vsub.f32 %v405, %v725
    %v916 = vsub.f32 %v410, %v728
    %v917 = vsub.f32 %v415, %v731
    %v918 = vsub.f32 %v420, %v734
    %v919 = vsub.f32 %v425, %v737
    %v920 = vsub.f32 %v430, %v740
    %v921 = vsub.f32 %v435, %v743
    %v922 = vsub.f32 %v440, %v746
    %v923 = vsub.f32 %v445, %v749
    %v924 = vsub.f32 %v450, %v752
    %v925 = vsub.f32 %v455, %v755
    %v926 = vsub.f32 %v460, %v758
    %v927 = vsub.f32 %v465, %v761
    %v928 = vsub.f32 %v470, %v764
    %v929 = vsub.f32 %v475, %v767
    %v930 = vsub.f32 %v480, %v770
    %v931 = vsub.f32 %v485, %v773
    %v932 = vsub.f32 %v490, %v776
    %v933 = vsub.f32 %v495, %v779
    %v934 = vsub.f32 %v500, %v782
    %v935 = vsub.f32 %v505, %v785
    %v936 = vsub.f32 %v510, %v788
    %v937 = vsub.f32 %v515, %v791
    %v938 = vsub.f32 %v520, %v794
    %v939 = vsub.f32 %v525, %v797
    %v940 = vsub.f32 %v530, %v800
    %v941 = vsub.f32 %v535, %v803
    %v942 = vsub.f32 %v540, %v806
    %v943 = vsub.f32 %v545, %v809
    %v944 = vsub.f32 %v550, %v812
    %v945 = vsub.f32 %v555, %v815
    %v946 = vsub.f32 %v560, %v818
    %v947 = vsub.f32 %v565, %v821
    %v948 = vsub.f32 %v570, %v824
    %v949 = vsub.f32 %v575, %v827
    %v950 = vsub.f32 %v580, %v830
    %v951 = vsub.f32 %v585, %v833
    %v952 = vsub.f32 %v590, %v836
    %v953 = vsub.f32 %v595, %v839
    %v954 = vsub.f32 %v600, %v842
    %v955 = vsub.f32 %v605, %v845
    %v956 = vsub.f32 %v610, %v848
    %v957 = vsub.f32 %v615, %v851
    %v958 = vsub.f32 %v620, %v854
    %v959 = vsub.f32 %v625, %v857
    %v960 = vsub.f32 %v630, %v860
    %v961 = vsub.f32 %v635, %v863
    %v962 = vsub.f32 %v640, %v866
    %v963 = vsub.f32 %v645, %v869
    %v964 = vsub.f32 %v650, %v872
    %v965 = vsub.f32 %v655, %v875
    %v966 = vsub.f32 %v660, %v878
    %v967 = vsub.f32 %v665, %v881
    %v968 = vsub.f32 %v670, %v884
    %v969 = vsub.f32 %v675, %v887
    %v970 = vsub.f32 %v680, %v890
    %v971 = vsub.f32 %v685, %v893
    %v972 = vsub.f32 %v690, %v896
    %v973 = vsub.f32 %v695, %v899
    %v974 = vsub.f32 %v700, %v902
    %v975 = vsub.f32 %v705, %v905
    %v976 = vsub.f32 %v710, %v908
    %v977 = vsub.f32 %v715, %v911
    %v978 = vsub.f32 %v720, %v914
    %v979 = vmul.f32 %v915, 1.442695
    %v980 = vpow.pop %v979
    %v981 = vmul.f32 %v916, 1.442695
    %v982 = vpow.pop %v981
    %v983 = vmul.f32 %v917, 1.442695
    %v984 = vpow.pop %v983
    %v985 = vmul.f32 %v918, 1.442695
    %v986 = vpow.pop %v985
    %v987 = vmul.f32 %v919, 1.442695
    %v988 = vpow.pop %v987
    %v989 = vmul.f32 %v920, 1.442695
    %v990 = vpow.pop %v989
    %v991 = vmul.f32 %v921, 1.442695
    %v992 = vpow.pop %v991
    %v993 = vmul.f32 %v922, 1.442695
    %v994 = vpow.pop %v993
    %v995 = vmul.f32 %v923, 1.442695
    %v996 = vpow.pop %v995
    %v997 = vmul.f32 %v924, 1.442695
    %v998 = vpow.pop %v997
    %v999 = vmul.f32 %v925, 1.442695
    %v1000 = vpow.pop %v999
    %v1001 = vmul.f32 %v926, 1.442695
    %v1002 = vpow.pop %v1001
    %v1003 = vmul.f32 %v927, 1.442695
    %v1004 = vpow.pop %v1003
    %v1005 = vmul.f32 %v928, 1.442695
    %v1006 = vpow.pop %v1005
    %v1007 = vmul.f32 %v929, 1.442695
    %v1008 = vpow.pop %v1007
    %v1009 = vmul.f32 %v930, 1.442695
    %v1010 = vpow.pop %v1009
    %v1011 = vmul.f32 %v931, 1.442695
    %v1012 = vpow.pop %v1011
    %v1013 = vmul.f32 %v932, 1.442695
    %v1014 = vpow.pop %v1013
    %v1015 = vmul.f32 %v933, 1.442695
    %v1016 = vpow.pop %v1015
    %v1017 = vmul.f32 %v934, 1.442695
    %v1018 = vpow.pop %v1017
    %v1019 = vmul.f32 %v935, 1.442695
    %v1020 = vpow.pop %v1019
    %v1021 = vmul.f32 %v936, 1.442695
    %v1022 = vpow.pop %v1021
    %v1023 = vmul.f32 %v937, 1.442695
    %v1024 = vpow.pop %v1023
    %v1025 = vmul.f32 %v938, 1.442695
    %v1026 = vpow.pop %v1025
    %v1027 = vmul.f32 %v939, 1.442695
    %v1028 = vpow.pop %v1027
    %v1029 = vmul.f32 %v940, 1.442695
    %v1030 = vpow.pop %v1029
    %v1031 = vmul.f32 %v941, 1.442695
    %v1032 = vpow.pop %v1031
    %v1033 = vmul.f32 %v942, 1.442695
    %v1034 = vpow.pop %v1033
    %v1035 = vmul.f32 %v943, 1.442695
    %v1036 = vpow.pop %v1035
    %v1037 = vmul.f32 %v944, 1.442695
    %v1038 = vpow.pop %v1037
    %v1039 = vmul.f32 %v945, 1.442695
    %v1040 = vpow.pop %v1039
    %v1041 = vmul.f32 %v946, 1.442695
    %v1042 = vpow.pop %v1041
    %v1043 = vmul.f32 %v947, 1.442695
    %v1044 = vpow.pop %v1043
    %v1045 = vmul.f32 %v948, 1.442695
    %v1046 = vpow.pop %v1045
    %v1047 = vmul.f32 %v949, 1.442695
    %v1048 = vpow.pop %v1047
    %v1049 = vmul.f32 %v950, 1.442695
    %v1050 = vpow.pop %v1049
    %v1051 = vmul.f32 %v951, 1.442695
    %v1052 = vpow.pop %v1051
    %v1053 = vmul.f32 %v952, 1.442695
    %v1054 = vpow.pop %v1053
    %v1055 = vmul.f32 %v953, 1.442695
    %v1056 = vpow.pop %v1055
    %v1057 = vmul.f32 %v954, 1.442695
    %v1058 = vpow.pop %v1057
    %v1059 = vmul.f32 %v955, 1.442695
    %v1060 = vpow.pop %v1059
    %v1061 = vmul.f32 %v956, 1.442695
    %v1062 = vpow.pop %v1061
    %v1063 = vmul.f32 %v957, 1.442695
    %v1064 = vpow.pop %v1063
    %v1065 = vmul.f32 %v958, 1.442695
    %v1066 = vpow.pop %v1065
    %v1067 = vmul.f32 %v959, 1.442695
    %v1068 = vpow.pop %v1067
    %v1069 = vmul.f32 %v960, 1.442695
    %v1070 = vpow.pop %v1069
    %v1071 = vmul.f32 %v961, 1.442695
    %v1072 = vpow.pop %v1071
    %v1073 = vmul.f32 %v962, 1.442695
    %v1074 = vpow.pop %v1073
    %v1075 = vmul.f32 %v963, 1.442695
    %v1076 = vpow.pop %v1075
    %v1077 = vmul.f32 %v964, 1.442695
    %v1078 = vpow.pop %v1077
    %v1079 = vmul.f32 %v965, 1.442695
    %v1080 = vpow.pop %v1079
    %v1081 = vmul.f32 %v966, 1.442695
    %v1082 = vpow.pop %v1081
    %v1083 = vmul.f32 %v967, 1.442695
    %v1084 = vpow.pop %v1083
    %v1085 = vmul.f32 %v968, 1.442695
    %v1086 = vpow.pop %v1085
    %v1087 = vmul.f32 %v969, 1.442695
    %v1088 = vpow.pop %v1087
    %v1089 = vmul.f32 %v970, 1.442695
    %v1090 = vpow.pop %v1089
    %v1091 = vmul.f32 %v971, 1.442695
    %v1092 = vpow.pop %v1091
    %v1093 = vmul.f32 %v972, 1.442695
    %v1094 = vpow.pop %v1093
    %v1095 = vmul.f32 %v973, 1.442695
    %v1096 = vpow.pop %v1095
    %v1097 = vmul.f32 %v974, 1.442695
    %v1098 = vpow.pop %v1097
    %v1099 = vmul.f32 %v975, 1.442695
    %v1100 = vpow.pop %v1099
    %v1101 = vmul.f32 %v976, 1.442695
    %v1102 = vpow.pop %v1101
    %v1103 = vmul.f32 %v977, 1.442695
    %v1104 = vpow.pop %v1103
    %v1105 = vmul.f32 %v978, 1.442695
    %v1106 = vpow.pop %v1105
    %v1107 = vsel %vm121, %v980, 0.0
    %1108 = vadd.xlane.f32.xlu0 %v1107
    %v1109 = vpop.xlane.xlu0 %1108
    %v1110 = vsel %vm121, %v982, 0.0
    %1111 = vadd.xlane.f32.xlu0 %v1110
    %v1112 = vpop.xlane.xlu0 %1111
    %v1113 = vsel %vm121, %v984, 0.0
    %1114 = vadd.xlane.f32.xlu0 %v1113
    %v1115 = vpop.xlane.xlu0 %1114
    %v1116 = vsel %vm121, %v986, 0.0
    %1117 = vadd.xlane.f32.xlu0 %v1116
    %v1118 = vpop.xlane.xlu0 %1117
    %v1119 = vsel %vm121, %v988, 0.0
    %1120 = vadd.xlane.f32.xlu0 %v1119
    %v1121 = vpop.xlane.xlu0 %1120
    %v1122 = vsel %vm121, %v990, 0.0
    %1123 = vadd.xlane.f32.xlu0 %v1122
    %v1124 = vpop.xlane.xlu0 %1123
    %v1125 = vsel %vm121, %v992, 0.0
    %1126 = vadd.xlane.f32.xlu0 %v1125
    %v1127 = vpop.xlane.xlu0 %1126
    %v1128 = vsel %vm121, %v994, 0.0
    %1129 = vadd.xlane.f32.xlu0 %v1128
    %v1130 = vpop.xlane.xlu0 %1129
    %v1131 = vsel %vm121, %v996, 0.0
    %1132 = vadd.xlane.f32.xlu0 %v1131
    %v1133 = vpop.xlane.xlu0 %1132
    %v1134 = vsel %vm121, %v998, 0.0
    %1135 = vadd.xlane.f32.xlu0 %v1134
    %v1136 = vpop.xlane.xlu0 %1135
    %v1137 = vsel %vm121, %v1000, 0.0
    %1138 = vadd.xlane.f32.xlu0 %v1137
    %v1139 = vpop.xlane.xlu0 %1138
    %v1140 = vsel %vm121, %v1002, 0.0
    %1141 = vadd.xlane.f32.xlu0 %v1140
    %v1142 = vpop.xlane.xlu0 %1141
    %v1143 = vsel %vm121, %v1004, 0.0
    %1144 = vadd.xlane.f32.xlu0 %v1143
    %v1145 = vpop.xlane.xlu0 %1144
    %v1146 = vsel %vm121, %v1006, 0.0
    %1147 = vadd.xlane.f32.xlu0 %v1146
    %v1148 = vpop.xlane.xlu0 %1147
    %v1149 = vsel %vm121, %v1008, 0.0
    %1150 = vadd.xlane.f32.xlu0 %v1149
    %v1151 = vpop.xlane.xlu0 %1150
    %v1152 = vsel %vm121, %v1010, 0.0
    %1153 = vadd.xlane.f32.xlu0 %v1152
    %v1154 = vpop.xlane.xlu0 %1153
    %v1155 = vsel %vm121, %v1012, 0.0
    %1156 = vadd.xlane.f32.xlu0 %v1155
    %v1157 = vpop.xlane.xlu0 %1156
    %v1158 = vsel %vm121, %v1014, 0.0
    %1159 = vadd.xlane.f32.xlu0 %v1158
    %v1160 = vpop.xlane.xlu0 %1159
    %v1161 = vsel %vm121, %v1016, 0.0
    %1162 = vadd.xlane.f32.xlu0 %v1161
    %v1163 = vpop.xlane.xlu0 %1162
    %v1164 = vsel %vm121, %v1018, 0.0
    %1165 = vadd.xlane.f32.xlu0 %v1164
    %v1166 = vpop.xlane.xlu0 %1165
    %v1167 = vsel %vm121, %v1020, 0.0
    %1168 = vadd.xlane.f32.xlu0 %v1167
    %v1169 = vpop.xlane.xlu0 %1168
    %v1170 = vsel %vm121, %v1022, 0.0
    %1171 = vadd.xlane.f32.xlu0 %v1170
    %v1172 = vpop.xlane.xlu0 %1171
    %v1173 = vsel %vm121, %v1024, 0.0
    %1174 = vadd.xlane.f32.xlu0 %v1173
    %v1175 = vpop.xlane.xlu0 %1174
    %v1176 = vsel %vm121, %v1026, 0.0
    %1177 = vadd.xlane.f32.xlu0 %v1176
    %v1178 = vpop.xlane.xlu0 %1177
    %v1179 = vsel %vm121, %v1028, 0.0
    %1180 = vadd.xlane.f32.xlu0 %v1179
    %v1181 = vpop.xlane.xlu0 %1180
    %v1182 = vsel %vm121, %v1030, 0.0
    %1183 = vadd.xlane.f32.xlu0 %v1182
    %v1184 = vpop.xlane.xlu0 %1183
    %v1185 = vsel %vm121, %v1032, 0.0
    %1186 = vadd.xlane.f32.xlu0 %v1185
    %v1187 = vpop.xlane.xlu0 %1186
    %v1188 = vsel %vm121, %v1034, 0.0
    %1189 = vadd.xlane.f32.xlu0 %v1188
    %v1190 = vpop.xlane.xlu0 %1189
    %v1191 = vsel %vm121, %v1036, 0.0
    %1192 = vadd.xlane.f32.xlu0 %v1191
    %v1193 = vpop.xlane.xlu0 %1192
    %v1194 = vsel %vm121, %v1038, 0.0
    %1195 = vadd.xlane.f32.xlu0 %v1194
    %v1196 = vpop.xlane.xlu0 %1195
    %v1197 = vsel %vm121, %v1040, 0.0
    %1198 = vadd.xlane.f32.xlu0 %v1197
    %v1199 = vpop.xlane.xlu0 %1198
    %v1200 = vsel %vm121, %v1042, 0.0
    %1201 = vadd.xlane.f32.xlu0 %v1200
    %v1202 = vpop.xlane.xlu0 %1201
    %v1203 = vsel %vm121, %v1044, 0.0
    %1204 = vadd.xlane.f32.xlu0 %v1203
    %v1205 = vpop.xlane.xlu0 %1204
    %v1206 = vsel %vm121, %v1046, 0.0
    %1207 = vadd.xlane.f32.xlu0 %v1206
    %v1208 = vpop.xlane.xlu0 %1207
    %v1209 = vsel %vm121, %v1048, 0.0
    %1210 = vadd.xlane.f32.xlu0 %v1209
    %v1211 = vpop.xlane.xlu0 %1210
    %v1212 = vsel %vm121, %v1050, 0.0
    %1213 = vadd.xlane.f32.xlu0 %v1212
    %v1214 = vpop.xlane.xlu0 %1213
    %v1215 = vsel %vm121, %v1052, 0.0
    %1216 = vadd.xlane.f32.xlu0 %v1215
    %v1217 = vpop.xlane.xlu0 %1216
    %v1218 = vsel %vm121, %v1054, 0.0
    %1219 = vadd.xlane.f32.xlu0 %v1218
    %v1220 = vpop.xlane.xlu0 %1219
    %v1221 = vsel %vm121, %v1056, 0.0
    %1222 = vadd.xlane.f32.xlu0 %v1221
    %v1223 = vpop.xlane.xlu0 %1222
    %v1224 = vsel %vm121, %v1058, 0.0
    %1225 = vadd.xlane.f32.xlu0 %v1224
    %v1226 = vpop.xlane.xlu0 %1225
    %v1227 = vsel %vm121, %v1060, 0.0
    %1228 = vadd.xlane.f32.xlu0 %v1227
    %v1229 = vpop.xlane.xlu0 %1228
    %v1230 = vsel %vm121, %v1062, 0.0
    %1231 = vadd.xlane.f32.xlu0 %v1230
    %v1232 = vpop.xlane.xlu0 %1231
    %v1233 = vsel %vm121, %v1064, 0.0
    %1234 = vadd.xlane.f32.xlu0 %v1233
    %v1235 = vpop.xlane.xlu0 %1234
    %v1236 = vsel %vm121, %v1066, 0.0
    %1237 = vadd.xlane.f32.xlu0 %v1236
    %v1238 = vpop.xlane.xlu0 %1237
    %v1239 = vsel %vm121, %v1068, 0.0
    %1240 = vadd.xlane.f32.xlu0 %v1239
    %v1241 = vpop.xlane.xlu0 %1240
    %v1242 = vsel %vm121, %v1070, 0.0
    %1243 = vadd.xlane.f32.xlu0 %v1242
    %v1244 = vpop.xlane.xlu0 %1243
    %v1245 = vsel %vm121, %v1072, 0.0
    %1246 = vadd.xlane.f32.xlu0 %v1245
    %v1247 = vpop.xlane.xlu0 %1246
    %v1248 = vsel %vm121, %v1074, 0.0
    %1249 = vadd.xlane.f32.xlu0 %v1248
    %v1250 = vpop.xlane.xlu0 %1249
    %v1251 = vsel %vm121, %v1076, 0.0
    %1252 = vadd.xlane.f32.xlu0 %v1251
    %v1253 = vpop.xlane.xlu0 %1252
    %v1254 = vsel %vm121, %v1078, 0.0
    %1255 = vadd.xlane.f32.xlu0 %v1254
    %v1256 = vpop.xlane.xlu0 %1255
    %v1257 = vsel %vm121, %v1080, 0.0
    %1258 = vadd.xlane.f32.xlu0 %v1257
    %v1259 = vpop.xlane.xlu0 %1258
    %v1260 = vsel %vm121, %v1082, 0.0
    %1261 = vadd.xlane.f32.xlu0 %v1260
    %v1262 = vpop.xlane.xlu0 %1261
    %v1263 = vsel %vm121, %v1084, 0.0
    %1264 = vadd.xlane.f32.xlu0 %v1263
    %v1265 = vpop.xlane.xlu0 %1264
    %v1266 = vsel %vm121, %v1086, 0.0
    %1267 = vadd.xlane.f32.xlu0 %v1266
    %v1268 = vpop.xlane.xlu0 %1267
    %v1269 = vsel %vm121, %v1088, 0.0
    %1270 = vadd.xlane.f32.xlu0 %v1269
    %v1271 = vpop.xlane.xlu0 %1270
    %v1272 = vsel %vm121, %v1090, 0.0
    %1273 = vadd.xlane.f32.xlu0 %v1272
    %v1274 = vpop.xlane.xlu0 %1273
    %v1275 = vsel %vm121, %v1092, 0.0
    %1276 = vadd.xlane.f32.xlu0 %v1275
    %v1277 = vpop.xlane.xlu0 %1276
    %v1278 = vsel %vm121, %v1094, 0.0
    %1279 = vadd.xlane.f32.xlu0 %v1278
    %v1280 = vpop.xlane.xlu0 %1279
    %v1281 = vsel %vm121, %v1096, 0.0
    %1282 = vadd.xlane.f32.xlu0 %v1281
    %v1283 = vpop.xlane.xlu0 %1282
    %v1284 = vsel %vm121, %v1098, 0.0
    %1285 = vadd.xlane.f32.xlu0 %v1284
    %v1286 = vpop.xlane.xlu0 %1285
    %v1287 = vsel %vm121, %v1100, 0.0
    %1288 = vadd.xlane.f32.xlu0 %v1287
    %v1289 = vpop.xlane.xlu0 %1288
    %v1290 = vsel %vm121, %v1102, 0.0
    %1291 = vadd.xlane.f32.xlu0 %v1290
    %v1292 = vpop.xlane.xlu0 %1291
    %v1293 = vsel %vm121, %v1104, 0.0
    %1294 = vadd.xlane.f32.xlu0 %v1293
    %v1295 = vpop.xlane.xlu0 %1294
    %v1296 = vsel %vm121, %v1106, 0.0
    %1297 = vadd.xlane.f32.xlu0 %v1296
    %v1298 = vpop.xlane.xlu0 %1297
    %v1299 = vrcp.pop %v1109
    %v1300 = vrcp.pop %v1112
    %v1301 = vrcp.pop %v1115
    %v1302 = vrcp.pop %v1118
    %v1303 = vrcp.pop %v1121
    %v1304 = vrcp.pop %v1124
    %v1305 = vrcp.pop %v1127
    %v1306 = vrcp.pop %v1130
    %v1307 = vrcp.pop %v1133
    %v1308 = vrcp.pop %v1136
    %v1309 = vrcp.pop %v1139
    %v1310 = vrcp.pop %v1142
    %v1311 = vrcp.pop %v1145
    %v1312 = vrcp.pop %v1148
    %v1313 = vrcp.pop %v1151
    %v1314 = vrcp.pop %v1154
    %v1315 = vrcp.pop %v1157
    %v1316 = vrcp.pop %v1160
    %v1317 = vrcp.pop %v1163
    %v1318 = vrcp.pop %v1166
    %v1319 = vrcp.pop %v1169
    %v1320 = vrcp.pop %v1172
    %v1321 = vrcp.pop %v1175
    %v1322 = vrcp.pop %v1178
    %v1323 = vrcp.pop %v1181
    %v1324 = vrcp.pop %v1184
    %v1325 = vrcp.pop %v1187
    %v1326 = vrcp.pop %v1190
    %v1327 = vrcp.pop %v1193
    %v1328 = vrcp.pop %v1196
    %v1329 = vrcp.pop %v1199
    %v1330 = vrcp.pop %v1202
    %v1331 = vrcp.pop %v1205
    %v1332 = vrcp.pop %v1208
    %v1333 = vrcp.pop %v1211
    %v1334 = vrcp.pop %v1214
    %v1335 = vrcp.pop %v1217
    %v1336 = vrcp.pop %v1220
    %v1337 = vrcp.pop %v1223
    %v1338 = vrcp.pop %v1226
    %v1339 = vrcp.pop %v1229
    %v1340 = vrcp.pop %v1232
    %v1341 = vrcp.pop %v1235
    %v1342 = vrcp.pop %v1238
    %v1343 = vrcp.pop %v1241
    %v1344 = vrcp.pop %v1244
    %v1345 = vrcp.pop %v1247
    %v1346 = vrcp.pop %v1250
    %v1347 = vrcp.pop %v1253
    %v1348 = vrcp.pop %v1256
    %v1349 = vrcp.pop %v1259
    %v1350 = vrcp.pop %v1262
    %v1351 = vrcp.pop %v1265
    %v1352 = vrcp.pop %v1268
    %v1353 = vrcp.pop %v1271
    %v1354 = vrcp.pop %v1274
    %v1355 = vrcp.pop %v1277
    %v1356 = vrcp.pop %v1280
    %v1357 = vrcp.pop %v1283
    %v1358 = vrcp.pop %v1286
    %v1359 = vrcp.pop %v1289
    %v1360 = vrcp.pop %v1292
    %v1361 = vrcp.pop %v1295
    %v1362 = vrcp.pop %v1298
    %1363 = vmatprep.subr.mxu0 0.0
    %1364 = vmatpush1.msra.mxu0 0.0
    %1365 = vmatprep.subr.mxu0 0.0
    %1366 = vmatpush1.msra.mxu0 0.0
    %1367 = vmatprep.subr.mxu0 0.0
    %1368 = vmatpush1.msra.mxu0 0.0
    %1369 = vmatprep.subr.mxu0 0.0
    %1370 = vmatpush1.msra.mxu0 0.0
    %1371 = vmatprep.subr.mxu0 0.0
    %1372 = vmatpush1.msra.mxu0 0.0
    %1373 = vmatprep.subr.mxu0 0.0
    %1374 = vmatpush1.msra.mxu0 0.0
    %1375 = vmatprep.subr.mxu0 0.0
    %1376 = vmatpush1.msra.mxu0 0.0
    %1377 = vmatprep.subr.mxu0 0.0
    %1378 = vmatpush1.msra.mxu0 0.0
    %1379 = vmatprep.subr.mxu0 0.0
    %1380 = vmatpush1.msra.mxu0 %v103
    %1381 = vmatprep.subr.mxu0 0.0
    %1382 = vmatpush1.msra.mxu0 %v102
    %1383 = vmatprep.subr.mxu0 0.0
    %1384 = vmatpush1.msra.mxu0 %v101
    %1385 = vmatprep.subr.mxu0 0.0
    %1386 = vmatpush1.msra.mxu0 %v100
    %1387 = vmatprep.subr.mxu0 0.0
    %1388 = vmatpush1.msra.mxu0 %v99
    %1389 = vmatprep.subr.mxu0 0.0
    %1390 = vmatpush1.msra.mxu0 %v98
    %1391 = vmatprep.subr.mxu0 0.0
    %1392 = vmatpush1.msra.mxu0 %v97
    %1393 = vmatprep.subr.mxu0 0.0
    %1394 = vmatpush1.msra.mxu0 %v96
    %1395 = vmatprep.subr.mxu0 0.0
    %1396 = vmatpush2.msra.mxu0 0.0
    %1397 = vmatprep.subr.mxu0 0.0
    %1398 = vmatpush2.msra.mxu0 0.0
    %1399 = vmatprep.subr.mxu0 0.0
    %1400 = vmatpush2.msra.mxu0 0.0
    %1401 = vmatprep.subr.mxu0 0.0
    %1402 = vmatpush2.msra.mxu0 0.0
    %1403 = vmatprep.subr.mxu0 0.0
    %1404 = vmatpush2.msra.mxu0 0.0
    %1405 = vmatprep.subr.mxu0 0.0
    %1406 = vmatpush2.msra.mxu0 0.0
    %1407 = vmatprep.subr.mxu0 0.0
    %1408 = vmatpush2.msra.mxu0 0.0
    %1409 = vmatprep.subr.mxu0 0.0
    %1410 = vmatpush2.msra.mxu0 0.0
    %1411 = vmatprep.subr.mxu0 0.0
    %1412 = vmatpush2.msra.mxu0 0.0
    %1413 = vmatprep.subr.mxu0 0.0
    %1414 = vmatpush2.msra.mxu0 0.0
    %1415 = vmatprep.subr.mxu0 0.0
    %1416 = vmatpush2.msra.mxu0 0.0
    %1417 = vmatprep.subr.mxu0 0.0
    %1418 = vmatpush2.msra.mxu0 0.0
    %1419 = vmatprep.subr.mxu0 0.0
    %1420 = vmatpush2.msra.mxu0 0.0
    %1421 = vmatprep.subr.mxu0 0.0
    %1422 = vmatpush2.msra.mxu0 0.0
    %1423 = vmatprep.subr.mxu0 0.0
    %1424 = vmatpush2.msra.mxu0 0.0
    %1425 = vmatprep.subr.mxu0 0.0
    %1426 = vmatpush2.msra.mxu0 0.0
    %1427 = vmatprep.mubr.f32.mxu0 0.0
    %1428 = vmatmul.mubr.f32.gmra.mxu0 %v315
    %v1429 = vpop.f32.mrf.mxu0
    %v1430 = vadd.f32 0.0, %v1429
    %v1431 = vpop.f32.mrf.mxu0
    %1432 = vmatprep.mubr.f32.mxu0 0.0
    %1433 = vmatmul.mubr.f32.gmra.mxu0 %v318
    %v1434 = vpop.f32.mrf.mxu0
    %v1435 = vadd.f32 0.0, %v1434
    %v1436 = vpop.f32.mrf.mxu0
    %1437 = vmatprep.mubr.f32.mxu0 0.0
    %1438 = vmatmul.mubr.f32.gmra.mxu0 %v321
    %v1439 = vpop.f32.mrf.mxu0
    %v1440 = vadd.f32 0.0, %v1439
    %v1441 = vpop.f32.mrf.mxu0
    %1442 = vmatprep.mubr.f32.mxu0 0.0
    %1443 = vmatmul.mubr.f32.gmra.mxu0 %v324
    %v1444 = vpop.f32.mrf.mxu0
    %v1445 = vadd.f32 0.0, %v1444
    %v1446 = vpop.f32.mrf.mxu0
    %1447 = vmatprep.mubr.f32.mxu0 0.0
    %1448 = vmatmul.mubr.f32.gmra.mxu0 %v327
    %v1449 = vpop.f32.mrf.mxu0
    %v1450 = vadd.f32 0.0, %v1449
    %v1451 = vpop.f32.mrf.mxu0
    %1452 = vmatprep.mubr.f32.mxu0 0.0
    %1453 = vmatmul.mubr.f32.gmra.mxu0 %v330
    %v1454 = vpop.f32.mrf.mxu0
    %v1455 = vadd.f32 0.0, %v1454
    %v1456 = vpop.f32.mrf.mxu0
    %1457 = vmatprep.mubr.f32.mxu0 0.0
    %1458 = vmatmul.mubr.f32.gmra.mxu0 %v333
    %v1459 = vpop.f32.mrf.mxu0
    %v1460 = vadd.f32 0.0, %v1459
    %v1461 = vpop.f32.mrf.mxu0
    %1462 = vmatprep.mubr.f32.mxu0 0.0
    %1463 = vmatmul.mubr.f32.gmra.mxu0 %v336
    %v1464 = vpop.f32.mrf.mxu0
    %v1465 = vadd.f32 0.0, %v1464
    %v1466 = vpop.f32.mrf.mxu0
    %1467 = vdwg.mxu0
    %v1469 = vsel %vm121, %v980, 0
    %v1472 = vsel %vm121, %v982, 0
    %v1475 = vsel %vm121, %v984, 0
    %v1478 = vsel %vm121, %v986, 0
    %v1481 = vsel %vm121, %v988, 0
    %v1484 = vsel %vm121, %v990, 0
    %v1487 = vsel %vm121, %v992, 0
    %v1490 = vsel %vm121, %v994, 0
    %v1493 = vsel %vm121, %v996, 0
    %v1496 = vsel %vm121, %v998, 0
    %v1499 = vsel %vm121, %v1000, 0
    %v1502 = vsel %vm121, %v1002, 0
    %v1505 = vsel %vm121, %v1004, 0
    %v1508 = vsel %vm121, %v1006, 0
    %v1511 = vsel %vm121, %v1008, 0
    %v1514 = vsel %vm121, %v1010, 0
    %v1517 = vsel %vm121, %v1012, 0
    %v1520 = vsel %vm121, %v1014, 0
    %v1523 = vsel %vm121, %v1016, 0
    %v1526 = vsel %vm121, %v1018, 0
    %v1529 = vsel %vm121, %v1020, 0
    %v1532 = vsel %vm121, %v1022, 0
    %v1535 = vsel %vm121, %v1024, 0
    %v1538 = vsel %vm121, %v1026, 0
    %v1541 = vsel %vm121, %v1028, 0
    %v1544 = vsel %vm121, %v1030, 0
    %v1547 = vsel %vm121, %v1032, 0
    %v1550 = vsel %vm121, %v1034, 0
    %v1553 = vsel %vm121, %v1036, 0
    %v1556 = vsel %vm121, %v1038, 0
    %v1559 = vsel %vm121, %v1040, 0
    %v1562 = vsel %vm121, %v1042, 0
    %v1565 = vsel %vm121, %v1044, 0
    %v1568 = vsel %vm121, %v1046, 0
    %v1571 = vsel %vm121, %v1048, 0
    %v1574 = vsel %vm121, %v1050, 0
    %v1577 = vsel %vm121, %v1052, 0
    %v1580 = vsel %vm121, %v1054, 0
    %v1583 = vsel %vm121, %v1056, 0
    %v1586 = vsel %vm121, %v1058, 0
    %v1589 = vsel %vm121, %v1060, 0
    %v1592 = vsel %vm121, %v1062, 0
    %v1595 = vsel %vm121, %v1064, 0
    %v1598 = vsel %vm121, %v1066, 0
    %v1601 = vsel %vm121, %v1068, 0
    %v1604 = vsel %vm121, %v1070, 0
    %v1607 = vsel %vm121, %v1072, 0
    %v1610 = vsel %vm121, %v1074, 0
    %v1613 = vsel %vm121, %v1076, 0
    %v1616 = vsel %vm121, %v1078, 0
    %v1619 = vsel %vm121, %v1080, 0
    %v1622 = vsel %vm121, %v1082, 0
    %v1625 = vsel %vm121, %v1084, 0
    %v1628 = vsel %vm121, %v1086, 0
    %v1631 = vsel %vm121, %v1088, 0
    %v1634 = vsel %vm121, %v1090, 0
    %v1637 = vsel %vm121, %v1092, 0
    %v1640 = vsel %vm121, %v1094, 0
    %v1643 = vsel %vm121, %v1096, 0
    %v1646 = vsel %vm121, %v1098, 0
    %v1649 = vsel %vm121, %v1100, 0
    %v1652 = vsel %vm121, %v1102, 0
    %v1655 = vsel %vm121, %v1104, 0
    %v1658 = vsel %vm121, %v1106, 0
    %1660 = vmatprep.subr.mxu0 0.0
    %1661 = vmatpush1.msra.mxu0 0.0
    %1662 = vmatprep.subr.mxu0 0.0
    %1663 = vmatpush1.msra.mxu0 0.0
    %1664 = vmatprep.subr.mxu0 0.0
    %1665 = vmatpush1.msra.mxu0 0.0
    %1666 = vmatprep.subr.mxu0 0.0
    %1667 = vmatpush1.msra.mxu0 0.0
    %1668 = vmatprep.subr.mxu0 0.0
    %1669 = vmatpush1.msra.mxu0 0.0
    %1670 = vmatprep.subr.mxu0 0.0
    %1671 = vmatpush1.msra.mxu0 0.0
    %1672 = vmatprep.subr.mxu0 0.0
    %1673 = vmatpush1.msra.mxu0 0.0
    %1674 = vmatprep.subr.mxu0 0.0
    %1675 = vmatpush1.msra.mxu0 0.0
    %1676 = vmatprep.subr.mxu0 0.0
    %1677 = vmatpush1.msra.mxu0 %v1465
    %1678 = vmatprep.subr.mxu0 0.0
    %1679 = vmatpush1.msra.mxu0 %v1460
    %1680 = vmatprep.subr.mxu0 0.0
    %1681 = vmatpush1.msra.mxu0 %v1455
    %1682 = vmatprep.subr.mxu0 0.0
    %1683 = vmatpush1.msra.mxu0 %v1450
    %1684 = vmatprep.subr.mxu0 0.0
    %1685 = vmatpush1.msra.mxu0 %v1445
    %1686 = vmatprep.subr.mxu0 0.0
    %1687 = vmatpush1.msra.mxu0 %v1440
    %1688 = vmatprep.subr.mxu0 0.0
    %1689 = vmatpush1.msra.mxu0 %v1435
    %1690 = vmatprep.subr.mxu0 0.0
    %1691 = vmatpush1.msra.mxu0 %v1430
    %1692 = vmatprep.subr.mxu0 0.0
    %1693 = vmatpush2.msra.mxu0 0.0
    %1694 = vmatprep.subr.mxu0 0.0
    %1695 = vmatpush2.msra.mxu0 0.0
    %1696 = vmatprep.subr.mxu0 0.0
    %1697 = vmatpush2.msra.mxu0 0.0
    %1698 = vmatprep.subr.mxu0 0.0
    %1699 = vmatpush2.msra.mxu0 0.0
    %1700 = vmatprep.subr.mxu0 0.0
    %1701 = vmatpush2.msra.mxu0 0.0
    %1702 = vmatprep.subr.mxu0 0.0
    %1703 = vmatpush2.msra.mxu0 0.0
    %1704 = vmatprep.subr.mxu0 0.0
    %1705 = vmatpush2.msra.mxu0 0.0
    %1706 = vmatprep.subr.mxu0 0.0
    %1707 = vmatpush2.msra.mxu0 0.0
    %1708 = vmatprep.subr.mxu0 0.0
    %1709 = vmatpush2.msra.mxu0 0.0
    %1710 = vmatprep.subr.mxu0 0.0
    %1711 = vmatpush2.msra.mxu0 0.0
    %1712 = vmatprep.subr.mxu0 0.0
    %1713 = vmatpush2.msra.mxu0 0.0
    %1714 = vmatprep.subr.mxu0 0.0
    %1715 = vmatpush2.msra.mxu0 0.0
    %1716 = vmatprep.subr.mxu0 0.0
    %1717 = vmatpush2.msra.mxu0 0.0
    %1718 = vmatprep.subr.mxu0 0.0
    %1719 = vmatpush2.msra.mxu0 0.0
    %1720 = vmatprep.subr.mxu0 0.0
    %1721 = vmatpush2.msra.mxu0 0.0
    %1722 = vmatprep.subr.mxu0 0.0
    %1723 = vmatpush2.msra.mxu0 0.0
    %1724 = vmatprep.mubr.f32.mxu0 0.0
    %1725 = vmatmul.mubr.f32.gmra.mxu0 %v1469
    %v1726 = vpop.f32.mrf.mxu0
    %v1727 = vadd.f32 0.0, %v1726
    %v1728 = vpop.f32.mrf.mxu0
    %1729 = vmatprep.mubr.f32.mxu0 0.0
    %1730 = vmatmul.mubr.f32.gmra.mxu0 %v1472
    %v1731 = vpop.f32.mrf.mxu0
    %v1732 = vadd.f32 0.0, %v1731
    %v1733 = vpop.f32.mrf.mxu0
    %1734 = vmatprep.mubr.f32.mxu0 0.0
    %1735 = vmatmul.mubr.f32.gmra.mxu0 %v1475
    %v1736 = vpop.f32.mrf.mxu0
    %v1737 = vadd.f32 0.0, %v1736
    %v1738 = vpop.f32.mrf.mxu0
    %1739 = vmatprep.mubr.f32.mxu0 0.0
    %1740 = vmatmul.mubr.f32.gmra.mxu0 %v1478
    %v1741 = vpop.f32.mrf.mxu0
    %v1742 = vadd.f32 0.0, %v1741
    %v1743 = vpop.f32.mrf.mxu0
    %1744 = vmatprep.mubr.f32.mxu0 0.0
    %1745 = vmatmul.mubr.f32.gmra.mxu0 %v1481
    %v1746 = vpop.f32.mrf.mxu0
    %v1747 = vadd.f32 0.0, %v1746
    %v1748 = vpop.f32.mrf.mxu0
    %1749 = vmatprep.mubr.f32.mxu0 0.0
    %1750 = vmatmul.mubr.f32.gmra.mxu0 %v1484
    %v1751 = vpop.f32.mrf.mxu0
    %v1752 = vadd.f32 0.0, %v1751
    %v1753 = vpop.f32.mrf.mxu0
    %1754 = vmatprep.mubr.f32.mxu0 0.0
    %1755 = vmatmul.mubr.f32.gmra.mxu0 %v1487
    %v1756 = vpop.f32.mrf.mxu0
    %v1757 = vadd.f32 0.0, %v1756
    %v1758 = vpop.f32.mrf.mxu0
    %1759 = vmatprep.mubr.f32.mxu0 0.0
    %1760 = vmatmul.mubr.f32.gmra.mxu0 %v1490
    %v1761 = vpop.f32.mrf.mxu0
    %v1762 = vadd.f32 0.0, %v1761
    %v1763 = vpop.f32.mrf.mxu0
    %1764 = vmatprep.mubr.f32.mxu0 0.0
    %1765 = vmatmul.mubr.f32.gmra.mxu0 %v1493
    %v1766 = vpop.f32.mrf.mxu0
    %v1767 = vadd.f32 0.0, %v1766
    %v1768 = vpop.f32.mrf.mxu0
    %1769 = vmatprep.mubr.f32.mxu0 0.0
    %1770 = vmatmul.mubr.f32.gmra.mxu0 %v1496
    %v1771 = vpop.f32.mrf.mxu0
    %v1772 = vadd.f32 0.0, %v1771
    %v1773 = vpop.f32.mrf.mxu0
    %1774 = vmatprep.mubr.f32.mxu0 0.0
    %1775 = vmatmul.mubr.f32.gmra.mxu0 %v1499
    %v1776 = vpop.f32.mrf.mxu0
    %v1777 = vadd.f32 0.0, %v1776
    %v1778 = vpop.f32.mrf.mxu0
    %1779 = vmatprep.mubr.f32.mxu0 0.0
    %1780 = vmatmul.mubr.f32.gmra.mxu0 %v1502
    %v1781 = vpop.f32.mrf.mxu0
    %v1782 = vadd.f32 0.0, %v1781
    %v1783 = vpop.f32.mrf.mxu0
    %1784 = vmatprep.mubr.f32.mxu0 0.0
    %1785 = vmatmul.mubr.f32.gmra.mxu0 %v1505
    %v1786 = vpop.f32.mrf.mxu0
    %v1787 = vadd.f32 0.0, %v1786
    %v1788 = vpop.f32.mrf.mxu0
    %1789 = vmatprep.mubr.f32.mxu0 0.0
    %1790 = vmatmul.mubr.f32.gmra.mxu0 %v1508
    %v1791 = vpop.f32.mrf.mxu0
    %v1792 = vadd.f32 0.0, %v1791
    %v1793 = vpop.f32.mrf.mxu0
    %1794 = vmatprep.mubr.f32.mxu0 0.0
    %1795 = vmatmul.mubr.f32.gmra.mxu0 %v1511
    %v1796 = vpop.f32.mrf.mxu0
    %v1797 = vadd.f32 0.0, %v1796
    %v1798 = vpop.f32.mrf.mxu0
    %1799 = vmatprep.mubr.f32.mxu0 0.0
    %1800 = vmatmul.mubr.f32.gmra.mxu0 %v1514
    %v1801 = vpop.f32.mrf.mxu0
    %v1802 = vadd.f32 0.0, %v1801
    %v1803 = vpop.f32.mrf.mxu0
    %1804 = vmatprep.mubr.f32.mxu0 0.0
    %1805 = vmatmul.mubr.f32.gmra.mxu0 %v1517
    %v1806 = vpop.f32.mrf.mxu0
    %v1807 = vadd.f32 0.0, %v1806
    %v1808 = vpop.f32.mrf.mxu0
    %1809 = vmatprep.mubr.f32.mxu0 0.0
    %1810 = vmatmul.mubr.f32.gmra.mxu0 %v1520
    %v1811 = vpop.f32.mrf.mxu0
    %v1812 = vadd.f32 0.0, %v1811
    %v1813 = vpop.f32.mrf.mxu0
    %1814 = vmatprep.mubr.f32.mxu0 0.0
    %1815 = vmatmul.mubr.f32.gmra.mxu0 %v1523
    %v1816 = vpop.f32.mrf.mxu0
    %v1817 = vadd.f32 0.0, %v1816
    %v1818 = vpop.f32.mrf.mxu0
    %1819 = vmatprep.mubr.f32.mxu0 0.0
    %1820 = vmatmul.mubr.f32.gmra.mxu0 %v1526
    %v1821 = vpop.f32.mrf.mxu0
    %v1822 = vadd.f32 0.0, %v1821
    %v1823 = vpop.f32.mrf.mxu0
    %1824 = vmatprep.mubr.f32.mxu0 0.0
    %1825 = vmatmul.mubr.f32.gmra.mxu0 %v1529
    %v1826 = vpop.f32.mrf.mxu0
    %v1827 = vadd.f32 0.0, %v1826
    %v1828 = vpop.f32.mrf.mxu0
    %1829 = vmatprep.mubr.f32.mxu0 0.0
    %1830 = vmatmul.mubr.f32.gmra.mxu0 %v1532
    %v1831 = vpop.f32.mrf.mxu0
    %v1832 = vadd.f32 0.0, %v1831
    %v1833 = vpop.f32.mrf.mxu0
    %1834 = vmatprep.mubr.f32.mxu0 0.0
    %1835 = vmatmul.mubr.f32.gmra.mxu0 %v1535
    %v1836 = vpop.f32.mrf.mxu0
    %v1837 = vadd.f32 0.0, %v1836
    %v1838 = vpop.f32.mrf.mxu0
    %1839 = vmatprep.mubr.f32.mxu0 0.0
    %1840 = vmatmul.mubr.f32.gmra.mxu0 %v1538
    %v1841 = vpop.f32.mrf.mxu0
    %v1842 = vadd.f32 0.0, %v1841
    %v1843 = vpop.f32.mrf.mxu0
    %1844 = vmatprep.mubr.f32.mxu0 0.0
    %1845 = vmatmul.mubr.f32.gmra.mxu0 %v1541
    %v1846 = vpop.f32.mrf.mxu0
    %v1847 = vadd.f32 0.0, %v1846
    %v1848 = vpop.f32.mrf.mxu0
    %1849 = vmatprep.mubr.f32.mxu0 0.0
    %1850 = vmatmul.mubr.f32.gmra.mxu0 %v1544
    %v1851 = vpop.f32.mrf.mxu0
    %v1852 = vadd.f32 0.0, %v1851
    %v1853 = vpop.f32.mrf.mxu0
    %1854 = vmatprep.mubr.f32.mxu0 0.0
    %1855 = vmatmul.mubr.f32.gmra.mxu0 %v1547
    %v1856 = vpop.f32.mrf.mxu0
    %v1857 = vadd.f32 0.0, %v1856
    %v1858 = vpop.f32.mrf.mxu0
    %1859 = vmatprep.mubr.f32.mxu0 0.0
    %1860 = vmatmul.mubr.f32.gmra.mxu0 %v1550
    %v1861 = vpop.f32.mrf.mxu0
    %v1862 = vadd.f32 0.0, %v1861
    %v1863 = vpop.f32.mrf.mxu0
    %1864 = vmatprep.mubr.f32.mxu0 0.0
    %1865 = vmatmul.mubr.f32.gmra.mxu0 %v1553
    %v1866 = vpop.f32.mrf.mxu0
    %v1867 = vadd.f32 0.0, %v1866
    %v1868 = vpop.f32.mrf.mxu0
    %1869 = vmatprep.mubr.f32.mxu0 0.0
    %1870 = vmatmul.mubr.f32.gmra.mxu0 %v1556
    %v1871 = vpop.f32.mrf.mxu0
    %v1872 = vadd.f32 0.0, %v1871
    %v1873 = vpop.f32.mrf.mxu0
    %1874 = vmatprep.mubr.f32.mxu0 0.0
    %1875 = vmatmul.mubr.f32.gmra.mxu0 %v1559
    %v1876 = vpop.f32.mrf.mxu0
    %v1877 = vadd.f32 0.0, %v1876
    %v1878 = vpop.f32.mrf.mxu0
    %1879 = vmatprep.mubr.f32.mxu0 0.0
    %1880 = vmatmul.mubr.f32.gmra.mxu0 %v1562
    %v1881 = vpop.f32.mrf.mxu0
    %v1882 = vadd.f32 0.0, %v1881
    %v1883 = vpop.f32.mrf.mxu0
    %1884 = vmatprep.mubr.f32.mxu0 0.0
    %1885 = vmatmul.mubr.f32.gmra.mxu0 %v1565
    %v1886 = vpop.f32.mrf.mxu0
    %v1887 = vadd.f32 0.0, %v1886
    %v1888 = vpop.f32.mrf.mxu0
    %1889 = vmatprep.mubr.f32.mxu0 0.0
    %1890 = vmatmul.mubr.f32.gmra.mxu0 %v1568
    %v1891 = vpop.f32.mrf.mxu0
    %v1892 = vadd.f32 0.0, %v1891
    %v1893 = vpop.f32.mrf.mxu0
    %1894 = vmatprep.mubr.f32.mxu0 0.0
    %1895 = vmatmul.mubr.f32.gmra.mxu0 %v1571
    %v1896 = vpop.f32.mrf.mxu0
    %v1897 = vadd.f32 0.0, %v1896
    %v1898 = vpop.f32.mrf.mxu0
    %1899 = vmatprep.mubr.f32.mxu0 0.0
    %1900 = vmatmul.mubr.f32.gmra.mxu0 %v1574
    %v1901 = vpop.f32.mrf.mxu0
    %v1902 = vadd.f32 0.0, %v1901
    %v1903 = vpop.f32.mrf.mxu0
    %1904 = vmatprep.mubr.f32.mxu0 0.0
    %1905 = vmatmul.mubr.f32.gmra.mxu0 %v1577
    %v1906 = vpop.f32.mrf.mxu0
    %v1907 = vadd.f32 0.0, %v1906
    %v1908 = vpop.f32.mrf.mxu0
    %1909 = vmatprep.mubr.f32.mxu0 0.0
    %1910 = vmatmul.mubr.f32.gmra.mxu0 %v1580
    %v1911 = vpop.f32.mrf.mxu0
    %v1912 = vadd.f32 0.0, %v1911
    %v1913 = vpop.f32.mrf.mxu0
    %1914 = vmatprep.mubr.f32.mxu0 0.0
    %1915 = vmatmul.mubr.f32.gmra.mxu0 %v1583
    %v1916 = vpop.f32.mrf.mxu0
    %v1917 = vadd.f32 0.0, %v1916
    %v1918 = vpop.f32.mrf.mxu0
    %1919 = vmatprep.mubr.f32.mxu0 0.0
    %1920 = vmatmul.mubr.f32.gmra.mxu0 %v1586
    %v1921 = vpop.f32.mrf.mxu0
    %v1922 = vadd.f32 0.0, %v1921
    %v1923 = vpop.f32.mrf.mxu0
    %1924 = vmatprep.mubr.f32.mxu0 0.0
    %1925 = vmatmul.mubr.f32.gmra.mxu0 %v1589
    %v1926 = vpop.f32.mrf.mxu0
    %v1927 = vadd.f32 0.0, %v1926
    %v1928 = vpop.f32.mrf.mxu0
    %1929 = vmatprep.mubr.f32.mxu0 0.0
    %1930 = vmatmul.mubr.f32.gmra.mxu0 %v1592
    %v1931 = vpop.f32.mrf.mxu0
    %v1932 = vadd.f32 0.0, %v1931
    %v1933 = vpop.f32.mrf.mxu0
    %1934 = vmatprep.mubr.f32.mxu0 0.0
    %1935 = vmatmul.mubr.f32.gmra.mxu0 %v1595
    %v1936 = vpop.f32.mrf.mxu0
    %v1937 = vadd.f32 0.0, %v1936
    %v1938 = vpop.f32.mrf.mxu0
    %1939 = vmatprep.mubr.f32.mxu0 0.0
    %1940 = vmatmul.mubr.f32.gmra.mxu0 %v1598
    %v1941 = vpop.f32.mrf.mxu0
    %v1942 = vadd.f32 0.0, %v1941
    %v1943 = vpop.f32.mrf.mxu0
    %1944 = vmatprep.mubr.f32.mxu0 0.0
    %1945 = vmatmul.mubr.f32.gmra.mxu0 %v1601
    %v1946 = vpop.f32.mrf.mxu0
    %v1947 = vadd.f32 0.0, %v1946
    %v1948 = vpop.f32.mrf.mxu0
    %1949 = vmatprep.mubr.f32.mxu0 0.0
    %1950 = vmatmul.mubr.f32.gmra.mxu0 %v1604
    %v1951 = vpop.f32.mrf.mxu0
    %v1952 = vadd.f32 0.0, %v1951
    %v1953 = vpop.f32.mrf.mxu0
    %1954 = vmatprep.mubr.f32.mxu0 0.0
    %1955 = vmatmul.mubr.f32.gmra.mxu0 %v1607
    %v1956 = vpop.f32.mrf.mxu0
    %v1957 = vadd.f32 0.0, %v1956
    %v1958 = vpop.f32.mrf.mxu0
    %1959 = vmatprep.mubr.f32.mxu0 0.0
    %1960 = vmatmul.mubr.f32.gmra.mxu0 %v1610
    %v1961 = vpop.f32.mrf.mxu0
    %v1962 = vadd.f32 0.0, %v1961
    %v1963 = vpop.f32.mrf.mxu0
    %1964 = vmatprep.mubr.f32.mxu0 0.0
    %1965 = vmatmul.mubr.f32.gmra.mxu0 %v1613
    %v1966 = vpop.f32.mrf.mxu0
    %v1967 = vadd.f32 0.0, %v1966
    %v1968 = vpop.f32.mrf.mxu0
    %1969 = vmatprep.mubr.f32.mxu0 0.0
    %1970 = vmatmul.mubr.f32.gmra.mxu0 %v1616
    %v1971 = vpop.f32.mrf.mxu0
    %v1972 = vadd.f32 0.0, %v1971
    %v1973 = vpop.f32.mrf.mxu0
    %1974 = vmatprep.mubr.f32.mxu0 0.0
    %1975 = vmatmul.mubr.f32.gmra.mxu0 %v1619
    %v1976 = vpop.f32.mrf.mxu0
    %v1977 = vadd.f32 0.0, %v1976
    %v1978 = vpop.f32.mrf.mxu0
    %1979 = vmatprep.mubr.f32.mxu0 0.0
    %1980 = vmatmul.mubr.f32.gmra.mxu0 %v1622
    %v1981 = vpop.f32.mrf.mxu0
    %v1982 = vadd.f32 0.0, %v1981
    %v1983 = vpop.f32.mrf.mxu0
    %1984 = vmatprep.mubr.f32.mxu0 0.0
    %1985 = vmatmul.mubr.f32.gmra.mxu0 %v1625
    %v1986 = vpop.f32.mrf.mxu0
    %v1987 = vadd.f32 0.0, %v1986
    %v1988 = vpop.f32.mrf.mxu0
    %1989 = vmatprep.mubr.f32.mxu0 0.0
    %1990 = vmatmul.mubr.f32.gmra.mxu0 %v1628
    %v1991 = vpop.f32.mrf.mxu0
    %v1992 = vadd.f32 0.0, %v1991
    %v1993 = vpop.f32.mrf.mxu0
    %1994 = vmatprep.mubr.f32.mxu0 0.0
    %1995 = vmatmul.mubr.f32.gmra.mxu0 %v1631
    %v1996 = vpop.f32.mrf.mxu0
    %v1997 = vadd.f32 0.0, %v1996
    %v1998 = vpop.f32.mrf.mxu0
    %1999 = vmatprep.mubr.f32.mxu0 0.0
    %2000 = vmatmul.mubr.f32.gmra.mxu0 %v1634
    %v2001 = vpop.f32.mrf.mxu0
    %v2002 = vadd.f32 0.0, %v2001
    %v2003 = vpop.f32.mrf.mxu0
    %2004 = vmatprep.mubr.f32.mxu0 0.0
    %2005 = vmatmul.mubr.f32.gmra.mxu0 %v1637
    %v2006 = vpop.f32.mrf.mxu0
    %v2007 = vadd.f32 0.0, %v2006
    %v2008 = vpop.f32.mrf.mxu0
    %2009 = vmatprep.mubr.f32.mxu0 0.0
    %2010 = vmatmul.mubr.f32.gmra.mxu0 %v1640
    %v2011 = vpop.f32.mrf.mxu0
    %v2012 = vadd.f32 0.0, %v2011
    %v2013 = vpop.f32.mrf.mxu0
    %2014 = vmatprep.mubr.f32.mxu0 0.0
    %2015 = vmatmul.mubr.f32.gmra.mxu0 %v1643
    %v2016 = vpop.f32.mrf.mxu0
    %v2017 = vadd.f32 0.0, %v2016
    %v2018 = vpop.f32.mrf.mxu0
    %2019 = vmatprep.mubr.f32.mxu0 0.0
    %2020 = vmatmul.mubr.f32.gmra.mxu0 %v1646
    %v2021 = vpop.f32.mrf.mxu0
    %v2022 = vadd.f32 0.0, %v2021
    %v2023 = vpop.f32.mrf.mxu0
    %2024 = vmatprep.mubr.f32.mxu0 0.0
    %2025 = vmatmul.mubr.f32.gmra.mxu0 %v1649
    %v2026 = vpop.f32.mrf.mxu0
    %v2027 = vadd.f32 0.0, %v2026
    %v2028 = vpop.f32.mrf.mxu0
    %2029 = vmatprep.mubr.f32.mxu0 0.0
    %2030 = vmatmul.mubr.f32.gmra.mxu0 %v1652
    %v2031 = vpop.f32.mrf.mxu0
    %v2032 = vadd.f32 0.0, %v2031
    %v2033 = vpop.f32.mrf.mxu0
    %2034 = vmatprep.mubr.f32.mxu0 0.0
    %2035 = vmatmul.mubr.f32.gmra.mxu0 %v1655
    %v2036 = vpop.f32.mrf.mxu0
    %v2037 = vadd.f32 0.0, %v2036
    %v2038 = vpop.f32.mrf.mxu0
    %2039 = vmatprep.mubr.f32.mxu0 0.0
    %2040 = vmatmul.mubr.f32.gmra.mxu0 %v1658
    %v2041 = vpop.f32.mrf.mxu0
    %v2042 = vadd.f32 0.0, %v2041
    %v2043 = vpop.f32.mrf.mxu0
    %2044 = vdwg.mxu0
    %v2045 = vmul.f32 %v1727, %v1299
    %v2046 = vmul.f32 %v1732, %v1300
    %v2047 = vmul.f32 %v1737, %v1301
    %v2048 = vmul.f32 %v1742, %v1302
    %v2049 = vmul.f32 %v1747, %v1303
    %v2050 = vmul.f32 %v1752, %v1304
    %v2051 = vmul.f32 %v1757, %v1305
    %v2052 = vmul.f32 %v1762, %v1306
    %v2053 = vmul.f32 %v1767, %v1307
    %v2054 = vmul.f32 %v1772, %v1308
    %v2055 = vmul.f32 %v1777, %v1309
    %v2056 = vmul.f32 %v1782, %v1310
    %v2057 = vmul.f32 %v1787, %v1311
    %v2058 = vmul.f32 %v1792, %v1312
    %v2059 = vmul.f32 %v1797, %v1313
    %v2060 = vmul.f32 %v1802, %v1314
    %v2061 = vmul.f32 %v1807, %v1315
    %v2062 = vmul.f32 %v1812, %v1316
    %v2063 = vmul.f32 %v1817, %v1317
    %v2064 = vmul.f32 %v1822, %v1318
    %v2065 = vmul.f32 %v1827, %v1319
    %v2066 = vmul.f32 %v1832, %v1320
    %v2067 = vmul.f32 %v1837, %v1321
    %v2068 = vmul.f32 %v1842, %v1322
    %v2069 = vmul.f32 %v1847, %v1323
    %v2070 = vmul.f32 %v1852, %v1324
    %v2071 = vmul.f32 %v1857, %v1325
    %v2072 = vmul.f32 %v1862, %v1326
    %v2073 = vmul.f32 %v1867, %v1327
    %v2074 = vmul.f32 %v1872, %v1328
    %v2075 = vmul.f32 %v1877, %v1329
    %v2076 = vmul.f32 %v1882, %v1330
    %v2077 = vmul.f32 %v1887, %v1331
    %v2078 = vmul.f32 %v1892, %v1332
    %v2079 = vmul.f32 %v1897, %v1333
    %v2080 = vmul.f32 %v1902, %v1334
    %v2081 = vmul.f32 %v1907, %v1335
    %v2082 = vmul.f32 %v1912, %v1336
    %v2083 = vmul.f32 %v1917, %v1337
    %v2084 = vmul.f32 %v1922, %v1338
    %v2085 = vmul.f32 %v1927, %v1339
    %v2086 = vmul.f32 %v1932, %v1340
    %v2087 = vmul.f32 %v1937, %v1341
    %v2088 = vmul.f32 %v1942, %v1342
    %v2089 = vmul.f32 %v1947, %v1343
    %v2090 = vmul.f32 %v1952, %v1344
    %v2091 = vmul.f32 %v1957, %v1345
    %v2092 = vmul.f32 %v1962, %v1346
    %v2093 = vmul.f32 %v1967, %v1347
    %v2094 = vmul.f32 %v1972, %v1348
    %v2095 = vmul.f32 %v1977, %v1349
    %v2096 = vmul.f32 %v1982, %v1350
    %v2097 = vmul.f32 %v1987, %v1351
    %v2098 = vmul.f32 %v1992, %v1352
    %v2099 = vmul.f32 %v1997, %v1353
    %v2100 = vmul.f32 %v2002, %v1354
    %v2101 = vmul.f32 %v2007, %v1355
    %v2102 = vmul.f32 %v2012, %v1356
    %v2103 = vmul.f32 %v2017, %v1357
    %v2104 = vmul.f32 %v2022, %v1358
    %v2105 = vmul.f32 %v2027, %v1359
    %v2106 = vmul.f32 %v2032, %v1360
    %v2107 = vmul.f32 %v2037, %v1361
    %v2108 = vmul.f32 %v2042, %v1362
    %v2117 = vlaneseq
    %v2118 = vshrl.u32 %v2117, 7
    %v2119 = vsub.s32 0, %v2118
    %v2120 = vrot.slane %v88, %v2119
    %v2121 = vlaneseq
    %v2122 = vshrl.u32 %v2121, 7
    %v2123 = vsub.s32 0, %v2122
    %v2124 = vrot.slane %v89, %v2123
    %v2125 = vlaneseq
    %v2126 = vshrl.u32 %v2125, 7
    %v2127 = vsub.s32 0, %v2126
    %v2128 = vrot.slane %v90, %v2127
    %v2129 = vlaneseq
    %v2130 = vshrl.u32 %v2129, 7
    %v2131 = vsub.s32 0, %v2130
    %v2132 = vrot.slane %v91, %v2131
    %v2133 = vlaneseq
    %v2134 = vshrl.u32 %v2133, 7
    %v2135 = vsub.s32 0, %v2134
    %v2136 = vrot.slane %v92, %v2135
    %v2137 = vlaneseq
    %v2138 = vshrl.u32 %v2137, 7
    %v2139 = vsub.s32 0, %v2138
    %v2140 = vrot.slane %v93, %v2139
    %v2141 = vlaneseq
    %v2142 = vshrl.u32 %v2141, 7
    %v2143 = vsub.s32 0, %v2142
    %v2144 = vrot.slane %v94, %v2143
    %v2145 = vlaneseq
    %v2146 = vshrl.u32 %v2145, 7
    %v2147 = vsub.s32 0, %v2146
    %v2148 = vrot.slane %v95, %v2147
    %v2157 = vmul.f32 %v2045, %v2120
    %v2158 = vmul.f32 %v2046, %v2120
    %v2159 = vmul.f32 %v2047, %v2120
    %v2160 = vmul.f32 %v2048, %v2120
    %v2161 = vmul.f32 %v2049, %v2120
    %v2162 = vmul.f32 %v2050, %v2120
    %v2163 = vmul.f32 %v2051, %v2120
    %v2164 = vmul.f32 %v2052, %v2120
    %v2165 = vmul.f32 %v2053, %v2124
    %v2166 = vmul.f32 %v2054, %v2124
    %v2167 = vmul.f32 %v2055, %v2124
    %v2168 = vmul.f32 %v2056, %v2124
    %v2169 = vmul.f32 %v2057, %v2124
    %v2170 = vmul.f32 %v2058, %v2124
    %v2171 = vmul.f32 %v2059, %v2124
    %v2172 = vmul.f32 %v2060, %v2124
    %v2173 = vmul.f32 %v2061, %v2128
    %v2174 = vmul.f32 %v2062, %v2128
    %v2175 = vmul.f32 %v2063, %v2128
    %v2176 = vmul.f32 %v2064, %v2128
    %v2177 = vmul.f32 %v2065, %v2128
    %v2178 = vmul.f32 %v2066, %v2128
    %v2179 = vmul.f32 %v2067, %v2128
    %v2180 = vmul.f32 %v2068, %v2128
    %v2181 = vmul.f32 %v2069, %v2132
    %v2182 = vmul.f32 %v2070, %v2132
    %v2183 = vmul.f32 %v2071, %v2132
    %v2184 = vmul.f32 %v2072, %v2132
    %v2185 = vmul.f32 %v2073, %v2132
    %v2186 = vmul.f32 %v2074, %v2132
    %v2187 = vmul.f32 %v2075, %v2132
    %v2188 = vmul.f32 %v2076, %v2132
    %v2189 = vmul.f32 %v2077, %v2136
    %v2190 = vmul.f32 %v2078, %v2136
    %v2191 = vmul.f32 %v2079, %v2136
    %v2192 = vmul.f32 %v2080, %v2136
    %v2193 = vmul.f32 %v2081, %v2136
    %v2194 = vmul.f32 %v2082, %v2136
    %v2195 = vmul.f32 %v2083, %v2136
    %v2196 = vmul.f32 %v2084, %v2136
    %v2197 = vmul.f32 %v2085, %v2140
    %v2198 = vmul.f32 %v2086, %v2140
    %v2199 = vmul.f32 %v2087, %v2140
    %v2200 = vmul.f32 %v2088, %v2140
    %v2201 = vmul.f32 %v2089, %v2140
    %v2202 = vmul.f32 %v2090, %v2140
    %v2203 = vmul.f32 %v2091, %v2140
    %v2204 = vmul.f32 %v2092, %v2140
    %v2205 = vmul.f32 %v2093, %v2144
    %v2206 = vmul.f32 %v2094, %v2144
    %v2207 = vmul.f32 %v2095, %v2144
    %v2208 = vmul.f32 %v2096, %v2144
    %v2209 = vmul.f32 %v2097, %v2144
    %v2210 = vmul.f32 %v2098, %v2144
    %v2211 = vmul.f32 %v2099, %v2144
    %v2212 = vmul.f32 %v2100, %v2144
    %v2213 = vmul.f32 %v2101, %v2148
    %v2214 = vmul.f32 %v2102, %v2148
    %v2215 = vmul.f32 %v2103, %v2148
    %v2216 = vmul.f32 %v2104, %v2148
    %v2217 = vmul.f32 %v2105, %v2148
    %v2218 = vmul.f32 %v2106, %v2148
    %v2219 = vmul.f32 %v2107, %v2148
    %v2220 = vmul.f32 %v2108, %v2148
    %v2221 = vsel %vm121, %v2157, 0.0
    %v2222 = vsel %vm121, %v2165, 0.0
    %v2223 = vadd.f32 %v2221, %v2222
    %v2224 = vsel %vm121, %v2173, 0.0
    %v2225 = vadd.f32 %v2223, %v2224
    %v2226 = vsel %vm121, %v2181, 0.0
    %v2227 = vadd.f32 %v2225, %v2226
    %v2228 = vsel %vm121, %v2189, 0.0
    %v2229 = vadd.f32 %v2227, %v2228
    %v2230 = vsel %vm121, %v2197, 0.0
    %v2231 = vadd.f32 %v2229, %v2230
    %v2232 = vsel %vm121, %v2205, 0.0
    %v2233 = vadd.f32 %v2231, %v2232
    %v2234 = vsel %vm121, %v2213, 0.0
    %v2235 = vadd.f32 %v2233, %v2234
    %v2236 = vsel %vm121, %v2158, 0.0
    %v2237 = vsel %vm121, %v2166, 0.0
    %v2238 = vadd.f32 %v2236, %v2237
    %v2239 = vsel %vm121, %v2174, 0.0
    %v2240 = vadd.f32 %v2238, %v2239
    %v2241 = vsel %vm121, %v2182, 0.0
    %v2242 = vadd.f32 %v2240, %v2241
    %v2243 = vsel %vm121, %v2190, 0.0
    %v2244 = vadd.f32 %v2242, %v2243
    %v2245 = vsel %vm121, %v2198, 0.0
    %v2246 = vadd.f32 %v2244, %v2245
    %v2247 = vsel %vm121, %v2206, 0.0
    %v2248 = vadd.f32 %v2246, %v2247
    %v2249 = vsel %vm121, %v2214, 0.0
    %v2250 = vadd.f32 %v2248, %v2249
    %v2251 = vsel %vm121, %v2159, 0.0
    %v2252 = vsel %vm121, %v2167, 0.0
    %v2253 = vadd.f32 %v2251, %v2252
    %v2254 = vsel %vm121, %v2175, 0.0
    %v2255 = vadd.f32 %v2253, %v2254
    %v2256 = vsel %vm121, %v2183, 0.0
    %v2257 = vadd.f32 %v2255, %v2256
    %v2258 = vsel %vm121, %v2191, 0.0
    %v2259 = vadd.f32 %v2257, %v2258
    %v2260 = vsel %vm121, %v2199, 0.0
    %v2261 = vadd.f32 %v2259, %v2260
    %v2262 = vsel %vm121, %v2207, 0.0
    %v2263 = vadd.f32 %v2261, %v2262
    %v2264 = vsel %vm121, %v2215, 0.0
    %v2265 = vadd.f32 %v2263, %v2264
    %v2266 = vsel %vm121, %v2160, 0.0
    %v2267 = vsel %vm121, %v2168, 0.0
    %v2268 = vadd.f32 %v2266, %v2267
    %v2269 = vsel %vm121, %v2176, 0.0
    %v2270 = vadd.f32 %v2268, %v2269
    %v2271 = vsel %vm121, %v2184, 0.0
    %v2272 = vadd.f32 %v2270, %v2271
    %v2273 = vsel %vm121, %v2192, 0.0
    %v2274 = vadd.f32 %v2272, %v2273
    %v2275 = vsel %vm121, %v2200, 0.0
    %v2276 = vadd.f32 %v2274, %v2275
    %v2277 = vsel %vm121, %v2208, 0.0
    %v2278 = vadd.f32 %v2276, %v2277
    %v2279 = vsel %vm121, %v2216, 0.0
    %v2280 = vadd.f32 %v2278, %v2279
    %v2281 = vsel %vm121, %v2161, 0.0
    %v2282 = vsel %vm121, %v2169, 0.0
    %v2283 = vadd.f32 %v2281, %v2282
    %v2284 = vsel %vm121, %v2177, 0.0
    %v2285 = vadd.f32 %v2283, %v2284
    %v2286 = vsel %vm121, %v2185, 0.0
    %v2287 = vadd.f32 %v2285, %v2286
    %v2288 = vsel %vm121, %v2193, 0.0
    %v2289 = vadd.f32 %v2287, %v2288
    %v2290 = vsel %vm121, %v2201, 0.0
    %v2291 = vadd.f32 %v2289, %v2290
    %v2292 = vsel %vm121, %v2209, 0.0
    %v2293 = vadd.f32 %v2291, %v2292
    %v2294 = vsel %vm121, %v2217, 0.0
    %v2295 = vadd.f32 %v2293, %v2294
    %v2296 = vsel %vm121, %v2162, 0.0
    %v2297 = vsel %vm121, %v2170, 0.0
    %v2298 = vadd.f32 %v2296, %v2297
    %v2299 = vsel %vm121, %v2178, 0.0
    %v2300 = vadd.f32 %v2298, %v2299
    %v2301 = vsel %vm121, %v2186, 0.0
    %v2302 = vadd.f32 %v2300, %v2301
    %v2303 = vsel %vm121, %v2194, 0.0
    %v2304 = vadd.f32 %v2302, %v2303
    %v2305 = vsel %vm121, %v2202, 0.0
    %v2306 = vadd.f32 %v2304, %v2305
    %v2307 = vsel %vm121, %v2210, 0.0
    %v2308 = vadd.f32 %v2306, %v2307
    %v2309 = vsel %vm121, %v2218, 0.0
    %v2310 = vadd.f32 %v2308, %v2309
    %v2311 = vsel %vm121, %v2163, 0.0
    %v2312 = vsel %vm121, %v2171, 0.0
    %v2313 = vadd.f32 %v2311, %v2312
    %v2314 = vsel %vm121, %v2179, 0.0
    %v2315 = vadd.f32 %v2313, %v2314
    %v2316 = vsel %vm121, %v2187, 0.0
    %v2317 = vadd.f32 %v2315, %v2316
    %v2318 = vsel %vm121, %v2195, 0.0
    %v2319 = vadd.f32 %v2317, %v2318
    %v2320 = vsel %vm121, %v2203, 0.0
    %v2321 = vadd.f32 %v2319, %v2320
    %v2322 = vsel %vm121, %v2211, 0.0
    %v2323 = vadd.f32 %v2321, %v2322
    %v2324 = vsel %vm121, %v2219, 0.0
    %v2325 = vadd.f32 %v2323, %v2324
    %v2326 = vsel %vm121, %v2164, 0.0
    %v2327 = vsel %vm121, %v2172, 0.0
    %v2328 = vadd.f32 %v2326, %v2327
    %v2329 = vsel %vm121, %v2180, 0.0
    %v2330 = vadd.f32 %v2328, %v2329
    %v2331 = vsel %vm121, %v2188, 0.0
    %v2332 = vadd.f32 %v2330, %v2331
    %v2333 = vsel %vm121, %v2196, 0.0
    %v2334 = vadd.f32 %v2332, %v2333
    %v2335 = vsel %vm121, %v2204, 0.0
    %v2336 = vadd.f32 %v2334, %v2335
    %v2337 = vsel %vm121, %v2212, 0.0
    %v2338 = vadd.f32 %v2336, %v2337
    %v2339 = vsel %vm121, %v2220, 0.0
    %v2340 = vadd.f32 %v2338, %v2339
    %v2342 = vlaneseq
    %v2343 = vshrl.u32 %v2342, 7
    %v2344 = vsub.s32 0, %v2343
    %v2345 = vrot.slane %v112, %v2344
    %v2348 = vsel %vm121, %v2235, 0
    %v2351 = vsel %vm121, %v2250, 0
    %v2354 = vsel %vm121, %v2265, 0
    %v2357 = vsel %vm121, %v2280, 0
    %v2360 = vsel %vm121, %v2295, 0
    %v2363 = vsel %vm121, %v2310, 0
    %v2366 = vsel %vm121, %v2325, 0
    %v2369 = vsel %vm121, %v2340, 0
    %2371 = vmatprep.subr.mxu0 0.0
    %2372 = vmatpush1.msra.mxu0 0.0
    %2373 = vmatprep.subr.mxu0 0.0
    %2374 = vmatpush1.msra.mxu0 0.0
    %2375 = vmatprep.subr.mxu0 0.0
    %2376 = vmatpush1.msra.mxu0 0.0
    %2377 = vmatprep.subr.mxu0 0.0
    %2378 = vmatpush1.msra.mxu0 0.0
    %2379 = vmatprep.subr.mxu0 0.0
    %2380 = vmatpush1.msra.mxu0 0.0
    %2381 = vmatprep.subr.mxu0 0.0
    %2382 = vmatpush1.msra.mxu0 0.0
    %2383 = vmatprep.subr.mxu0 0.0
    %2384 = vmatpush1.msra.mxu0 0.0
    %2385 = vmatprep.subr.mxu0 0.0
    %2386 = vmatpush1.msra.mxu0 0.0
    %2387 = vmatprep.subr.mxu0 0.0
    %2388 = vmatpush1.msra.mxu0 %v111
    %2389 = vmatprep.subr.mxu0 0.0
    %2390 = vmatpush1.msra.mxu0 %v110
    %2391 = vmatprep.subr.mxu0 0.0
    %2392 = vmatpush1.msra.mxu0 %v109
    %2393 = vmatprep.subr.mxu0 0.0
    %2394 = vmatpush1.msra.mxu0 %v108
    %2395 = vmatprep.subr.mxu0 0.0
    %2396 = vmatpush1.msra.mxu0 %v107
    %2397 = vmatprep.subr.mxu0 0.0
    %2398 = vmatpush1.msra.mxu0 %v106
    %2399 = vmatprep.subr.mxu0 0.0
    %2400 = vmatpush1.msra.mxu0 %v105
    %2401 = vmatprep.subr.mxu0 0.0
    %2402 = vmatpush1.msra.mxu0 %v104
    %2403 = vmatprep.subr.mxu0 0.0
    %2404 = vmatpush2.msra.mxu0 0.0
    %2405 = vmatprep.subr.mxu0 0.0
    %2406 = vmatpush2.msra.mxu0 0.0
    %2407 = vmatprep.subr.mxu0 0.0
    %2408 = vmatpush2.msra.mxu0 0.0
    %2409 = vmatprep.subr.mxu0 0.0
    %2410 = vmatpush2.msra.mxu0 0.0
    %2411 = vmatprep.subr.mxu0 0.0
    %2412 = vmatpush2.msra.mxu0 0.0
    %2413 = vmatprep.subr.mxu0 0.0
    %2414 = vmatpush2.msra.mxu0 0.0
    %2415 = vmatprep.subr.mxu0 0.0
    %2416 = vmatpush2.msra.mxu0 0.0
    %2417 = vmatprep.subr.mxu0 0.0
    %2418 = vmatpush2.msra.mxu0 0.0
    %2419 = vmatprep.subr.mxu0 0.0
    %2420 = vmatpush2.msra.mxu0 0.0
    %2421 = vmatprep.subr.mxu0 0.0
    %2422 = vmatpush2.msra.mxu0 0.0
    %2423 = vmatprep.subr.mxu0 0.0
    %2424 = vmatpush2.msra.mxu0 0.0
    %2425 = vmatprep.subr.mxu0 0.0
    %2426 = vmatpush2.msra.mxu0 0.0
    %2427 = vmatprep.subr.mxu0 0.0
    %2428 = vmatpush2.msra.mxu0 0.0
    %2429 = vmatprep.subr.mxu0 0.0
    %2430 = vmatpush2.msra.mxu0 0.0
    %2431 = vmatprep.subr.mxu0 0.0
    %2432 = vmatpush2.msra.mxu0 0.0
    %2433 = vmatprep.subr.mxu0 0.0
    %2434 = vmatpush2.msra.mxu0 0.0
    %2435 = vmatprep.mubr.f32.mxu0 0.0
    %2436 = vmatmul.mubr.f32.gmra.mxu0 %v2348
    %v2437 = vpop.f32.mrf.mxu0
    %v2438 = vadd.f32 %v2345, %v2437
    %v2439 = vpop.f32.mrf.mxu0
    %2440 = vmatprep.mubr.f32.mxu0 0.0
    %2441 = vmatmul.mubr.f32.gmra.mxu0 %v2351
    %v2442 = vpop.f32.mrf.mxu0
    %v2443 = vadd.f32 %v2345, %v2442
    %v2444 = vpop.f32.mrf.mxu0
    %2445 = vmatprep.mubr.f32.mxu0 0.0
    %2446 = vmatmul.mubr.f32.gmra.mxu0 %v2354
    %v2447 = vpop.f32.mrf.mxu0
    %v2448 = vadd.f32 %v2345, %v2447
    %v2449 = vpop.f32.mrf.mxu0
    %2450 = vmatprep.mubr.f32.mxu0 0.0
    %2451 = vmatmul.mubr.f32.gmra.mxu0 %v2357
    %v2452 = vpop.f32.mrf.mxu0
    %v2453 = vadd.f32 %v2345, %v2452
    %v2454 = vpop.f32.mrf.mxu0
    %2455 = vmatprep.mubr.f32.mxu0 0.0
    %2456 = vmatmul.mubr.f32.gmra.mxu0 %v2360
    %v2457 = vpop.f32.mrf.mxu0
    %v2458 = vadd.f32 %v2345, %v2457
    %v2459 = vpop.f32.mrf.mxu0
    %2460 = vmatprep.mubr.f32.mxu0 0.0
    %2461 = vmatmul.mubr.f32.gmra.mxu0 %v2363
    %v2462 = vpop.f32.mrf.mxu0
    %v2463 = vadd.f32 %v2345, %v2462
    %v2464 = vpop.f32.mrf.mxu0
    %2465 = vmatprep.mubr.f32.mxu0 0.0
    %2466 = vmatmul.mubr.f32.gmra.mxu0 %v2366
    %v2467 = vpop.f32.mrf.mxu0
    %v2468 = vadd.f32 %v2345, %v2467
    %v2469 = vpop.f32.mrf.mxu0
    %2470 = vmatprep.mubr.f32.mxu0 0.0
    %2471 = vmatmul.mubr.f32.gmra.mxu0 %v2369
    %v2472 = vpop.f32.mrf.mxu0
    %v2473 = vadd.f32 %v2345, %v2472
    %v2474 = vpop.f32.mrf.mxu0
    %2475 = vdwg.mxu0
    %s2476 = scalar_lea.vmem %s2, 64
    %v2477 = vld [vmem:[%s2476] sm:$0xff]
    %v2478 = vld [vmem:[%s2476 + $0x8] sm:$0xff]
    %v2479 = vld [vmem:[%s2476 + $0x10] sm:$0xff]
    %v2480 = vld [vmem:[%s2476 + $0x18] sm:$0xff]
    %v2481 = vld [vmem:[%s2476 + $0x20] sm:$0xff]
    %v2482 = vld [vmem:[%s2476 + $0x28] sm:$0xff]
    %v2483 = vld [vmem:[%s2476 + $0x30] sm:$0xff]
    %v2484 = vld [vmem:[%s2476 + $0x38] sm:$0xff]
    %v2486 = vsel %vm121, %v2477, 0
    %v2489 = vsel %vm121, %v2478, 0
    %v2492 = vsel %vm121, %v2479, 0
    %v2495 = vsel %vm121, %v2480, 0
    %v2498 = vsel %vm121, %v2481, 0
    %v2501 = vsel %vm121, %v2482, 0
    %v2504 = vsel %vm121, %v2483, 0
    %v2507 = vsel %vm121, %v2484, 0
    %2509 = vmatprep.subr.mxu0 0.0
    %2510 = vmatpush1.xpose.msra.mxu0 0.0
    %2511 = vmatprep.subr.mxu0 0.0
    %2512 = vmatpush1.xpose.msra.mxu0 0.0
    %2513 = vmatprep.subr.mxu0 0.0
    %2514 = vmatpush1.xpose.msra.mxu0 0.0
    %2515 = vmatprep.subr.mxu0 0.0
    %2516 = vmatpush1.xpose.msra.mxu0 0.0
    %2517 = vmatprep.subr.mxu0 0.0
    %2518 = vmatpush1.xpose.msra.mxu0 0.0
    %2519 = vmatprep.subr.mxu0 0.0
    %2520 = vmatpush1.xpose.msra.mxu0 0.0
    %2521 = vmatprep.subr.mxu0 0.0
    %2522 = vmatpush1.xpose.msra.mxu0 0.0
    %2523 = vmatprep.subr.mxu0 0.0
    %2524 = vmatpush1.xpose.msra.mxu0 0.0
    %2525 = vmatprep.subr.mxu0 0.0
    %2526 = vmatpush1.xpose.msra.mxu0 %v2507
    %2527 = vmatprep.subr.mxu0 0.0
    %2528 = vmatpush1.xpose.msra.mxu0 %v2504
    %2529 = vmatprep.subr.mxu0 0.0
    %2530 = vmatpush1.xpose.msra.mxu0 %v2501
    %2531 = vmatprep.subr.mxu0 0.0
    %2532 = vmatpush1.xpose.msra.mxu0 %v2498
    %2533 = vmatprep.subr.mxu0 0.0
    %2534 = vmatpush1.xpose.msra.mxu0 %v2495
    %2535 = vmatprep.subr.mxu0 0.0
    %2536 = vmatpush1.xpose.msra.mxu0 %v2492
    %2537 = vmatprep.subr.mxu0 0.0
    %2538 = vmatpush1.xpose.msra.mxu0 %v2489
    %2539 = vmatprep.subr.mxu0 0.0
    %2540 = vmatpush1.xpose.msra.mxu0 %v2486
    %2541 = vmatprep.subr.mxu0 0.0
    %2542 = vmatpush2.xpose.msra.mxu0 0.0
    %2543 = vmatprep.subr.mxu0 0.0
    %2544 = vmatpush2.xpose.msra.mxu0 0.0
    %2545 = vmatprep.subr.mxu0 0.0
    %2546 = vmatpush2.xpose.msra.mxu0 0.0
    %2547 = vmatprep.subr.mxu0 0.0
    %2548 = vmatpush2.xpose.msra.mxu0 0.0
    %2549 = vmatprep.subr.mxu0 0.0
    %2550 = vmatpush2.xpose.msra.mxu0 0.0
    %2551 = vmatprep.subr.mxu0 0.0
    %2552 = vmatpush2.xpose.msra.mxu0 0.0
    %2553 = vmatprep.subr.mxu0 0.0
    %2554 = vmatpush2.xpose.msra.mxu0 0.0
    %2555 = vmatprep.subr.mxu0 0.0
    %2556 = vmatpush2.xpose.msra.mxu0 0.0
    %2557 = vmatprep.subr.mxu0 0.0
    %2558 = vmatpush2.xpose.msra.mxu0 0.0
    %2559 = vmatprep.subr.mxu0 0.0
    %2560 = vmatpush2.xpose.msra.mxu0 0.0
    %2561 = vmatprep.subr.mxu0 0.0
    %2562 = vmatpush2.xpose.msra.mxu0 0.0
    %2563 = vmatprep.subr.mxu0 0.0
    %2564 = vmatpush2.xpose.msra.mxu0 0.0
    %2565 = vmatprep.subr.mxu0 0.0
    %2566 = vmatpush2.xpose.msra.mxu0 0.0
    %2567 = vmatprep.subr.mxu0 0.0
    %2568 = vmatpush2.xpose.msra.mxu0 0.0
    %2569 = vmatprep.subr.mxu0 0.0
    %2570 = vmatpush2.xpose.msra.mxu0 0.0
    %2571 = vmatprep.subr.mxu0 0.0
    %2572 = vmatpush2.xpose.msra.mxu0 0.0
    %2573 = vmatprep.mubr.f32.mxu0 0.0
    %2574 = vmatmul.mubr.f32.gmra.mxu0 %v123
    %v2575 = vpop.f32.mrf.mxu0
    %v2576 = vadd.f32 0.0, %v2575
    %v2577 = vpop.f32.mrf.mxu0
    %2578 = vmatprep.mubr.f32.mxu0 0.0
    %2579 = vmatmul.mubr.f32.gmra.mxu0 %v126
    %v2580 = vpop.f32.mrf.mxu0
    %v2581 = vadd.f32 0.0, %v2580
    %v2582 = vpop.f32.mrf.mxu0
    %2583 = vmatprep.mubr.f32.mxu0 0.0
    %2584 = vmatmul.mubr.f32.gmra.mxu0 %v129
    %v2585 = vpop.f32.mrf.mxu0
    %v2586 = vadd.f32 0.0, %v2585
    %v2587 = vpop.f32.mrf.mxu0
    %2588 = vmatprep.mubr.f32.mxu0 0.0
    %2589 = vmatmul.mubr.f32.gmra.mxu0 %v132
    %v2590 = vpop.f32.mrf.mxu0
    %v2591 = vadd.f32 0.0, %v2590
    %v2592 = vpop.f32.mrf.mxu0
    %2593 = vmatprep.mubr.f32.mxu0 0.0
    %2594 = vmatmul.mubr.f32.gmra.mxu0 %v135
    %v2595 = vpop.f32.mrf.mxu0
    %v2596 = vadd.f32 0.0, %v2595
    %v2597 = vpop.f32.mrf.mxu0
    %2598 = vmatprep.mubr.f32.mxu0 0.0
    %2599 = vmatmul.mubr.f32.gmra.mxu0 %v138
    %v2600 = vpop.f32.mrf.mxu0
    %v2601 = vadd.f32 0.0, %v2600
    %v2602 = vpop.f32.mrf.mxu0
    %2603 = vmatprep.mubr.f32.mxu0 0.0
    %2604 = vmatmul.mubr.f32.gmra.mxu0 %v141
    %v2605 = vpop.f32.mrf.mxu0
    %v2606 = vadd.f32 0.0, %v2605
    %v2607 = vpop.f32.mrf.mxu0
    %2608 = vmatprep.mubr.f32.mxu0 0.0
    %2609 = vmatmul.mubr.f32.gmra.mxu0 %v144
    %v2610 = vpop.f32.mrf.mxu0
    %v2611 = vadd.f32 0.0, %v2610
    %v2612 = vpop.f32.mrf.mxu0
    %2613 = vmatprep.mubr.f32.mxu0 0.0
    %2614 = vmatmul.mubr.f32.gmra.mxu0 %v147
    %v2615 = vpop.f32.mrf.mxu0
    %v2616 = vadd.f32 0.0, %v2615
    %v2617 = vpop.f32.mrf.mxu0
    %2618 = vmatprep.mubr.f32.mxu0 0.0
    %2619 = vmatmul.mubr.f32.gmra.mxu0 %v150
    %v2620 = vpop.f32.mrf.mxu0
    %v2621 = vadd.f32 0.0, %v2620
    %v2622 = vpop.f32.mrf.mxu0
    %2623 = vmatprep.mubr.f32.mxu0 0.0
    %2624 = vmatmul.mubr.f32.gmra.mxu0 %v153
    %v2625 = vpop.f32.mrf.mxu0
    %v2626 = vadd.f32 0.0, %v2625
    %v2627 = vpop.f32.mrf.mxu0
    %2628 = vmatprep.mubr.f32.mxu0 0.0
    %2629 = vmatmul.mubr.f32.gmra.mxu0 %v156
    %v2630 = vpop.f32.mrf.mxu0
    %v2631 = vadd.f32 0.0, %v2630
    %v2632 = vpop.f32.mrf.mxu0
    %2633 = vmatprep.mubr.f32.mxu0 0.0
    %2634 = vmatmul.mubr.f32.gmra.mxu0 %v159
    %v2635 = vpop.f32.mrf.mxu0
    %v2636 = vadd.f32 0.0, %v2635
    %v2637 = vpop.f32.mrf.mxu0
    %2638 = vmatprep.mubr.f32.mxu0 0.0
    %2639 = vmatmul.mubr.f32.gmra.mxu0 %v162
    %v2640 = vpop.f32.mrf.mxu0
    %v2641 = vadd.f32 0.0, %v2640
    %v2642 = vpop.f32.mrf.mxu0
    %2643 = vmatprep.mubr.f32.mxu0 0.0
    %2644 = vmatmul.mubr.f32.gmra.mxu0 %v165
    %v2645 = vpop.f32.mrf.mxu0
    %v2646 = vadd.f32 0.0, %v2645
    %v2647 = vpop.f32.mrf.mxu0
    %2648 = vmatprep.mubr.f32.mxu0 0.0
    %2649 = vmatmul.mubr.f32.gmra.mxu0 %v168
    %v2650 = vpop.f32.mrf.mxu0
    %v2651 = vadd.f32 0.0, %v2650
    %v2652 = vpop.f32.mrf.mxu0
    %2653 = vmatprep.mubr.f32.mxu0 0.0
    %2654 = vmatmul.mubr.f32.gmra.mxu0 %v171
    %v2655 = vpop.f32.mrf.mxu0
    %v2656 = vadd.f32 0.0, %v2655
    %v2657 = vpop.f32.mrf.mxu0
    %2658 = vmatprep.mubr.f32.mxu0 0.0
    %2659 = vmatmul.mubr.f32.gmra.mxu0 %v174
    %v2660 = vpop.f32.mrf.mxu0
    %v2661 = vadd.f32 0.0, %v2660
    %v2662 = vpop.f32.mrf.mxu0
    %2663 = vmatprep.mubr.f32.mxu0 0.0
    %2664 = vmatmul.mubr.f32.gmra.mxu0 %v177
    %v2665 = vpop.f32.mrf.mxu0
    %v2666 = vadd.f32 0.0, %v2665
    %v2667 = vpop.f32.mrf.mxu0
    %2668 = vmatprep.mubr.f32.mxu0 0.0
    %2669 = vmatmul.mubr.f32.gmra.mxu0 %v180
    %v2670 = vpop.f32.mrf.mxu0
    %v2671 = vadd.f32 0.0, %v2670
    %v2672 = vpop.f32.mrf.mxu0
    %2673 = vmatprep.mubr.f32.mxu0 0.0
    %2674 = vmatmul.mubr.f32.gmra.mxu0 %v183
    %v2675 = vpop.f32.mrf.mxu0
    %v2676 = vadd.f32 0.0, %v2675
    %v2677 = vpop.f32.mrf.mxu0
    %2678 = vmatprep.mubr.f32.mxu0 0.0
    %2679 = vmatmul.mubr.f32.gmra.mxu0 %v186
    %v2680 = vpop.f32.mrf.mxu0
    %v2681 = vadd.f32 0.0, %v2680
    %v2682 = vpop.f32.mrf.mxu0
    %2683 = vmatprep.mubr.f32.mxu0 0.0
    %2684 = vmatmul.mubr.f32.gmra.mxu0 %v189
    %v2685 = vpop.f32.mrf.mxu0
    %v2686 = vadd.f32 0.0, %v2685
    %v2687 = vpop.f32.mrf.mxu0
    %2688 = vmatprep.mubr.f32.mxu0 0.0
    %2689 = vmatmul.mubr.f32.gmra.mxu0 %v192
    %v2690 = vpop.f32.mrf.mxu0
    %v2691 = vadd.f32 0.0, %v2690
    %v2692 = vpop.f32.mrf.mxu0
    %2693 = vmatprep.mubr.f32.mxu0 0.0
    %2694 = vmatmul.mubr.f32.gmra.mxu0 %v195
    %v2695 = vpop.f32.mrf.mxu0
    %v2696 = vadd.f32 0.0, %v2695
    %v2697 = vpop.f32.mrf.mxu0
    %2698 = vmatprep.mubr.f32.mxu0 0.0
    %2699 = vmatmul.mubr.f32.gmra.mxu0 %v198
    %v2700 = vpop.f32.mrf.mxu0
    %v2701 = vadd.f32 0.0, %v2700
    %v2702 = vpop.f32.mrf.mxu0
    %2703 = vmatprep.mubr.f32.mxu0 0.0
    %2704 = vmatmul.mubr.f32.gmra.mxu0 %v201
    %v2705 = vpop.f32.mrf.mxu0
    %v2706 = vadd.f32 0.0, %v2705
    %v2707 = vpop.f32.mrf.mxu0
    %2708 = vmatprep.mubr.f32.mxu0 0.0
    %2709 = vmatmul.mubr.f32.gmra.mxu0 %v204
    %v2710 = vpop.f32.mrf.mxu0
    %v2711 = vadd.f32 0.0, %v2710
    %v2712 = vpop.f32.mrf.mxu0
    %2713 = vmatprep.mubr.f32.mxu0 0.0
    %2714 = vmatmul.mubr.f32.gmra.mxu0 %v207
    %v2715 = vpop.f32.mrf.mxu0
    %v2716 = vadd.f32 0.0, %v2715
    %v2717 = vpop.f32.mrf.mxu0
    %2718 = vmatprep.mubr.f32.mxu0 0.0
    %2719 = vmatmul.mubr.f32.gmra.mxu0 %v210
    %v2720 = vpop.f32.mrf.mxu0
    %v2721 = vadd.f32 0.0, %v2720
    %v2722 = vpop.f32.mrf.mxu0
    %2723 = vmatprep.mubr.f32.mxu0 0.0
    %2724 = vmatmul.mubr.f32.gmra.mxu0 %v213
    %v2725 = vpop.f32.mrf.mxu0
    %v2726 = vadd.f32 0.0, %v2725
    %v2727 = vpop.f32.mrf.mxu0
    %2728 = vmatprep.mubr.f32.mxu0 0.0
    %2729 = vmatmul.mubr.f32.gmra.mxu0 %v216
    %v2730 = vpop.f32.mrf.mxu0
    %v2731 = vadd.f32 0.0, %v2730
    %v2732 = vpop.f32.mrf.mxu0
    %2733 = vmatprep.mubr.f32.mxu0 0.0
    %2734 = vmatmul.mubr.f32.gmra.mxu0 %v219
    %v2735 = vpop.f32.mrf.mxu0
    %v2736 = vadd.f32 0.0, %v2735
    %v2737 = vpop.f32.mrf.mxu0
    %2738 = vmatprep.mubr.f32.mxu0 0.0
    %2739 = vmatmul.mubr.f32.gmra.mxu0 %v222
    %v2740 = vpop.f32.mrf.mxu0
    %v2741 = vadd.f32 0.0, %v2740
    %v2742 = vpop.f32.mrf.mxu0
    %2743 = vmatprep.mubr.f32.mxu0 0.0
    %2744 = vmatmul.mubr.f32.gmra.mxu0 %v225
    %v2745 = vpop.f32.mrf.mxu0
    %v2746 = vadd.f32 0.0, %v2745
    %v2747 = vpop.f32.mrf.mxu0
    %2748 = vmatprep.mubr.f32.mxu0 0.0
    %2749 = vmatmul.mubr.f32.gmra.mxu0 %v228
    %v2750 = vpop.f32.mrf.mxu0
    %v2751 = vadd.f32 0.0, %v2750
    %v2752 = vpop.f32.mrf.mxu0
    %2753 = vmatprep.mubr.f32.mxu0 0.0
    %2754 = vmatmul.mubr.f32.gmra.mxu0 %v231
    %v2755 = vpop.f32.mrf.mxu0
    %v2756 = vadd.f32 0.0, %v2755
    %v2757 = vpop.f32.mrf.mxu0
    %2758 = vmatprep.mubr.f32.mxu0 0.0
    %2759 = vmatmul.mubr.f32.gmra.mxu0 %v234
    %v2760 = vpop.f32.mrf.mxu0
    %v2761 = vadd.f32 0.0, %v2760
    %v2762 = vpop.f32.mrf.mxu0
    %2763 = vmatprep.mubr.f32.mxu0 0.0
    %2764 = vmatmul.mubr.f32.gmra.mxu0 %v237
    %v2765 = vpop.f32.mrf.mxu0
    %v2766 = vadd.f32 0.0, %v2765
    %v2767 = vpop.f32.mrf.mxu0
    %2768 = vmatprep.mubr.f32.mxu0 0.0
    %2769 = vmatmul.mubr.f32.gmra.mxu0 %v240
    %v2770 = vpop.f32.mrf.mxu0
    %v2771 = vadd.f32 0.0, %v2770
    %v2772 = vpop.f32.mrf.mxu0
    %2773 = vmatprep.mubr.f32.mxu0 0.0
    %2774 = vmatmul.mubr.f32.gmra.mxu0 %v243
    %v2775 = vpop.f32.mrf.mxu0
    %v2776 = vadd.f32 0.0, %v2775
    %v2777 = vpop.f32.mrf.mxu0
    %2778 = vmatprep.mubr.f32.mxu0 0.0
    %2779 = vmatmul.mubr.f32.gmra.mxu0 %v246
    %v2780 = vpop.f32.mrf.mxu0
    %v2781 = vadd.f32 0.0, %v2780
    %v2782 = vpop.f32.mrf.mxu0
    %2783 = vmatprep.mubr.f32.mxu0 0.0
    %2784 = vmatmul.mubr.f32.gmra.mxu0 %v249
    %v2785 = vpop.f32.mrf.mxu0
    %v2786 = vadd.f32 0.0, %v2785
    %v2787 = vpop.f32.mrf.mxu0
    %2788 = vmatprep.mubr.f32.mxu0 0.0
    %2789 = vmatmul.mubr.f32.gmra.mxu0 %v252
    %v2790 = vpop.f32.mrf.mxu0
    %v2791 = vadd.f32 0.0, %v2790
    %v2792 = vpop.f32.mrf.mxu0
    %2793 = vmatprep.mubr.f32.mxu0 0.0
    %2794 = vmatmul.mubr.f32.gmra.mxu0 %v255
    %v2795 = vpop.f32.mrf.mxu0
    %v2796 = vadd.f32 0.0, %v2795
    %v2797 = vpop.f32.mrf.mxu0
    %2798 = vmatprep.mubr.f32.mxu0 0.0
    %2799 = vmatmul.mubr.f32.gmra.mxu0 %v258
    %v2800 = vpop.f32.mrf.mxu0
    %v2801 = vadd.f32 0.0, %v2800
    %v2802 = vpop.f32.mrf.mxu0
    %2803 = vmatprep.mubr.f32.mxu0 0.0
    %2804 = vmatmul.mubr.f32.gmra.mxu0 %v261
    %v2805 = vpop.f32.mrf.mxu0
    %v2806 = vadd.f32 0.0, %v2805
    %v2807 = vpop.f32.mrf.mxu0
    %2808 = vmatprep.mubr.f32.mxu0 0.0
    %2809 = vmatmul.mubr.f32.gmra.mxu0 %v264
    %v2810 = vpop.f32.mrf.mxu0
    %v2811 = vadd.f32 0.0, %v2810
    %v2812 = vpop.f32.mrf.mxu0
    %2813 = vmatprep.mubr.f32.mxu0 0.0
    %2814 = vmatmul.mubr.f32.gmra.mxu0 %v267
    %v2815 = vpop.f32.mrf.mxu0
    %v2816 = vadd.f32 0.0, %v2815
    %v2817 = vpop.f32.mrf.mxu0
    %2818 = vmatprep.mubr.f32.mxu0 0.0
    %2819 = vmatmul.mubr.f32.gmra.mxu0 %v270
    %v2820 = vpop.f32.mrf.mxu0
    %v2821 = vadd.f32 0.0, %v2820
    %v2822 = vpop.f32.mrf.mxu0
    %2823 = vmatprep.mubr.f32.mxu0 0.0
    %2824 = vmatmul.mubr.f32.gmra.mxu0 %v273
    %v2825 = vpop.f32.mrf.mxu0
    %v2826 = vadd.f32 0.0, %v2825
    %v2827 = vpop.f32.mrf.mxu0
    %2828 = vmatprep.mubr.f32.mxu0 0.0
    %2829 = vmatmul.mubr.f32.gmra.mxu0 %v276
    %v2830 = vpop.f32.mrf.mxu0
    %v2831 = vadd.f32 0.0, %v2830
    %v2832 = vpop.f32.mrf.mxu0
    %2833 = vmatprep.mubr.f32.mxu0 0.0
    %2834 = vmatmul.mubr.f32.gmra.mxu0 %v279
    %v2835 = vpop.f32.mrf.mxu0
    %v2836 = vadd.f32 0.0, %v2835
    %v2837 = vpop.f32.mrf.mxu0
    %2838 = vmatprep.mubr.f32.mxu0 0.0
    %2839 = vmatmul.mubr.f32.gmra.mxu0 %v282
    %v2840 = vpop.f32.mrf.mxu0
    %v2841 = vadd.f32 0.0, %v2840
    %v2842 = vpop.f32.mrf.mxu0
    %2843 = vmatprep.mubr.f32.mxu0 0.0
    %2844 = vmatmul.mubr.f32.gmra.mxu0 %v285
    %v2845 = vpop.f32.mrf.mxu0
    %v2846 = vadd.f32 0.0, %v2845
    %v2847 = vpop.f32.mrf.mxu0
    %2848 = vmatprep.mubr.f32.mxu0 0.0
    %2849 = vmatmul.mubr.f32.gmra.mxu0 %v288
    %v2850 = vpop.f32.mrf.mxu0
    %v2851 = vadd.f32 0.0, %v2850
    %v2852 = vpop.f32.mrf.mxu0
    %2853 = vmatprep.mubr.f32.mxu0 0.0
    %2854 = vmatmul.mubr.f32.gmra.mxu0 %v291
    %v2855 = vpop.f32.mrf.mxu0
    %v2856 = vadd.f32 0.0, %v2855
    %v2857 = vpop.f32.mrf.mxu0
    %2858 = vmatprep.mubr.f32.mxu0 0.0
    %2859 = vmatmul.mubr.f32.gmra.mxu0 %v294
    %v2860 = vpop.f32.mrf.mxu0
    %v2861 = vadd.f32 0.0, %v2860
    %v2862 = vpop.f32.mrf.mxu0
    %2863 = vmatprep.mubr.f32.mxu0 0.0
    %2864 = vmatmul.mubr.f32.gmra.mxu0 %v297
    %v2865 = vpop.f32.mrf.mxu0
    %v2866 = vadd.f32 0.0, %v2865
    %v2867 = vpop.f32.mrf.mxu0
    %2868 = vmatprep.mubr.f32.mxu0 0.0
    %2869 = vmatmul.mubr.f32.gmra.mxu0 %v300
    %v2870 = vpop.f32.mrf.mxu0
    %v2871 = vadd.f32 0.0, %v2870
    %v2872 = vpop.f32.mrf.mxu0
    %2873 = vmatprep.mubr.f32.mxu0 0.0
    %2874 = vmatmul.mubr.f32.gmra.mxu0 %v303
    %v2875 = vpop.f32.mrf.mxu0
    %v2876 = vadd.f32 0.0, %v2875
    %v2877 = vpop.f32.mrf.mxu0
    %2878 = vmatprep.mubr.f32.mxu0 0.0
    %2879 = vmatmul.mubr.f32.gmra.mxu0 %v306
    %v2880 = vpop.f32.mrf.mxu0
    %v2881 = vadd.f32 0.0, %v2880
    %v2882 = vpop.f32.mrf.mxu0
    %2883 = vmatprep.mubr.f32.mxu0 0.0
    %2884 = vmatmul.mubr.f32.gmra.mxu0 %v309
    %v2885 = vpop.f32.mrf.mxu0
    %v2886 = vadd.f32 0.0, %v2885
    %v2887 = vpop.f32.mrf.mxu0
    %2888 = vmatprep.mubr.f32.mxu0 0.0
    %2889 = vmatmul.mubr.f32.gmra.mxu0 %v312
    %v2890 = vpop.f32.mrf.mxu0
    %v2891 = vadd.f32 0.0, %v2890
    %v2892 = vpop.f32.mrf.mxu0
    %2893 = vdwg.mxu0
    %v2894 = vsel %vm121, %v2576, -inf
    %2895 = vmax.xlane.f32.xlu0 %v2894
    %v2896 = vpop.xlane.xlu0 %2895
    %v2897 = vsel %vm121, %v2581, -inf
    %2898 = vmax.xlane.f32.xlu0 %v2897
    %v2899 = vpop.xlane.xlu0 %2898
    %v2900 = vsel %vm121, %v2586, -inf
    %2901 = vmax.xlane.f32.xlu0 %v2900
    %v2902 = vpop.xlane.xlu0 %2901
    %v2903 = vsel %vm121, %v2591, -inf
    %2904 = vmax.xlane.f32.xlu0 %v2903
    %v2905 = vpop.xlane.xlu0 %2904
    %v2906 = vsel %vm121, %v2596, -inf
    %2907 = vmax.xlane.f32.xlu0 %v2906
    %v2908 = vpop.xlane.xlu0 %2907
    %v2909 = vsel %vm121, %v2601, -inf
    %2910 = vmax.xlane.f32.xlu0 %v2909
    %v2911 = vpop.xlane.xlu0 %2910
    %v2912 = vsel %vm121, %v2606, -inf
    %2913 = vmax.xlane.f32.xlu0 %v2912
    %v2914 = vpop.xlane.xlu0 %2913
    %v2915 = vsel %vm121, %v2611, -inf
    %2916 = vmax.xlane.f32.xlu0 %v2915
    %v2917 = vpop.xlane.xlu0 %2916
    %v2918 = vsel %vm121, %v2616, -inf
    %2919 = vmax.xlane.f32.xlu0 %v2918
    %v2920 = vpop.xlane.xlu0 %2919
    %v2921 = vsel %vm121, %v2621, -inf
    %2922 = vmax.xlane.f32.xlu0 %v2921
    %v2923 = vpop.xlane.xlu0 %2922
    %v2924 = vsel %vm121, %v2626, -inf
    %2925 = vmax.xlane.f32.xlu0 %v2924
    %v2926 = vpop.xlane.xlu0 %2925
    %v2927 = vsel %vm121, %v2631, -inf
    %2928 = vmax.xlane.f32.xlu0 %v2927
    %v2929 = vpop.xlane.xlu0 %2928
    %v2930 = vsel %vm121, %v2636, -inf
    %2931 = vmax.xlane.f32.xlu0 %v2930
    %v2932 = vpop.xlane.xlu0 %2931
    %v2933 = vsel %vm121, %v2641, -inf
    %2934 = vmax.xlane.f32.xlu0 %v2933
    %v2935 = vpop.xlane.xlu0 %2934
    %v2936 = vsel %vm121, %v2646, -inf
    %2937 = vmax.xlane.f32.xlu0 %v2936
    %v2938 = vpop.xlane.xlu0 %2937
    %v2939 = vsel %vm121, %v2651, -inf
    %2940 = vmax.xlane.f32.xlu0 %v2939
    %v2941 = vpop.xlane.xlu0 %2940
    %v2942 = vsel %vm121, %v2656, -inf
    %2943 = vmax.xlane.f32.xlu0 %v2942
    %v2944 = vpop.xlane.xlu0 %2943
    %v2945 = vsel %vm121, %v2661, -inf
    %2946 = vmax.xlane.f32.xlu0 %v2945
    %v2947 = vpop.xlane.xlu0 %2946
    %v2948 = vsel %vm121, %v2666, -inf
    %2949 = vmax.xlane.f32.xlu0 %v2948
    %v2950 = vpop.xlane.xlu0 %2949
    %v2951 = vsel %vm121, %v2671, -inf
    %2952 = vmax.xlane.f32.xlu0 %v2951
    %v2953 = vpop.xlane.xlu0 %2952
    %v2954 = vsel %vm121, %v2676, -inf
    %2955 = vmax.xlane.f32.xlu0 %v2954
    %v2956 = vpop.xlane.xlu0 %2955
    %v2957 = vsel %vm121, %v2681, -inf
    %2958 = vmax.xlane.f32.xlu0 %v2957
    %v2959 = vpop.xlane.xlu0 %2958
    %v2960 = vsel %vm121, %v2686, -inf
    %2961 = vmax.xlane.f32.xlu0 %v2960
    %v2962 = vpop.xlane.xlu0 %2961
    %v2963 = vsel %vm121, %v2691, -inf
    %2964 = vmax.xlane.f32.xlu0 %v2963
    %v2965 = vpop.xlane.xlu0 %2964
    %v2966 = vsel %vm121, %v2696, -inf
    %2967 = vmax.xlane.f32.xlu0 %v2966
    %v2968 = vpop.xlane.xlu0 %2967
    %v2969 = vsel %vm121, %v2701, -inf
    %2970 = vmax.xlane.f32.xlu0 %v2969
    %v2971 = vpop.xlane.xlu0 %2970
    %v2972 = vsel %vm121, %v2706, -inf
    %2973 = vmax.xlane.f32.xlu0 %v2972
    %v2974 = vpop.xlane.xlu0 %2973
    %v2975 = vsel %vm121, %v2711, -inf
    %2976 = vmax.xlane.f32.xlu0 %v2975
    %v2977 = vpop.xlane.xlu0 %2976
    %v2978 = vsel %vm121, %v2716, -inf
    %2979 = vmax.xlane.f32.xlu0 %v2978
    %v2980 = vpop.xlane.xlu0 %2979
    %v2981 = vsel %vm121, %v2721, -inf
    %2982 = vmax.xlane.f32.xlu0 %v2981
    %v2983 = vpop.xlane.xlu0 %2982
    %v2984 = vsel %vm121, %v2726, -inf
    %2985 = vmax.xlane.f32.xlu0 %v2984
    %v2986 = vpop.xlane.xlu0 %2985
    %v2987 = vsel %vm121, %v2731, -inf
    %2988 = vmax.xlane.f32.xlu0 %v2987
    %v2989 = vpop.xlane.xlu0 %2988
    %v2990 = vsel %vm121, %v2736, -inf
    %2991 = vmax.xlane.f32.xlu0 %v2990
    %v2992 = vpop.xlane.xlu0 %2991
    %v2993 = vsel %vm121, %v2741, -inf
    %2994 = vmax.xlane.f32.xlu0 %v2993
    %v2995 = vpop.xlane.xlu0 %2994
    %v2996 = vsel %vm121, %v2746, -inf
    %2997 = vmax.xlane.f32.xlu0 %v2996
    %v2998 = vpop.xlane.xlu0 %2997
    %v2999 = vsel %vm121, %v2751, -inf
    %3000 = vmax.xlane.f32.xlu0 %v2999
    %v3001 = vpop.xlane.xlu0 %3000
    %v3002 = vsel %vm121, %v2756, -inf
    %3003 = vmax.xlane.f32.xlu0 %v3002
    %v3004 = vpop.xlane.xlu0 %3003
    %v3005 = vsel %vm121, %v2761, -inf
    %3006 = vmax.xlane.f32.xlu0 %v3005
    %v3007 = vpop.xlane.xlu0 %3006
    %v3008 = vsel %vm121, %v2766, -inf
    %3009 = vmax.xlane.f32.xlu0 %v3008
    %v3010 = vpop.xlane.xlu0 %3009
    %v3011 = vsel %vm121, %v2771, -inf
    %3012 = vmax.xlane.f32.xlu0 %v3011
    %v3013 = vpop.xlane.xlu0 %3012
    %v3014 = vsel %vm121, %v2776, -inf
    %3015 = vmax.xlane.f32.xlu0 %v3014
    %v3016 = vpop.xlane.xlu0 %3015
    %v3017 = vsel %vm121, %v2781, -inf
    %3018 = vmax.xlane.f32.xlu0 %v3017
    %v3019 = vpop.xlane.xlu0 %3018
    %v3020 = vsel %vm121, %v2786, -inf
    %3021 = vmax.xlane.f32.xlu0 %v3020
    %v3022 = vpop.xlane.xlu0 %3021
    %v3023 = vsel %vm121, %v2791, -inf
    %3024 = vmax.xlane.f32.xlu0 %v3023
    %v3025 = vpop.xlane.xlu0 %3024
    %v3026 = vsel %vm121, %v2796, -inf
    %3027 = vmax.xlane.f32.xlu0 %v3026
    %v3028 = vpop.xlane.xlu0 %3027
    %v3029 = vsel %vm121, %v2801, -inf
    %3030 = vmax.xlane.f32.xlu0 %v3029
    %v3031 = vpop.xlane.xlu0 %3030
    %v3032 = vsel %vm121, %v2806, -inf
    %3033 = vmax.xlane.f32.xlu0 %v3032
    %v3034 = vpop.xlane.xlu0 %3033
    %v3035 = vsel %vm121, %v2811, -inf
    %3036 = vmax.xlane.f32.xlu0 %v3035
    %v3037 = vpop.xlane.xlu0 %3036
    %v3038 = vsel %vm121, %v2816, -inf
    %3039 = vmax.xlane.f32.xlu0 %v3038
    %v3040 = vpop.xlane.xlu0 %3039
    %v3041 = vsel %vm121, %v2821, -inf
    %3042 = vmax.xlane.f32.xlu0 %v3041
    %v3043 = vpop.xlane.xlu0 %3042
    %v3044 = vsel %vm121, %v2826, -inf
    %3045 = vmax.xlane.f32.xlu0 %v3044
    %v3046 = vpop.xlane.xlu0 %3045
    %v3047 = vsel %vm121, %v2831, -inf
    %3048 = vmax.xlane.f32.xlu0 %v3047
    %v3049 = vpop.xlane.xlu0 %3048
    %v3050 = vsel %vm121, %v2836, -inf
    %3051 = vmax.xlane.f32.xlu0 %v3050
    %v3052 = vpop.xlane.xlu0 %3051
    %v3053 = vsel %vm121, %v2841, -inf
    %3054 = vmax.xlane.f32.xlu0 %v3053
    %v3055 = vpop.xlane.xlu0 %3054
    %v3056 = vsel %vm121, %v2846, -inf
    %3057 = vmax.xlane.f32.xlu0 %v3056
    %v3058 = vpop.xlane.xlu0 %3057
    %v3059 = vsel %vm121, %v2851, -inf
    %3060 = vmax.xlane.f32.xlu0 %v3059
    %v3061 = vpop.xlane.xlu0 %3060
    %v3062 = vsel %vm121, %v2856, -inf
    %3063 = vmax.xlane.f32.xlu0 %v3062
    %v3064 = vpop.xlane.xlu0 %3063
    %v3065 = vsel %vm121, %v2861, -inf
    %3066 = vmax.xlane.f32.xlu0 %v3065
    %v3067 = vpop.xlane.xlu0 %3066
    %v3068 = vsel %vm121, %v2866, -inf
    %3069 = vmax.xlane.f32.xlu0 %v3068
    %v3070 = vpop.xlane.xlu0 %3069
    %v3071 = vsel %vm121, %v2871, -inf
    %3072 = vmax.xlane.f32.xlu0 %v3071
    %v3073 = vpop.xlane.xlu0 %3072
    %v3074 = vsel %vm121, %v2876, -inf
    %3075 = vmax.xlane.f32.xlu0 %v3074
    %v3076 = vpop.xlane.xlu0 %3075
    %v3077 = vsel %vm121, %v2881, -inf
    %3078 = vmax.xlane.f32.xlu0 %v3077
    %v3079 = vpop.xlane.xlu0 %3078
    %v3080 = vsel %vm121, %v2886, -inf
    %3081 = vmax.xlane.f32.xlu0 %v3080
    %v3082 = vpop.xlane.xlu0 %3081
    %v3083 = vsel %vm121, %v2891, -inf
    %3084 = vmax.xlane.f32.xlu0 %v3083
    %v3085 = vpop.xlane.xlu0 %3084
    %v3086 = vsub.f32 %v2576, %v2896
    %v3087 = vsub.f32 %v2581, %v2899
    %v3088 = vsub.f32 %v2586, %v2902
    %v3089 = vsub.f32 %v2591, %v2905
    %v3090 = vsub.f32 %v2596, %v2908
    %v3091 = vsub.f32 %v2601, %v2911
    %v3092 = vsub.f32 %v2606, %v2914
    %v3093 = vsub.f32 %v2611, %v2917
    %v3094 = vsub.f32 %v2616, %v2920
    %v3095 = vsub.f32 %v2621, %v2923
    %v3096 = vsub.f32 %v2626, %v2926
    %v3097 = vsub.f32 %v2631, %v2929
    %v3098 = vsub.f32 %v2636, %v2932
    %v3099 = vsub.f32 %v2641, %v2935
    %v3100 = vsub.f32 %v2646, %v2938
    %v3101 = vsub.f32 %v2651, %v2941
    %v3102 = vsub.f32 %v2656, %v2944
    %v3103 = vsub.f32 %v2661, %v2947
    %v3104 = vsub.f32 %v2666, %v2950
    %v3105 = vsub.f32 %v2671, %v2953
    %v3106 = vsub.f32 %v2676, %v2956
    %v3107 = vsub.f32 %v2681, %v2959
    %v3108 = vsub.f32 %v2686, %v2962
    %v3109 = vsub.f32 %v2691, %v2965
    %v3110 = vsub.f32 %v2696, %v2968
    %v3111 = vsub.f32 %v2701, %v2971
    %v3112 = vsub.f32 %v2706, %v2974
    %v3113 = vsub.f32 %v2711, %v2977
    %v3114 = vsub.f32 %v2716, %v2980
    %v3115 = vsub.f32 %v2721, %v2983
    %v3116 = vsub.f32 %v2726, %v2986
    %v3117 = vsub.f32 %v2731, %v2989
    %v3118 = vsub.f32 %v2736, %v2992
    %v3119 = vsub.f32 %v2741, %v2995
    %v3120 = vsub.f32 %v2746, %v2998
    %v3121 = vsub.f32 %v2751, %v3001
    %v3122 = vsub.f32 %v2756, %v3004
    %v3123 = vsub.f32 %v2761, %v3007
    %v3124 = vsub.f32 %v2766, %v3010
    %v3125 = vsub.f32 %v2771, %v3013
    %v3126 = vsub.f32 %v2776, %v3016
    %v3127 = vsub.f32 %v2781, %v3019
    %v3128 = vsub.f32 %v2786, %v3022
    %v3129 = vsub.f32 %v2791, %v3025
    %v3130 = vsub.f32 %v2796, %v3028
    %v3131 = vsub.f32 %v2801, %v3031
    %v3132 = vsub.f32 %v2806, %v3034
    %v3133 = vsub.f32 %v2811, %v3037
    %v3134 = vsub.f32 %v2816, %v3040
    %v3135 = vsub.f32 %v2821, %v3043
    %v3136 = vsub.f32 %v2826, %v3046
    %v3137 = vsub.f32 %v2831, %v3049
    %v3138 = vsub.f32 %v2836, %v3052
    %v3139 = vsub.f32 %v2841, %v3055
    %v3140 = vsub.f32 %v2846, %v3058
    %v3141 = vsub.f32 %v2851, %v3061
    %v3142 = vsub.f32 %v2856, %v3064
    %v3143 = vsub.f32 %v2861, %v3067
    %v3144 = vsub.f32 %v2866, %v3070
    %v3145 = vsub.f32 %v2871, %v3073
    %v3146 = vsub.f32 %v2876, %v3076
    %v3147 = vsub.f32 %v2881, %v3079
    %v3148 = vsub.f32 %v2886, %v3082
    %v3149 = vsub.f32 %v2891, %v3085
    %v3150 = vmul.f32 %v3086, 1.442695
    %v3151 = vpow.pop %v3150
    %v3152 = vmul.f32 %v3087, 1.442695
    %v3153 = vpow.pop %v3152
    %v3154 = vmul.f32 %v3088, 1.442695
    %v3155 = vpow.pop %v3154
    %v3156 = vmul.f32 %v3089, 1.442695
    %v3157 = vpow.pop %v3156
    %v3158 = vmul.f32 %v3090, 1.442695
    %v3159 = vpow.pop %v3158
    %v3160 = vmul.f32 %v3091, 1.442695
    %v3161 = vpow.pop %v3160
    %v3162 = vmul.f32 %v3092, 1.442695
    %v3163 = vpow.pop %v3162
    %v3164 = vmul.f32 %v3093, 1.442695
    %v3165 = vpow.pop %v3164
    %v3166 = vmul.f32 %v3094, 1.442695
    %v3167 = vpow.pop %v3166
    %v3168 = vmul.f32 %v3095, 1.442695
    %v3169 = vpow.pop %v3168
    %v3170 = vmul.f32 %v3096, 1.442695
    %v3171 = vpow.pop %v3170
    %v3172 = vmul.f32 %v3097, 1.442695
    %v3173 = vpow.pop %v3172
    %v3174 = vmul.f32 %v3098, 1.442695
    %v3175 = vpow.pop %v3174
    %v3176 = vmul.f32 %v3099, 1.442695
    %v3177 = vpow.pop %v3176
    %v3178 = vmul.f32 %v3100, 1.442695
    %v3179 = vpow.pop %v3178
    %v3180 = vmul.f32 %v3101, 1.442695
    %v3181 = vpow.pop %v3180
    %v3182 = vmul.f32 %v3102, 1.442695
    %v3183 = vpow.pop %v3182
    %v3184 = vmul.f32 %v3103, 1.442695
    %v3185 = vpow.pop %v3184
    %v3186 = vmul.f32 %v3104, 1.442695
    %v3187 = vpow.pop %v3186
    %v3188 = vmul.f32 %v3105, 1.442695
    %v3189 = vpow.pop %v3188
    %v3190 = vmul.f32 %v3106, 1.442695
    %v3191 = vpow.pop %v3190
    %v3192 = vmul.f32 %v3107, 1.442695
    %v3193 = vpow.pop %v3192
    %v3194 = vmul.f32 %v3108, 1.442695
    %v3195 = vpow.pop %v3194
    %v3196 = vmul.f32 %v3109, 1.442695
    %v3197 = vpow.pop %v3196
    %v3198 = vmul.f32 %v3110, 1.442695
    %v3199 = vpow.pop %v3198
    %v3200 = vmul.f32 %v3111, 1.442695
    %v3201 = vpow.pop %v3200
    %v3202 = vmul.f32 %v3112, 1.442695
    %v3203 = vpow.pop %v3202
    %v3204 = vmul.f32 %v3113, 1.442695
    %v3205 = vpow.pop %v3204
    %v3206 = vmul.f32 %v3114, 1.442695
    %v3207 = vpow.pop %v3206
    %v3208 = vmul.f32 %v3115, 1.442695
    %v3209 = vpow.pop %v3208
    %v3210 = vmul.f32 %v3116, 1.442695
    %v3211 = vpow.pop %v3210
    %v3212 = vmul.f32 %v3117, 1.442695
    %v3213 = vpow.pop %v3212
    %v3214 = vmul.f32 %v3118, 1.442695
    %v3215 = vpow.pop %v3214
    %v3216 = vmul.f32 %v3119, 1.442695
    %v3217 = vpow.pop %v3216
    %v3218 = vmul.f32 %v3120, 1.442695
    %v3219 = vpow.pop %v3218
    %v3220 = vmul.f32 %v3121, 1.442695
    %v3221 = vpow.pop %v3220
    %v3222 = vmul.f32 %v3122, 1.442695
    %v3223 = vpow.pop %v3222
    %v3224 = vmul.f32 %v3123, 1.442695
    %v3225 = vpow.pop %v3224
    %v3226 = vmul.f32 %v3124, 1.442695
    %v3227 = vpow.pop %v3226
    %v3228 = vmul.f32 %v3125, 1.442695
    %v3229 = vpow.pop %v3228
    %v3230 = vmul.f32 %v3126, 1.442695
    %v3231 = vpow.pop %v3230
    %v3232 = vmul.f32 %v3127, 1.442695
    %v3233 = vpow.pop %v3232
    %v3234 = vmul.f32 %v3128, 1.442695
    %v3235 = vpow.pop %v3234
    %v3236 = vmul.f32 %v3129, 1.442695
    %v3237 = vpow.pop %v3236
    %v3238 = vmul.f32 %v3130, 1.442695
    %v3239 = vpow.pop %v3238
    %v3240 = vmul.f32 %v3131, 1.442695
    %v3241 = vpow.pop %v3240
    %v3242 = vmul.f32 %v3132, 1.442695
    %v3243 = vpow.pop %v3242
    %v3244 = vmul.f32 %v3133, 1.442695
    %v3245 = vpow.pop %v3244
    %v3246 = vmul.f32 %v3134, 1.442695
    %v3247 = vpow.pop %v3246
    %v3248 = vmul.f32 %v3135, 1.442695
    %v3249 = vpow.pop %v3248
    %v3250 = vmul.f32 %v3136, 1.442695
    %v3251 = vpow.pop %v3250
    %v3252 = vmul.f32 %v3137, 1.442695
    %v3253 = vpow.pop %v3252
    %v3254 = vmul.f32 %v3138, 1.442695
    %v3255 = vpow.pop %v3254
    %v3256 = vmul.f32 %v3139, 1.442695
    %v3257 = vpow.pop %v3256
    %v3258 = vmul.f32 %v3140, 1.442695
    %v3259 = vpow.pop %v3258
    %v3260 = vmul.f32 %v3141, 1.442695
    %v3261 = vpow.pop %v3260
    %v3262 = vmul.f32 %v3142, 1.442695
    %v3263 = vpow.pop %v3262
    %v3264 = vmul.f32 %v3143, 1.442695
    %v3265 = vpow.pop %v3264
    %v3266 = vmul.f32 %v3144, 1.442695
    %v3267 = vpow.pop %v3266
    %v3268 = vmul.f32 %v3145, 1.442695
    %v3269 = vpow.pop %v3268
    %v3270 = vmul.f32 %v3146, 1.442695
    %v3271 = vpow.pop %v3270
    %v3272 = vmul.f32 %v3147, 1.442695
    %v3273 = vpow.pop %v3272
    %v3274 = vmul.f32 %v3148, 1.442695
    %v3275 = vpow.pop %v3274
    %v3276 = vmul.f32 %v3149, 1.442695
    %v3277 = vpow.pop %v3276
    %v3278 = vsel %vm121, %v3151, 0.0
    %3279 = vadd.xlane.f32.xlu0 %v3278
    %v3280 = vpop.xlane.xlu0 %3279
    %v3281 = vsel %vm121, %v3153, 0.0
    %3282 = vadd.xlane.f32.xlu0 %v3281
    %v3283 = vpop.xlane.xlu0 %3282
    %v3284 = vsel %vm121, %v3155, 0.0
    %3285 = vadd.xlane.f32.xlu0 %v3284
    %v3286 = vpop.xlane.xlu0 %3285
    %v3287 = vsel %vm121, %v3157, 0.0
    %3288 = vadd.xlane.f32.xlu0 %v3287
    %v3289 = vpop.xlane.xlu0 %3288
    %v3290 = vsel %vm121, %v3159, 0.0
    %3291 = vadd.xlane.f32.xlu0 %v3290
    %v3292 = vpop.xlane.xlu0 %3291
    %v3293 = vsel %vm121, %v3161, 0.0
    %3294 = vadd.xlane.f32.xlu0 %v3293
    %v3295 = vpop.xlane.xlu0 %3294
    %v3296 = vsel %vm121, %v3163, 0.0
    %3297 = vadd.xlane.f32.xlu0 %v3296
    %v3298 = vpop.xlane.xlu0 %3297
    %v3299 = vsel %vm121, %v3165, 0.0
    %3300 = vadd.xlane.f32.xlu0 %v3299
    %v3301 = vpop.xlane.xlu0 %3300
    %v3302 = vsel %vm121, %v3167, 0.0
    %3303 = vadd.xlane.f32.xlu0 %v3302
    %v3304 = vpop.xlane.xlu0 %3303
    %v3305 = vsel %vm121, %v3169, 0.0
    %3306 = vadd.xlane.f32.xlu0 %v3305
    %v3307 = vpop.xlane.xlu0 %3306
    %v3308 = vsel %vm121, %v3171, 0.0
    %3309 = vadd.xlane.f32.xlu0 %v3308
    %v3310 = vpop.xlane.xlu0 %3309
    %v3311 = vsel %vm121, %v3173, 0.0
    %3312 = vadd.xlane.f32.xlu0 %v3311
    %v3313 = vpop.xlane.xlu0 %3312
    %v3314 = vsel %vm121, %v3175, 0.0
    %3315 = vadd.xlane.f32.xlu0 %v3314
    %v3316 = vpop.xlane.xlu0 %3315
    %v3317 = vsel %vm121, %v3177, 0.0
    %3318 = vadd.xlane.f32.xlu0 %v3317
    %v3319 = vpop.xlane.xlu0 %3318
    %v3320 = vsel %vm121, %v3179, 0.0
    %3321 = vadd.xlane.f32.xlu0 %v3320
    %v3322 = vpop.xlane.xlu0 %3321
    %v3323 = vsel %vm121, %v3181, 0.0
    %3324 = vadd.xlane.f32.xlu0 %v3323
    %v3325 = vpop.xlane.xlu0 %3324
    %v3326 = vsel %vm121, %v3183, 0.0
    %3327 = vadd.xlane.f32.xlu0 %v3326
    %v3328 = vpop.xlane.xlu0 %3327
    %v3329 = vsel %vm121, %v3185, 0.0
    %3330 = vadd.xlane.f32.xlu0 %v3329
    %v3331 = vpop.xlane.xlu0 %3330
    %v3332 = vsel %vm121, %v3187, 0.0
    %3333 = vadd.xlane.f32.xlu0 %v3332
    %v3334 = vpop.xlane.xlu0 %3333
    %v3335 = vsel %vm121, %v3189, 0.0
    %3336 = vadd.xlane.f32.xlu0 %v3335
    %v3337 = vpop.xlane.xlu0 %3336
    %v3338 = vsel %vm121, %v3191, 0.0
    %3339 = vadd.xlane.f32.xlu0 %v3338
    %v3340 = vpop.xlane.xlu0 %3339
    %v3341 = vsel %vm121, %v3193, 0.0
    %3342 = vadd.xlane.f32.xlu0 %v3341
    %v3343 = vpop.xlane.xlu0 %3342
    %v3344 = vsel %vm121, %v3195, 0.0
    %3345 = vadd.xlane.f32.xlu0 %v3344
    %v3346 = vpop.xlane.xlu0 %3345
    %v3347 = vsel %vm121, %v3197, 0.0
    %3348 = vadd.xlane.f32.xlu0 %v3347
    %v3349 = vpop.xlane.xlu0 %3348
    %v3350 = vsel %vm121, %v3199, 0.0
    %3351 = vadd.xlane.f32.xlu0 %v3350
    %v3352 = vpop.xlane.xlu0 %3351
    %v3353 = vsel %vm121, %v3201, 0.0
    %3354 = vadd.xlane.f32.xlu0 %v3353
    %v3355 = vpop.xlane.xlu0 %3354
    %v3356 = vsel %vm121, %v3203, 0.0
    %3357 = vadd.xlane.f32.xlu0 %v3356
    %v3358 = vpop.xlane.xlu0 %3357
    %v3359 = vsel %vm121, %v3205, 0.0
    %3360 = vadd.xlane.f32.xlu0 %v3359
    %v3361 = vpop.xlane.xlu0 %3360
    %v3362 = vsel %vm121, %v3207, 0.0
    %3363 = vadd.xlane.f32.xlu0 %v3362
    %v3364 = vpop.xlane.xlu0 %3363
    %v3365 = vsel %vm121, %v3209, 0.0
    %3366 = vadd.xlane.f32.xlu0 %v3365
    %v3367 = vpop.xlane.xlu0 %3366
    %v3368 = vsel %vm121, %v3211, 0.0
    %3369 = vadd.xlane.f32.xlu0 %v3368
    %v3370 = vpop.xlane.xlu0 %3369
    %v3371 = vsel %vm121, %v3213, 0.0
    %3372 = vadd.xlane.f32.xlu0 %v3371
    %v3373 = vpop.xlane.xlu0 %3372
    %v3374 = vsel %vm121, %v3215, 0.0
    %3375 = vadd.xlane.f32.xlu0 %v3374
    %v3376 = vpop.xlane.xlu0 %3375
    %v3377 = vsel %vm121, %v3217, 0.0
    %3378 = vadd.xlane.f32.xlu0 %v3377
    %v3379 = vpop.xlane.xlu0 %3378
    %v3380 = vsel %vm121, %v3219, 0.0
    %3381 = vadd.xlane.f32.xlu0 %v3380
    %v3382 = vpop.xlane.xlu0 %3381
    %v3383 = vsel %vm121, %v3221, 0.0
    %3384 = vadd.xlane.f32.xlu0 %v3383
    %v3385 = vpop.xlane.xlu0 %3384
    %v3386 = vsel %vm121, %v3223, 0.0
    %3387 = vadd.xlane.f32.xlu0 %v3386
    %v3388 = vpop.xlane.xlu0 %3387
    %v3389 = vsel %vm121, %v3225, 0.0
    %3390 = vadd.xlane.f32.xlu0 %v3389
    %v3391 = vpop.xlane.xlu0 %3390
    %v3392 = vsel %vm121, %v3227, 0.0
    %3393 = vadd.xlane.f32.xlu0 %v3392
    %v3394 = vpop.xlane.xlu0 %3393
    %v3395 = vsel %vm121, %v3229, 0.0
    %3396 = vadd.xlane.f32.xlu0 %v3395
    %v3397 = vpop.xlane.xlu0 %3396
    %v3398 = vsel %vm121, %v3231, 0.0
    %3399 = vadd.xlane.f32.xlu0 %v3398
    %v3400 = vpop.xlane.xlu0 %3399
    %v3401 = vsel %vm121, %v3233, 0.0
    %3402 = vadd.xlane.f32.xlu0 %v3401
    %v3403 = vpop.xlane.xlu0 %3402
    %v3404 = vsel %vm121, %v3235, 0.0
    %3405 = vadd.xlane.f32.xlu0 %v3404
    %v3406 = vpop.xlane.xlu0 %3405
    %v3407 = vsel %vm121, %v3237, 0.0
    %3408 = vadd.xlane.f32.xlu0 %v3407
    %v3409 = vpop.xlane.xlu0 %3408
    %v3410 = vsel %vm121, %v3239, 0.0
    %3411 = vadd.xlane.f32.xlu0 %v3410
    %v3412 = vpop.xlane.xlu0 %3411
    %v3413 = vsel %vm121, %v3241, 0.0
    %3414 = vadd.xlane.f32.xlu0 %v3413
    %v3415 = vpop.xlane.xlu0 %3414
    %v3416 = vsel %vm121, %v3243, 0.0
    %3417 = vadd.xlane.f32.xlu0 %v3416
    %v3418 = vpop.xlane.xlu0 %3417
    %v3419 = vsel %vm121, %v3245, 0.0
    %3420 = vadd.xlane.f32.xlu0 %v3419
    %v3421 = vpop.xlane.xlu0 %3420
    %v3422 = vsel %vm121, %v3247, 0.0
    %3423 = vadd.xlane.f32.xlu0 %v3422
    %v3424 = vpop.xlane.xlu0 %3423
    %v3425 = vsel %vm121, %v3249, 0.0
    %3426 = vadd.xlane.f32.xlu0 %v3425
    %v3427 = vpop.xlane.xlu0 %3426
    %v3428 = vsel %vm121, %v3251, 0.0
    %3429 = vadd.xlane.f32.xlu0 %v3428
    %v3430 = vpop.xlane.xlu0 %3429
    %v3431 = vsel %vm121, %v3253, 0.0
    %3432 = vadd.xlane.f32.xlu0 %v3431
    %v3433 = vpop.xlane.xlu0 %3432
    %v3434 = vsel %vm121, %v3255, 0.0
    %3435 = vadd.xlane.f32.xlu0 %v3434
    %v3436 = vpop.xlane.xlu0 %3435
    %v3437 = vsel %vm121, %v3257, 0.0
    %3438 = vadd.xlane.f32.xlu0 %v3437
    %v3439 = vpop.xlane.xlu0 %3438
    %v3440 = vsel %vm121, %v3259, 0.0
    %3441 = vadd.xlane.f32.xlu0 %v3440
    %v3442 = vpop.xlane.xlu0 %3441
    %v3443 = vsel %vm121, %v3261, 0.0
    %3444 = vadd.xlane.f32.xlu0 %v3443
    %v3445 = vpop.xlane.xlu0 %3444
    %v3446 = vsel %vm121, %v3263, 0.0
    %3447 = vadd.xlane.f32.xlu0 %v3446
    %v3448 = vpop.xlane.xlu0 %3447
    %v3449 = vsel %vm121, %v3265, 0.0
    %3450 = vadd.xlane.f32.xlu0 %v3449
    %v3451 = vpop.xlane.xlu0 %3450
    %v3452 = vsel %vm121, %v3267, 0.0
    %3453 = vadd.xlane.f32.xlu0 %v3452
    %v3454 = vpop.xlane.xlu0 %3453
    %v3455 = vsel %vm121, %v3269, 0.0
    %3456 = vadd.xlane.f32.xlu0 %v3455
    %v3457 = vpop.xlane.xlu0 %3456
    %v3458 = vsel %vm121, %v3271, 0.0
    %3459 = vadd.xlane.f32.xlu0 %v3458
    %v3460 = vpop.xlane.xlu0 %3459
    %v3461 = vsel %vm121, %v3273, 0.0
    %3462 = vadd.xlane.f32.xlu0 %v3461
    %v3463 = vpop.xlane.xlu0 %3462
    %v3464 = vsel %vm121, %v3275, 0.0
    %3465 = vadd.xlane.f32.xlu0 %v3464
    %v3466 = vpop.xlane.xlu0 %3465
    %v3467 = vsel %vm121, %v3277, 0.0
    %3468 = vadd.xlane.f32.xlu0 %v3467
    %v3469 = vpop.xlane.xlu0 %3468
    %v3470 = vrcp.pop %v3280
    %v3471 = vrcp.pop %v3283
    %v3472 = vrcp.pop %v3286
    %v3473 = vrcp.pop %v3289
    %v3474 = vrcp.pop %v3292
    %v3475 = vrcp.pop %v3295
    %v3476 = vrcp.pop %v3298
    %v3477 = vrcp.pop %v3301
    %v3478 = vrcp.pop %v3304
    %v3479 = vrcp.pop %v3307
    %v3480 = vrcp.pop %v3310
    %v3481 = vrcp.pop %v3313
    %v3482 = vrcp.pop %v3316
    %v3483 = vrcp.pop %v3319
    %v3484 = vrcp.pop %v3322
    %v3485 = vrcp.pop %v3325
    %v3486 = vrcp.pop %v3328
    %v3487 = vrcp.pop %v3331
    %v3488 = vrcp.pop %v3334
    %v3489 = vrcp.pop %v3337
    %v3490 = vrcp.pop %v3340
    %v3491 = vrcp.pop %v3343
    %v3492 = vrcp.pop %v3346
    %v3493 = vrcp.pop %v3349
    %v3494 = vrcp.pop %v3352
    %v3495 = vrcp.pop %v3355
    %v3496 = vrcp.pop %v3358
    %v3497 = vrcp.pop %v3361
    %v3498 = vrcp.pop %v3364
    %v3499 = vrcp.pop %v3367
    %v3500 = vrcp.pop %v3370
    %v3501 = vrcp.pop %v3373
    %v3502 = vrcp.pop %v3376
    %v3503 = vrcp.pop %v3379
    %v3504 = vrcp.pop %v3382
    %v3505 = vrcp.pop %v3385
    %v3506 = vrcp.pop %v3388
    %v3507 = vrcp.pop %v3391
    %v3508 = vrcp.pop %v3394
    %v3509 = vrcp.pop %v3397
    %v3510 = vrcp.pop %v3400
    %v3511 = vrcp.pop %v3403
    %v3512 = vrcp.pop %v3406
    %v3513 = vrcp.pop %v3409
    %v3514 = vrcp.pop %v3412
    %v3515 = vrcp.pop %v3415
    %v3516 = vrcp.pop %v3418
    %v3517 = vrcp.pop %v3421
    %v3518 = vrcp.pop %v3424
    %v3519 = vrcp.pop %v3427
    %v3520 = vrcp.pop %v3430
    %v3521 = vrcp.pop %v3433
    %v3522 = vrcp.pop %v3436
    %v3523 = vrcp.pop %v3439
    %v3524 = vrcp.pop %v3442
    %v3525 = vrcp.pop %v3445
    %v3526 = vrcp.pop %v3448
    %v3527 = vrcp.pop %v3451
    %v3528 = vrcp.pop %v3454
    %v3529 = vrcp.pop %v3457
    %v3530 = vrcp.pop %v3460
    %v3531 = vrcp.pop %v3463
    %v3532 = vrcp.pop %v3466
    %v3533 = vrcp.pop %v3469
    %3534 = vmatprep.subr.mxu0 0.0
    %3535 = vmatpush1.msra.mxu0 0.0
    %3536 = vmatprep.subr.mxu0 0.0
    %3537 = vmatpush1.msra.mxu0 0.0
    %3538 = vmatprep.subr.mxu0 0.0
    %3539 = vmatpush1.msra.mxu0 0.0
    %3540 = vmatprep.subr.mxu0 0.0
    %3541 = vmatpush1.msra.mxu0 0.0
    %3542 = vmatprep.subr.mxu0 0.0
    %3543 = vmatpush1.msra.mxu0 0.0
    %3544 = vmatprep.subr.mxu0 0.0
    %3545 = vmatpush1.msra.mxu0 0.0
    %3546 = vmatprep.subr.mxu0 0.0
    %3547 = vmatpush1.msra.mxu0 0.0
    %3548 = vmatprep.subr.mxu0 0.0
    %3549 = vmatpush1.msra.mxu0 0.0
    %3550 = vmatprep.subr.mxu0 0.0
    %3551 = vmatpush1.msra.mxu0 %v103
    %3552 = vmatprep.subr.mxu0 0.0
    %3553 = vmatpush1.msra.mxu0 %v102
    %3554 = vmatprep.subr.mxu0 0.0
    %3555 = vmatpush1.msra.mxu0 %v101
    %3556 = vmatprep.subr.mxu0 0.0
    %3557 = vmatpush1.msra.mxu0 %v100
    %3558 = vmatprep.subr.mxu0 0.0
    %3559 = vmatpush1.msra.mxu0 %v99
    %3560 = vmatprep.subr.mxu0 0.0
    %3561 = vmatpush1.msra.mxu0 %v98
    %3562 = vmatprep.subr.mxu0 0.0
    %3563 = vmatpush1.msra.mxu0 %v97
    %3564 = vmatprep.subr.mxu0 0.0
    %3565 = vmatpush1.msra.mxu0 %v96
    %3566 = vmatprep.subr.mxu0 0.0
    %3567 = vmatpush2.msra.mxu0 0.0
    %3568 = vmatprep.subr.mxu0 0.0
    %3569 = vmatpush2.msra.mxu0 0.0
    %3570 = vmatprep.subr.mxu0 0.0
    %3571 = vmatpush2.msra.mxu0 0.0
    %3572 = vmatprep.subr.mxu0 0.0
    %3573 = vmatpush2.msra.mxu0 0.0
    %3574 = vmatprep.subr.mxu0 0.0
    %3575 = vmatpush2.msra.mxu0 0.0
    %3576 = vmatprep.subr.mxu0 0.0
    %3577 = vmatpush2.msra.mxu0 0.0
    %3578 = vmatprep.subr.mxu0 0.0
    %3579 = vmatpush2.msra.mxu0 0.0
    %3580 = vmatprep.subr.mxu0 0.0
    %3581 = vmatpush2.msra.mxu0 0.0
    %3582 = vmatprep.subr.mxu0 0.0
    %3583 = vmatpush2.msra.mxu0 0.0
    %3584 = vmatprep.subr.mxu0 0.0
    %3585 = vmatpush2.msra.mxu0 0.0
    %3586 = vmatprep.subr.mxu0 0.0
    %3587 = vmatpush2.msra.mxu0 0.0
    %3588 = vmatprep.subr.mxu0 0.0
    %3589 = vmatpush2.msra.mxu0 0.0
    %3590 = vmatprep.subr.mxu0 0.0
    %3591 = vmatpush2.msra.mxu0 0.0
    %3592 = vmatprep.subr.mxu0 0.0
    %3593 = vmatpush2.msra.mxu0 0.0
    %3594 = vmatprep.subr.mxu0 0.0
    %3595 = vmatpush2.msra.mxu0 0.0
    %3596 = vmatprep.subr.mxu0 0.0
    %3597 = vmatpush2.msra.mxu0 0.0
    %3598 = vmatprep.mubr.f32.mxu0 0.0
    %3599 = vmatmul.mubr.f32.gmra.mxu0 %v2486
    %v3600 = vpop.f32.mrf.mxu0
    %v3601 = vadd.f32 0.0, %v3600
    %v3602 = vpop.f32.mrf.mxu0
    %3603 = vmatprep.mubr.f32.mxu0 0.0
    %3604 = vmatmul.mubr.f32.gmra.mxu0 %v2489
    %v3605 = vpop.f32.mrf.mxu0
    %v3606 = vadd.f32 0.0, %v3605
    %v3607 = vpop.f32.mrf.mxu0
    %3608 = vmatprep.mubr.f32.mxu0 0.0
    %3609 = vmatmul.mubr.f32.gmra.mxu0 %v2492
    %v3610 = vpop.f32.mrf.mxu0
    %v3611 = vadd.f32 0.0, %v3610
    %v3612 = vpop.f32.mrf.mxu0
    %3613 = vmatprep.mubr.f32.mxu0 0.0
    %3614 = vmatmul.mubr.f32.gmra.mxu0 %v2495
    %v3615 = vpop.f32.mrf.mxu0
    %v3616 = vadd.f32 0.0, %v3615
    %v3617 = vpop.f32.mrf.mxu0
    %3618 = vmatprep.mubr.f32.mxu0 0.0
    %3619 = vmatmul.mubr.f32.gmra.mxu0 %v2498
    %v3620 = vpop.f32.mrf.mxu0
    %v3621 = vadd.f32 0.0, %v3620
    %v3622 = vpop.f32.mrf.mxu0
    %3623 = vmatprep.mubr.f32.mxu0 0.0
    %3624 = vmatmul.mubr.f32.gmra.mxu0 %v2501
    %v3625 = vpop.f32.mrf.mxu0
    %v3626 = vadd.f32 0.0, %v3625
    %v3627 = vpop.f32.mrf.mxu0
    %3628 = vmatprep.mubr.f32.mxu0 0.0
    %3629 = vmatmul.mubr.f32.gmra.mxu0 %v2504
    %v3630 = vpop.f32.mrf.mxu0
    %v3631 = vadd.f32 0.0, %v3630
    %v3632 = vpop.f32.mrf.mxu0
    %3633 = vmatprep.mubr.f32.mxu0 0.0
    %3634 = vmatmul.mubr.f32.gmra.mxu0 %v2507
    %v3635 = vpop.f32.mrf.mxu0
    %v3636 = vadd.f32 0.0, %v3635
    %v3637 = vpop.f32.mrf.mxu0
    %3638 = vdwg.mxu0
    %v3640 = vsel %vm121, %v3151, 0
    %v3643 = vsel %vm121, %v3153, 0
    %v3646 = vsel %vm121, %v3155, 0
    %v3649 = vsel %vm121, %v3157, 0
    %v3652 = vsel %vm121, %v3159, 0
    %v3655 = vsel %vm121, %v3161, 0
    %v3658 = vsel %vm121, %v3163, 0
    %v3661 = vsel %vm121, %v3165, 0
    %v3664 = vsel %vm121, %v3167, 0
    %v3667 = vsel %vm121, %v3169, 0
    %v3670 = vsel %vm121, %v3171, 0
    %v3673 = vsel %vm121, %v3173, 0
    %v3676 = vsel %vm121, %v3175, 0
    %v3679 = vsel %vm121, %v3177, 0
    %v3682 = vsel %vm121, %v3179, 0
    %v3685 = vsel %vm121, %v3181, 0
    %v3688 = vsel %vm121, %v3183, 0
    %v3691 = vsel %vm121, %v3185, 0
    %v3694 = vsel %vm121, %v3187, 0
    %v3697 = vsel %vm121, %v3189, 0
    %v3700 = vsel %vm121, %v3191, 0
    %v3703 = vsel %vm121, %v3193, 0
    %v3706 = vsel %vm121, %v3195, 0
    %v3709 = vsel %vm121, %v3197, 0
    %v3712 = vsel %vm121, %v3199, 0
    %v3715 = vsel %vm121, %v3201, 0
    %v3718 = vsel %vm121, %v3203, 0
    %v3721 = vsel %vm121, %v3205, 0
    %v3724 = vsel %vm121, %v3207, 0
    %v3727 = vsel %vm121, %v3209, 0
    %v3730 = vsel %vm121, %v3211, 0
    %v3733 = vsel %vm121, %v3213, 0
    %v3736 = vsel %vm121, %v3215, 0
    %v3739 = vsel %vm121, %v3217, 0
    %v3742 = vsel %vm121, %v3219, 0
    %v3745 = vsel %vm121, %v3221, 0
    %v3748 = vsel %vm121, %v3223, 0
    %v3751 = vsel %vm121, %v3225, 0
    %v3754 = vsel %vm121, %v3227, 0
    %v3757 = vsel %vm121, %v3229, 0
    %v3760 = vsel %vm121, %v3231, 0
    %v3763 = vsel %vm121, %v3233, 0
    %v3766 = vsel %vm121, %v3235, 0
    %v3769 = vsel %vm121, %v3237, 0
    %v3772 = vsel %vm121, %v3239, 0
    %v3775 = vsel %vm121, %v3241, 0
    %v3778 = vsel %vm121, %v3243, 0
    %v3781 = vsel %vm121, %v3245, 0
    %v3784 = vsel %vm121, %v3247, 0
    %v3787 = vsel %vm121, %v3249, 0
    %v3790 = vsel %vm121, %v3251, 0
    %v3793 = vsel %vm121, %v3253, 0
    %v3796 = vsel %vm121, %v3255, 0
    %v3799 = vsel %vm121, %v3257, 0
    %v3802 = vsel %vm121, %v3259, 0
    %v3805 = vsel %vm121, %v3261, 0
    %v3808 = vsel %vm121, %v3263, 0
    %v3811 = vsel %vm121, %v3265, 0
    %v3814 = vsel %vm121, %v3267, 0
    %v3817 = vsel %vm121, %v3269, 0
    %v3820 = vsel %vm121, %v3271, 0
    %v3823 = vsel %vm121, %v3273, 0
    %v3826 = vsel %vm121, %v3275, 0
    %v3829 = vsel %vm121, %v3277, 0
    %3831 = vmatprep.subr.mxu0 0.0
    %3832 = vmatpush1.msra.mxu0 0.0
    %3833 = vmatprep.subr.mxu0 0.0
    %3834 = vmatpush1.msra.mxu0 0.0
    %3835 = vmatprep.subr.mxu0 0.0
    %3836 = vmatpush1.msra.mxu0 0.0
    %3837 = vmatprep.subr.mxu0 0.0
    %3838 = vmatpush1.msra.mxu0 0.0
    %3839 = vmatprep.subr.mxu0 0.0
    %3840 = vmatpush1.msra.mxu0 0.0
    %3841 = vmatprep.subr.mxu0 0.0
    %3842 = vmatpush1.msra.mxu0 0.0
    %3843 = vmatprep.subr.mxu0 0.0
    %3844 = vmatpush1.msra.mxu0 0.0
    %3845 = vmatprep.subr.mxu0 0.0
    %3846 = vmatpush1.msra.mxu0 0.0
    %3847 = vmatprep.subr.mxu0 0.0
    %3848 = vmatpush1.msra.mxu0 %v3636
    %3849 = vmatprep.subr.mxu0 0.0
    %3850 = vmatpush1.msra.mxu0 %v3631
    %3851 = vmatprep.subr.mxu0 0.0
    %3852 = vmatpush1.msra.mxu0 %v3626
    %3853 = vmatprep.subr.mxu0 0.0
    %3854 = vmatpush1.msra.mxu0 %v3621
    %3855 = vmatprep.subr.mxu0 0.0
    %3856 = vmatpush1.msra.mxu0 %v3616
    %3857 = vmatprep.subr.mxu0 0.0
    %3858 = vmatpush1.msra.mxu0 %v3611
    %3859 = vmatprep.subr.mxu0 0.0
    %3860 = vmatpush1.msra.mxu0 %v3606
    %3861 = vmatprep.subr.mxu0 0.0
    %3862 = vmatpush1.msra.mxu0 %v3601
    %3863 = vmatprep.subr.mxu0 0.0
    %3864 = vmatpush2.msra.mxu0 0.0
    %3865 = vmatprep.subr.mxu0 0.0
    %3866 = vmatpush2.msra.mxu0 0.0
    %3867 = vmatprep.subr.mxu0 0.0
    %3868 = vmatpush2.msra.mxu0 0.0
    %3869 = vmatprep.subr.mxu0 0.0
    %3870 = vmatpush2.msra.mxu0 0.0
    %3871 = vmatprep.subr.mxu0 0.0
    %3872 = vmatpush2.msra.mxu0 0.0
    %3873 = vmatprep.subr.mxu0 0.0
    %3874 = vmatpush2.msra.mxu0 0.0
    %3875 = vmatprep.subr.mxu0 0.0
    %3876 = vmatpush2.msra.mxu0 0.0
    %3877 = vmatprep.subr.mxu0 0.0
    %3878 = vmatpush2.msra.mxu0 0.0
    %3879 = vmatprep.subr.mxu0 0.0
    %3880 = vmatpush2.msra.mxu0 0.0
    %3881 = vmatprep.subr.mxu0 0.0
    %3882 = vmatpush2.msra.mxu0 0.0
    %3883 = vmatprep.subr.mxu0 0.0
    %3884 = vmatpush2.msra.mxu0 0.0
    %3885 = vmatprep.subr.mxu0 0.0
    %3886 = vmatpush2.msra.mxu0 0.0
    %3887 = vmatprep.subr.mxu0 0.0
    %3888 = vmatpush2.msra.mxu0 0.0
    %3889 = vmatprep.subr.mxu0 0.0
    %3890 = vmatpush2.msra.mxu0 0.0
    %3891 = vmatprep.subr.mxu0 0.0
    %3892 = vmatpush2.msra.mxu0 0.0
    %3893 = vmatprep.subr.mxu0 0.0
    %3894 = vmatpush2.msra.mxu0 0.0
    %3895 = vmatprep.mubr.f32.mxu0 0.0
    %3896 = vmatmul.mubr.f32.gmra.mxu0 %v3640
    %v3897 = vpop.f32.mrf.mxu0
    %v3898 = vadd.f32 0.0, %v3897
    %v3899 = vpop.f32.mrf.mxu0
    %3900 = vmatprep.mubr.f32.mxu0 0.0
    %3901 = vmatmul.mubr.f32.gmra.mxu0 %v3643
    %v3902 = vpop.f32.mrf.mxu0
    %v3903 = vadd.f32 0.0, %v3902
    %v3904 = vpop.f32.mrf.mxu0
    %3905 = vmatprep.mubr.f32.mxu0 0.0
    %3906 = vmatmul.mubr.f32.gmra.mxu0 %v3646
    %v3907 = vpop.f32.mrf.mxu0
    %v3908 = vadd.f32 0.0, %v3907
    %v3909 = vpop.f32.mrf.mxu0
    %3910 = vmatprep.mubr.f32.mxu0 0.0
    %3911 = vmatmul.mubr.f32.gmra.mxu0 %v3649
    %v3912 = vpop.f32.mrf.mxu0
    %v3913 = vadd.f32 0.0, %v3912
    %v3914 = vpop.f32.mrf.mxu0
    %3915 = vmatprep.mubr.f32.mxu0 0.0
    %3916 = vmatmul.mubr.f32.gmra.mxu0 %v3652
    %v3917 = vpop.f32.mrf.mxu0
    %v3918 = vadd.f32 0.0, %v3917
    %v3919 = vpop.f32.mrf.mxu0
    %3920 = vmatprep.mubr.f32.mxu0 0.0
    %3921 = vmatmul.mubr.f32.gmra.mxu0 %v3655
    %v3922 = vpop.f32.mrf.mxu0
    %v3923 = vadd.f32 0.0, %v3922
    %v3924 = vpop.f32.mrf.mxu0
    %3925 = vmatprep.mubr.f32.mxu0 0.0
    %3926 = vmatmul.mubr.f32.gmra.mxu0 %v3658
    %v3927 = vpop.f32.mrf.mxu0
    %v3928 = vadd.f32 0.0, %v3927
    %v3929 = vpop.f32.mrf.mxu0
    %3930 = vmatprep.mubr.f32.mxu0 0.0
    %3931 = vmatmul.mubr.f32.gmra.mxu0 %v3661
    %v3932 = vpop.f32.mrf.mxu0
    %v3933 = vadd.f32 0.0, %v3932
    %v3934 = vpop.f32.mrf.mxu0
    %3935 = vmatprep.mubr.f32.mxu0 0.0
    %3936 = vmatmul.mubr.f32.gmra.mxu0 %v3664
    %v3937 = vpop.f32.mrf.mxu0
    %v3938 = vadd.f32 0.0, %v3937
    %v3939 = vpop.f32.mrf.mxu0
    %3940 = vmatprep.mubr.f32.mxu0 0.0
    %3941 = vmatmul.mubr.f32.gmra.mxu0 %v3667
    %v3942 = vpop.f32.mrf.mxu0
    %v3943 = vadd.f32 0.0, %v3942
    %v3944 = vpop.f32.mrf.mxu0
    %3945 = vmatprep.mubr.f32.mxu0 0.0
    %3946 = vmatmul.mubr.f32.gmra.mxu0 %v3670
    %v3947 = vpop.f32.mrf.mxu0
    %v3948 = vadd.f32 0.0, %v3947
    %v3949 = vpop.f32.mrf.mxu0
    %3950 = vmatprep.mubr.f32.mxu0 0.0
    %3951 = vmatmul.mubr.f32.gmra.mxu0 %v3673
    %v3952 = vpop.f32.mrf.mxu0
    %v3953 = vadd.f32 0.0, %v3952
    %v3954 = vpop.f32.mrf.mxu0
    %3955 = vmatprep.mubr.f32.mxu0 0.0
    %3956 = vmatmul.mubr.f32.gmra.mxu0 %v3676
    %v3957 = vpop.f32.mrf.mxu0
    %v3958 = vadd.f32 0.0, %v3957
    %v3959 = vpop.f32.mrf.mxu0
    %3960 = vmatprep.mubr.f32.mxu0 0.0
    %3961 = vmatmul.mubr.f32.gmra.mxu0 %v3679
    %v3962 = vpop.f32.mrf.mxu0
    %v3963 = vadd.f32 0.0, %v3962
    %v3964 = vpop.f32.mrf.mxu0
    %3965 = vmatprep.mubr.f32.mxu0 0.0
    %3966 = vmatmul.mubr.f32.gmra.mxu0 %v3682
    %v3967 = vpop.f32.mrf.mxu0
    %v3968 = vadd.f32 0.0, %v3967
    %v3969 = vpop.f32.mrf.mxu0
    %3970 = vmatprep.mubr.f32.mxu0 0.0
    %3971 = vmatmul.mubr.f32.gmra.mxu0 %v3685
    %v3972 = vpop.f32.mrf.mxu0
    %v3973 = vadd.f32 0.0, %v3972
    %v3974 = vpop.f32.mrf.mxu0
    %3975 = vmatprep.mubr.f32.mxu0 0.0
    %3976 = vmatmul.mubr.f32.gmra.mxu0 %v3688
    %v3977 = vpop.f32.mrf.mxu0
    %v3978 = vadd.f32 0.0, %v3977
    %v3979 = vpop.f32.mrf.mxu0
    %3980 = vmatprep.mubr.f32.mxu0 0.0
    %3981 = vmatmul.mubr.f32.gmra.mxu0 %v3691
    %v3982 = vpop.f32.mrf.mxu0
    %v3983 = vadd.f32 0.0, %v3982
    %v3984 = vpop.f32.mrf.mxu0
    %3985 = vmatprep.mubr.f32.mxu0 0.0
    %3986 = vmatmul.mubr.f32.gmra.mxu0 %v3694
    %v3987 = vpop.f32.mrf.mxu0
    %v3988 = vadd.f32 0.0, %v3987
    %v3989 = vpop.f32.mrf.mxu0
    %3990 = vmatprep.mubr.f32.mxu0 0.0
    %3991 = vmatmul.mubr.f32.gmra.mxu0 %v3697
    %v3992 = vpop.f32.mrf.mxu0
    %v3993 = vadd.f32 0.0, %v3992
    %v3994 = vpop.f32.mrf.mxu0
    %3995 = vmatprep.mubr.f32.mxu0 0.0
    %3996 = vmatmul.mubr.f32.gmra.mxu0 %v3700
    %v3997 = vpop.f32.mrf.mxu0
    %v3998 = vadd.f32 0.0, %v3997
    %v3999 = vpop.f32.mrf.mxu0
    %4000 = vmatprep.mubr.f32.mxu0 0.0
    %4001 = vmatmul.mubr.f32.gmra.mxu0 %v3703
    %v4002 = vpop.f32.mrf.mxu0
    %v4003 = vadd.f32 0.0, %v4002
    %v4004 = vpop.f32.mrf.mxu0
    %4005 = vmatprep.mubr.f32.mxu0 0.0
    %4006 = vmatmul.mubr.f32.gmra.mxu0 %v3706
    %v4007 = vpop.f32.mrf.mxu0
    %v4008 = vadd.f32 0.0, %v4007
    %v4009 = vpop.f32.mrf.mxu0
    %4010 = vmatprep.mubr.f32.mxu0 0.0
    %4011 = vmatmul.mubr.f32.gmra.mxu0 %v3709
    %v4012 = vpop.f32.mrf.mxu0
    %v4013 = vadd.f32 0.0, %v4012
    %v4014 = vpop.f32.mrf.mxu0
    %4015 = vmatprep.mubr.f32.mxu0 0.0
    %4016 = vmatmul.mubr.f32.gmra.mxu0 %v3712
    %v4017 = vpop.f32.mrf.mxu0
    %v4018 = vadd.f32 0.0, %v4017
    %v4019 = vpop.f32.mrf.mxu0
    %4020 = vmatprep.mubr.f32.mxu0 0.0
    %4021 = vmatmul.mubr.f32.gmra.mxu0 %v3715
    %v4022 = vpop.f32.mrf.mxu0
    %v4023 = vadd.f32 0.0, %v4022
    %v4024 = vpop.f32.mrf.mxu0
    %4025 = vmatprep.mubr.f32.mxu0 0.0
    %4026 = vmatmul.mubr.f32.gmra.mxu0 %v3718
    %v4027 = vpop.f32.mrf.mxu0
    %v4028 = vadd.f32 0.0, %v4027
    %v4029 = vpop.f32.mrf.mxu0
    %4030 = vmatprep.mubr.f32.mxu0 0.0
    %4031 = vmatmul.mubr.f32.gmra.mxu0 %v3721
    %v4032 = vpop.f32.mrf.mxu0
    %v4033 = vadd.f32 0.0, %v4032
    %v4034 = vpop.f32.mrf.mxu0
    %4035 = vmatprep.mubr.f32.mxu0 0.0
    %4036 = vmatmul.mubr.f32.gmra.mxu0 %v3724
    %v4037 = vpop.f32.mrf.mxu0
    %v4038 = vadd.f32 0.0, %v4037
    %v4039 = vpop.f32.mrf.mxu0
    %4040 = vmatprep.mubr.f32.mxu0 0.0
    %4041 = vmatmul.mubr.f32.gmra.mxu0 %v3727
    %v4042 = vpop.f32.mrf.mxu0
    %v4043 = vadd.f32 0.0, %v4042
    %v4044 = vpop.f32.mrf.mxu0
    %4045 = vmatprep.mubr.f32.mxu0 0.0
    %4046 = vmatmul.mubr.f32.gmra.mxu0 %v3730
    %v4047 = vpop.f32.mrf.mxu0
    %v4048 = vadd.f32 0.0, %v4047
    %v4049 = vpop.f32.mrf.mxu0
    %4050 = vmatprep.mubr.f32.mxu0 0.0
    %4051 = vmatmul.mubr.f32.gmra.mxu0 %v3733
    %v4052 = vpop.f32.mrf.mxu0
    %v4053 = vadd.f32 0.0, %v4052
    %v4054 = vpop.f32.mrf.mxu0
    %4055 = vmatprep.mubr.f32.mxu0 0.0
    %4056 = vmatmul.mubr.f32.gmra.mxu0 %v3736
    %v4057 = vpop.f32.mrf.mxu0
    %v4058 = vadd.f32 0.0, %v4057
    %v4059 = vpop.f32.mrf.mxu0
    %4060 = vmatprep.mubr.f32.mxu0 0.0
    %4061 = vmatmul.mubr.f32.gmra.mxu0 %v3739
    %v4062 = vpop.f32.mrf.mxu0
    %v4063 = vadd.f32 0.0, %v4062
    %v4064 = vpop.f32.mrf.mxu0
    %4065 = vmatprep.mubr.f32.mxu0 0.0
    %4066 = vmatmul.mubr.f32.gmra.mxu0 %v3742
    %v4067 = vpop.f32.mrf.mxu0
    %v4068 = vadd.f32 0.0, %v4067
    %v4069 = vpop.f32.mrf.mxu0
    %4070 = vmatprep.mubr.f32.mxu0 0.0
    %4071 = vmatmul.mubr.f32.gmra.mxu0 %v3745
    %v4072 = vpop.f32.mrf.mxu0
    %v4073 = vadd.f32 0.0, %v4072
    %v4074 = vpop.f32.mrf.mxu0
    %4075 = vmatprep.mubr.f32.mxu0 0.0
    %4076 = vmatmul.mubr.f32.gmra.mxu0 %v3748
    %v4077 = vpop.f32.mrf.mxu0
    %v4078 = vadd.f32 0.0, %v4077
    %v4079 = vpop.f32.mrf.mxu0
    %4080 = vmatprep.mubr.f32.mxu0 0.0
    %4081 = vmatmul.mubr.f32.gmra.mxu0 %v3751
    %v4082 = vpop.f32.mrf.mxu0
    %v4083 = vadd.f32 0.0, %v4082
    %v4084 = vpop.f32.mrf.mxu0
    %4085 = vmatprep.mubr.f32.mxu0 0.0
    %4086 = vmatmul.mubr.f32.gmra.mxu0 %v3754
    %v4087 = vpop.f32.mrf.mxu0
    %v4088 = vadd.f32 0.0, %v4087
    %v4089 = vpop.f32.mrf.mxu0
    %4090 = vmatprep.mubr.f32.mxu0 0.0
    %4091 = vmatmul.mubr.f32.gmra.mxu0 %v3757
    %v4092 = vpop.f32.mrf.mxu0
    %v4093 = vadd.f32 0.0, %v4092
    %v4094 = vpop.f32.mrf.mxu0
    %4095 = vmatprep.mubr.f32.mxu0 0.0
    %4096 = vmatmul.mubr.f32.gmra.mxu0 %v3760
    %v4097 = vpop.f32.mrf.mxu0
    %v4098 = vadd.f32 0.0, %v4097
    %v4099 = vpop.f32.mrf.mxu0
    %4100 = vmatprep.mubr.f32.mxu0 0.0
    %4101 = vmatmul.mubr.f32.gmra.mxu0 %v3763
    %v4102 = vpop.f32.mrf.mxu0
    %v4103 = vadd.f32 0.0, %v4102
    %v4104 = vpop.f32.mrf.mxu0
    %4105 = vmatprep.mubr.f32.mxu0 0.0
    %4106 = vmatmul.mubr.f32.gmra.mxu0 %v3766
    %v4107 = vpop.f32.mrf.mxu0
    %v4108 = vadd.f32 0.0, %v4107
    %v4109 = vpop.f32.mrf.mxu0
    %4110 = vmatprep.mubr.f32.mxu0 0.0
    %4111 = vmatmul.mubr.f32.gmra.mxu0 %v3769
    %v4112 = vpop.f32.mrf.mxu0
    %v4113 = vadd.f32 0.0, %v4112
    %v4114 = vpop.f32.mrf.mxu0
    %4115 = vmatprep.mubr.f32.mxu0 0.0
    %4116 = vmatmul.mubr.f32.gmra.mxu0 %v3772
    %v4117 = vpop.f32.mrf.mxu0
    %v4118 = vadd.f32 0.0, %v4117
    %v4119 = vpop.f32.mrf.mxu0
    %4120 = vmatprep.mubr.f32.mxu0 0.0
    %4121 = vmatmul.mubr.f32.gmra.mxu0 %v3775
    %v4122 = vpop.f32.mrf.mxu0
    %v4123 = vadd.f32 0.0, %v4122
    %v4124 = vpop.f32.mrf.mxu0
    %4125 = vmatprep.mubr.f32.mxu0 0.0
    %4126 = vmatmul.mubr.f32.gmra.mxu0 %v3778
    %v4127 = vpop.f32.mrf.mxu0
    %v4128 = vadd.f32 0.0, %v4127
    %v4129 = vpop.f32.mrf.mxu0
    %4130 = vmatprep.mubr.f32.mxu0 0.0
    %4131 = vmatmul.mubr.f32.gmra.mxu0 %v3781
    %v4132 = vpop.f32.mrf.mxu0
    %v4133 = vadd.f32 0.0, %v4132
    %v4134 = vpop.f32.mrf.mxu0
    %4135 = vmatprep.mubr.f32.mxu0 0.0
    %4136 = vmatmul.mubr.f32.gmra.mxu0 %v3784
    %v4137 = vpop.f32.mrf.mxu0
    %v4138 = vadd.f32 0.0, %v4137
    %v4139 = vpop.f32.mrf.mxu0
    %4140 = vmatprep.mubr.f32.mxu0 0.0
    %4141 = vmatmul.mubr.f32.gmra.mxu0 %v3787
    %v4142 = vpop.f32.mrf.mxu0
    %v4143 = vadd.f32 0.0, %v4142
    %v4144 = vpop.f32.mrf.mxu0
    %4145 = vmatprep.mubr.f32.mxu0 0.0
    %4146 = vmatmul.mubr.f32.gmra.mxu0 %v3790
    %v4147 = vpop.f32.mrf.mxu0
    %v4148 = vadd.f32 0.0, %v4147
    %v4149 = vpop.f32.mrf.mxu0
    %4150 = vmatprep.mubr.f32.mxu0 0.0
    %4151 = vmatmul.mubr.f32.gmra.mxu0 %v3793
    %v4152 = vpop.f32.mrf.mxu0
    %v4153 = vadd.f32 0.0, %v4152
    %v4154 = vpop.f32.mrf.mxu0
    %4155 = vmatprep.mubr.f32.mxu0 0.0
    %4156 = vmatmul.mubr.f32.gmra.mxu0 %v3796
    %v4157 = vpop.f32.mrf.mxu0
    %v4158 = vadd.f32 0.0, %v4157
    %v4159 = vpop.f32.mrf.mxu0
    %4160 = vmatprep.mubr.f32.mxu0 0.0
    %4161 = vmatmul.mubr.f32.gmra.mxu0 %v3799
    %v4162 = vpop.f32.mrf.mxu0
    %v4163 = vadd.f32 0.0, %v4162
    %v4164 = vpop.f32.mrf.mxu0
    %4165 = vmatprep.mubr.f32.mxu0 0.0
    %4166 = vmatmul.mubr.f32.gmra.mxu0 %v3802
    %v4167 = vpop.f32.mrf.mxu0
    %v4168 = vadd.f32 0.0, %v4167
    %v4169 = vpop.f32.mrf.mxu0
    %4170 = vmatprep.mubr.f32.mxu0 0.0
    %4171 = vmatmul.mubr.f32.gmra.mxu0 %v3805
    %v4172 = vpop.f32.mrf.mxu0
    %v4173 = vadd.f32 0.0, %v4172
    %v4174 = vpop.f32.mrf.mxu0
    %4175 = vmatprep.mubr.f32.mxu0 0.0
    %4176 = vmatmul.mubr.f32.gmra.mxu0 %v3808
    %v4177 = vpop.f32.mrf.mxu0
    %v4178 = vadd.f32 0.0, %v4177
    %v4179 = vpop.f32.mrf.mxu0
    %4180 = vmatprep.mubr.f32.mxu0 0.0
    %4181 = vmatmul.mubr.f32.gmra.mxu0 %v3811
    %v4182 = vpop.f32.mrf.mxu0
    %v4183 = vadd.f32 0.0, %v4182
    %v4184 = vpop.f32.mrf.mxu0
    %4185 = vmatprep.mubr.f32.mxu0 0.0
    %4186 = vmatmul.mubr.f32.gmra.mxu0 %v3814
    %v4187 = vpop.f32.mrf.mxu0
    %v4188 = vadd.f32 0.0, %v4187
    %v4189 = vpop.f32.mrf.mxu0
    %4190 = vmatprep.mubr.f32.mxu0 0.0
    %4191 = vmatmul.mubr.f32.gmra.mxu0 %v3817
    %v4192 = vpop.f32.mrf.mxu0
    %v4193 = vadd.f32 0.0, %v4192
    %v4194 = vpop.f32.mrf.mxu0
    %4195 = vmatprep.mubr.f32.mxu0 0.0
    %4196 = vmatmul.mubr.f32.gmra.mxu0 %v3820
    %v4197 = vpop.f32.mrf.mxu0
    %v4198 = vadd.f32 0.0, %v4197
    %v4199 = vpop.f32.mrf.mxu0
    %4200 = vmatprep.mubr.f32.mxu0 0.0
    %4201 = vmatmul.mubr.f32.gmra.mxu0 %v3823
    %v4202 = vpop.f32.mrf.mxu0
    %v4203 = vadd.f32 0.0, %v4202
    %v4204 = vpop.f32.mrf.mxu0
    %4205 = vmatprep.mubr.f32.mxu0 0.0
    %4206 = vmatmul.mubr.f32.gmra.mxu0 %v3826
    %v4207 = vpop.f32.mrf.mxu0
    %v4208 = vadd.f32 0.0, %v4207
    %v4209 = vpop.f32.mrf.mxu0
    %4210 = vmatprep.mubr.f32.mxu0 0.0
    %4211 = vmatmul.mubr.f32.gmra.mxu0 %v3829
    %v4212 = vpop.f32.mrf.mxu0
    %v4213 = vadd.f32 0.0, %v4212
    %v4214 = vpop.f32.mrf.mxu0
    %4215 = vdwg.mxu0
    %v4216 = vmul.f32 %v3898, %v3470
    %v4217 = vmul.f32 %v3903, %v3471
    %v4218 = vmul.f32 %v3908, %v3472
    %v4219 = vmul.f32 %v3913, %v3473
    %v4220 = vmul.f32 %v3918, %v3474
    %v4221 = vmul.f32 %v3923, %v3475
    %v4222 = vmul.f32 %v3928, %v3476
    %v4223 = vmul.f32 %v3933, %v3477
    %v4224 = vmul.f32 %v3938, %v3478
    %v4225 = vmul.f32 %v3943, %v3479
    %v4226 = vmul.f32 %v3948, %v3480
    %v4227 = vmul.f32 %v3953, %v3481
    %v4228 = vmul.f32 %v3958, %v3482
    %v4229 = vmul.f32 %v3963, %v3483
    %v4230 = vmul.f32 %v3968, %v3484
    %v4231 = vmul.f32 %v3973, %v3485
    %v4232 = vmul.f32 %v3978, %v3486
    %v4233 = vmul.f32 %v3983, %v3487
    %v4234 = vmul.f32 %v3988, %v3488
    %v4235 = vmul.f32 %v3993, %v3489
    %v4236 = vmul.f32 %v3998, %v3490
    %v4237 = vmul.f32 %v4003, %v3491
    %v4238 = vmul.f32 %v4008, %v3492
    %v4239 = vmul.f32 %v4013, %v3493
    %v4240 = vmul.f32 %v4018, %v3494
    %v4241 = vmul.f32 %v4023, %v3495
    %v4242 = vmul.f32 %v4028, %v3496
    %v4243 = vmul.f32 %v4033, %v3497
    %v4244 = vmul.f32 %v4038, %v3498
    %v4245 = vmul.f32 %v4043, %v3499
    %v4246 = vmul.f32 %v4048, %v3500
    %v4247 = vmul.f32 %v4053, %v3501
    %v4248 = vmul.f32 %v4058, %v3502
    %v4249 = vmul.f32 %v4063, %v3503
    %v4250 = vmul.f32 %v4068, %v3504
    %v4251 = vmul.f32 %v4073, %v3505
    %v4252 = vmul.f32 %v4078, %v3506
    %v4253 = vmul.f32 %v4083, %v3507
    %v4254 = vmul.f32 %v4088, %v3508
    %v4255 = vmul.f32 %v4093, %v3509
    %v4256 = vmul.f32 %v4098, %v3510
    %v4257 = vmul.f32 %v4103, %v3511
    %v4258 = vmul.f32 %v4108, %v3512
    %v4259 = vmul.f32 %v4113, %v3513
    %v4260 = vmul.f32 %v4118, %v3514
    %v4261 = vmul.f32 %v4123, %v3515
    %v4262 = vmul.f32 %v4128, %v3516
    %v4263 = vmul.f32 %v4133, %v3517
    %v4264 = vmul.f32 %v4138, %v3518
    %v4265 = vmul.f32 %v4143, %v3519
    %v4266 = vmul.f32 %v4148, %v3520
    %v4267 = vmul.f32 %v4153, %v3521
    %v4268 = vmul.f32 %v4158, %v3522
    %v4269 = vmul.f32 %v4163, %v3523
    %v4270 = vmul.f32 %v4168, %v3524
    %v4271 = vmul.f32 %v4173, %v3525
    %v4272 = vmul.f32 %v4178, %v3526
    %v4273 = vmul.f32 %v4183, %v3527
    %v4274 = vmul.f32 %v4188, %v3528
    %v4275 = vmul.f32 %v4193, %v3529
    %v4276 = vmul.f32 %v4198, %v3530
    %v4277 = vmul.f32 %v4203, %v3531
    %v4278 = vmul.f32 %v4208, %v3532
    %v4279 = vmul.f32 %v4213, %v3533
    %v4280 = vmul.f32 %v4216, %v2120
    %v4281 = vmul.f32 %v4217, %v2120
    %v4282 = vmul.f32 %v4218, %v2120
    %v4283 = vmul.f32 %v4219, %v2120
    %v4284 = vmul.f32 %v4220, %v2120
    %v4285 = vmul.f32 %v4221, %v2120
    %v4286 = vmul.f32 %v4222, %v2120
    %v4287 = vmul.f32 %v4223, %v2120
    %v4288 = vmul.f32 %v4224, %v2124
    %v4289 = vmul.f32 %v4225, %v2124
    %v4290 = vmul.f32 %v4226, %v2124
    %v4291 = vmul.f32 %v4227, %v2124
    %v4292 = vmul.f32 %v4228, %v2124
    %v4293 = vmul.f32 %v4229, %v2124
    %v4294 = vmul.f32 %v4230, %v2124
    %v4295 = vmul.f32 %v4231, %v2124
    %v4296 = vmul.f32 %v4232, %v2128
    %v4297 = vmul.f32 %v4233, %v2128
    %v4298 = vmul.f32 %v4234, %v2128
    %v4299 = vmul.f32 %v4235, %v2128
    %v4300 = vmul.f32 %v4236, %v2128
    %v4301 = vmul.f32 %v4237, %v2128
    %v4302 = vmul.f32 %v4238, %v2128
    %v4303 = vmul.f32 %v4239, %v2128
    %v4304 = vmul.f32 %v4240, %v2132
    %v4305 = vmul.f32 %v4241, %v2132
    %v4306 = vmul.f32 %v4242, %v2132
    %v4307 = vmul.f32 %v4243, %v2132
    %v4308 = vmul.f32 %v4244, %v2132
    %v4309 = vmul.f32 %v4245, %v2132
    %v4310 = vmul.f32 %v4246, %v2132
    %v4311 = vmul.f32 %v4247, %v2132
    %v4312 = vmul.f32 %v4248, %v2136
    %v4313 = vmul.f32 %v4249, %v2136
    %v4314 = vmul.f32 %v4250, %v2136
    %v4315 = vmul.f32 %v4251, %v2136
    %v4316 = vmul.f32 %v4252, %v2136
    %v4317 = vmul.f32 %v4253, %v2136
    %v4318 = vmul.f32 %v4254, %v2136
    %v4319 = vmul.f32 %v4255, %v2136
    %v4320 = vmul.f32 %v4256, %v2140
    %v4321 = vmul.f32 %v4257, %v2140
    %v4322 = vmul.f32 %v4258, %v2140
    %v4323 = vmul.f32 %v4259, %v2140
    %v4324 = vmul.f32 %v4260, %v2140
    %v4325 = vmul.f32 %v4261, %v2140
    %v4326 = vmul.f32 %v4262, %v2140
    %v4327 = vmul.f32 %v4263, %v2140
    %v4328 = vmul.f32 %v4264, %v2144
    %v4329 = vmul.f32 %v4265, %v2144
    %v4330 = vmul.f32 %v4266, %v2144
    %v4331 = vmul.f32 %v4267, %v2144
    %v4332 = vmul.f32 %v4268, %v2144
    %v4333 = vmul.f32 %v4269, %v2144
    %v4334 = vmul.f32 %v4270, %v2144
    %v4335 = vmul.f32 %v4271, %v2144
    %v4336 = vmul.f32 %v4272, %v2148
    %v4337 = vmul.f32 %v4273, %v2148
    %v4338 = vmul.f32 %v4274, %v2148
    %v4339 = vmul.f32 %v4275, %v2148
    %v4340 = vmul.f32 %v4276, %v2148
    %v4341 = vmul.f32 %v4277, %v2148
    %v4342 = vmul.f32 %v4278, %v2148
    %v4343 = vmul.f32 %v4279, %v2148
    %v4344 = vsel %vm121, %v4280, 0.0
    %v4345 = vsel %vm121, %v4288, 0.0
    %v4346 = vadd.f32 %v4344, %v4345
    %v4347 = vsel %vm121, %v4296, 0.0
    %v4348 = vadd.f32 %v4346, %v4347
    %v4349 = vsel %vm121, %v4304, 0.0
    %v4350 = vadd.f32 %v4348, %v4349
    %v4351 = vsel %vm121, %v4312, 0.0
    %v4352 = vadd.f32 %v4350, %v4351
    %v4353 = vsel %vm121, %v4320, 0.0
    %v4354 = vadd.f32 %v4352, %v4353
    %v4355 = vsel %vm121, %v4328, 0.0
    %v4356 = vadd.f32 %v4354, %v4355
    %v4357 = vsel %vm121, %v4336, 0.0
    %v4358 = vadd.f32 %v4356, %v4357
    %v4359 = vsel %vm121, %v4281, 0.0
    %v4360 = vsel %vm121, %v4289, 0.0
    %v4361 = vadd.f32 %v4359, %v4360
    %v4362 = vsel %vm121, %v4297, 0.0
    %v4363 = vadd.f32 %v4361, %v4362
    %v4364 = vsel %vm121, %v4305, 0.0
    %v4365 = vadd.f32 %v4363, %v4364
    %v4366 = vsel %vm121, %v4313, 0.0
    %v4367 = vadd.f32 %v4365, %v4366
    %v4368 = vsel %vm121, %v4321, 0.0
    %v4369 = vadd.f32 %v4367, %v4368
    %v4370 = vsel %vm121, %v4329, 0.0
    %v4371 = vadd.f32 %v4369, %v4370
    %v4372 = vsel %vm121, %v4337, 0.0
    %v4373 = vadd.f32 %v4371, %v4372
    %v4374 = vsel %vm121, %v4282, 0.0
    %v4375 = vsel %vm121, %v4290, 0.0
    %v4376 = vadd.f32 %v4374, %v4375
    %v4377 = vsel %vm121, %v4298, 0.0
    %v4378 = vadd.f32 %v4376, %v4377
    %v4379 = vsel %vm121, %v4306, 0.0
    %v4380 = vadd.f32 %v4378, %v4379
    %v4381 = vsel %vm121, %v4314, 0.0
    %v4382 = vadd.f32 %v4380, %v4381
    %v4383 = vsel %vm121, %v4322, 0.0
    %v4384 = vadd.f32 %v4382, %v4383
    %v4385 = vsel %vm121, %v4330, 0.0
    %v4386 = vadd.f32 %v4384, %v4385
    %v4387 = vsel %vm121, %v4338, 0.0
    %v4388 = vadd.f32 %v4386, %v4387
    %v4389 = vsel %vm121, %v4283, 0.0
    %v4390 = vsel %vm121, %v4291, 0.0
    %v4391 = vadd.f32 %v4389, %v4390
    %v4392 = vsel %vm121, %v4299, 0.0
    %v4393 = vadd.f32 %v4391, %v4392
    %v4394 = vsel %vm121, %v4307, 0.0
    %v4395 = vadd.f32 %v4393, %v4394
    %v4396 = vsel %vm121, %v4315, 0.0
    %v4397 = vadd.f32 %v4395, %v4396
    %v4398 = vsel %vm121, %v4323, 0.0
    %v4399 = vadd.f32 %v4397, %v4398
    %v4400 = vsel %vm121, %v4331, 0.0
    %v4401 = vadd.f32 %v4399, %v4400
    %v4402 = vsel %vm121, %v4339, 0.0
    %v4403 = vadd.f32 %v4401, %v4402
    %v4404 = vsel %vm121, %v4284, 0.0
    %v4405 = vsel %vm121, %v4292, 0.0
    %v4406 = vadd.f32 %v4404, %v4405
    %v4407 = vsel %vm121, %v4300, 0.0
    %v4408 = vadd.f32 %v4406, %v4407
    %v4409 = vsel %vm121, %v4308, 0.0
    %v4410 = vadd.f32 %v4408, %v4409
    %v4411 = vsel %vm121, %v4316, 0.0
    %v4412 = vadd.f32 %v4410, %v4411
    %v4413 = vsel %vm121, %v4324, 0.0
    %v4414 = vadd.f32 %v4412, %v4413
    %v4415 = vsel %vm121, %v4332, 0.0
    %v4416 = vadd.f32 %v4414, %v4415
    %v4417 = vsel %vm121, %v4340, 0.0
    %v4418 = vadd.f32 %v4416, %v4417
    %v4419 = vsel %vm121, %v4285, 0.0
    %v4420 = vsel %vm121, %v4293, 0.0
    %v4421 = vadd.f32 %v4419, %v4420
    %v4422 = vsel %vm121, %v4301, 0.0
    %v4423 = vadd.f32 %v4421, %v4422
    %v4424 = vsel %vm121, %v4309, 0.0
    %v4425 = vadd.f32 %v4423, %v4424
    %v4426 = vsel %vm121, %v4317, 0.0
    %v4427 = vadd.f32 %v4425, %v4426
    %v4428 = vsel %vm121, %v4325, 0.0
    %v4429 = vadd.f32 %v4427, %v4428
    %v4430 = vsel %vm121, %v4333, 0.0
    %v4431 = vadd.f32 %v4429, %v4430
    %v4432 = vsel %vm121, %v4341, 0.0
    %v4433 = vadd.f32 %v4431, %v4432
    %v4434 = vsel %vm121, %v4286, 0.0
    %v4435 = vsel %vm121, %v4294, 0.0
    %v4436 = vadd.f32 %v4434, %v4435
    %v4437 = vsel %vm121, %v4302, 0.0
    %v4438 = vadd.f32 %v4436, %v4437
    %v4439 = vsel %vm121, %v4310, 0.0
    %v4440 = vadd.f32 %v4438, %v4439
    %v4441 = vsel %vm121, %v4318, 0.0
    %v4442 = vadd.f32 %v4440, %v4441
    %v4443 = vsel %vm121, %v4326, 0.0
    %v4444 = vadd.f32 %v4442, %v4443
    %v4445 = vsel %vm121, %v4334, 0.0
    %v4446 = vadd.f32 %v4444, %v4445
    %v4447 = vsel %vm121, %v4342, 0.0
    %v4448 = vadd.f32 %v4446, %v4447
    %v4449 = vsel %vm121, %v4287, 0.0
    %v4450 = vsel %vm121, %v4295, 0.0
    %v4451 = vadd.f32 %v4449, %v4450
    %v4452 = vsel %vm121, %v4303, 0.0
    %v4453 = vadd.f32 %v4451, %v4452
    %v4454 = vsel %vm121, %v4311, 0.0
    %v4455 = vadd.f32 %v4453, %v4454
    %v4456 = vsel %vm121, %v4319, 0.0
    %v4457 = vadd.f32 %v4455, %v4456
    %v4458 = vsel %vm121, %v4327, 0.0
    %v4459 = vadd.f32 %v4457, %v4458
    %v4460 = vsel %vm121, %v4335, 0.0
    %v4461 = vadd.f32 %v4459, %v4460
    %v4462 = vsel %vm121, %v4343, 0.0
    %v4463 = vadd.f32 %v4461, %v4462
    %v4465 = vsel %vm121, %v4358, 0
    %v4468 = vsel %vm121, %v4373, 0
    %v4471 = vsel %vm121, %v4388, 0
    %v4474 = vsel %vm121, %v4403, 0
    %v4477 = vsel %vm121, %v4418, 0
    %v4480 = vsel %vm121, %v4433, 0
    %v4483 = vsel %vm121, %v4448, 0
    %v4486 = vsel %vm121, %v4463, 0
    %4488 = vmatprep.subr.mxu0 0.0
    %4489 = vmatpush1.msra.mxu0 0.0
    %4490 = vmatprep.subr.mxu0 0.0
    %4491 = vmatpush1.msra.mxu0 0.0
    %4492 = vmatprep.subr.mxu0 0.0
    %4493 = vmatpush1.msra.mxu0 0.0
    %4494 = vmatprep.subr.mxu0 0.0
    %4495 = vmatpush1.msra.mxu0 0.0
    %4496 = vmatprep.subr.mxu0 0.0
    %4497 = vmatpush1.msra.mxu0 0.0
    %4498 = vmatprep.subr.mxu0 0.0
    %4499 = vmatpush1.msra.mxu0 0.0
    %4500 = vmatprep.subr.mxu0 0.0
    %4501 = vmatpush1.msra.mxu0 0.0
    %4502 = vmatprep.subr.mxu0 0.0
    %4503 = vmatpush1.msra.mxu0 0.0
    %4504 = vmatprep.subr.mxu0 0.0
    %4505 = vmatpush1.msra.mxu0 %v111
    %4506 = vmatprep.subr.mxu0 0.0
    %4507 = vmatpush1.msra.mxu0 %v110
    %4508 = vmatprep.subr.mxu0 0.0
    %4509 = vmatpush1.msra.mxu0 %v109
    %4510 = vmatprep.subr.mxu0 0.0
    %4511 = vmatpush1.msra.mxu0 %v108
    %4512 = vmatprep.subr.mxu0 0.0
    %4513 = vmatpush1.msra.mxu0 %v107
    %4514 = vmatprep.subr.mxu0 0.0
    %4515 = vmatpush1.msra.mxu0 %v106
    %4516 = vmatprep.subr.mxu0 0.0
    %4517 = vmatpush1.msra.mxu0 %v105
    %4518 = vmatprep.subr.mxu0 0.0
    %4519 = vmatpush1.msra.mxu0 %v104
    %4520 = vmatprep.subr.mxu0 0.0
    %4521 = vmatpush2.msra.mxu0 0.0
    %4522 = vmatprep.subr.mxu0 0.0
    %4523 = vmatpush2.msra.mxu0 0.0
    %4524 = vmatprep.subr.mxu0 0.0
    %4525 = vmatpush2.msra.mxu0 0.0
    %4526 = vmatprep.subr.mxu0 0.0
    %4527 = vmatpush2.msra.mxu0 0.0
    %4528 = vmatprep.subr.mxu0 0.0
    %4529 = vmatpush2.msra.mxu0 0.0
    %4530 = vmatprep.subr.mxu0 0.0
    %4531 = vmatpush2.msra.mxu0 0.0
    %4532 = vmatprep.subr.mxu0 0.0
    %4533 = vmatpush2.msra.mxu0 0.0
    %4534 = vmatprep.subr.mxu0 0.0
    %4535 = vmatpush2.msra.mxu0 0.0
    %4536 = vmatprep.subr.mxu0 0.0
    %4537 = vmatpush2.msra.mxu0 0.0
    %4538 = vmatprep.subr.mxu0 0.0
    %4539 = vmatpush2.msra.mxu0 0.0
    %4540 = vmatprep.subr.mxu0 0.0
    %4541 = vmatpush2.msra.mxu0 0.0
    %4542 = vmatprep.subr.mxu0 0.0
    %4543 = vmatpush2.msra.mxu0 0.0
    %4544 = vmatprep.subr.mxu0 0.0
    %4545 = vmatpush2.msra.mxu0 0.0
    %4546 = vmatprep.subr.mxu0 0.0
    %4547 = vmatpush2.msra.mxu0 0.0
    %4548 = vmatprep.subr.mxu0 0.0
    %4549 = vmatpush2.msra.mxu0 0.0
    %4550 = vmatprep.subr.mxu0 0.0
    %4551 = vmatpush2.msra.mxu0 0.0
    %4552 = vmatprep.mubr.f32.mxu0 0.0
    %4553 = vmatmul.mubr.f32.gmra.mxu0 %v4465
    %v4554 = vpop.f32.mrf.mxu0
    %v4555 = vadd.f32 %v2345, %v4554
    %v4556 = vpop.f32.mrf.mxu0
    %4557 = vmatprep.mubr.f32.mxu0 0.0
    %4558 = vmatmul.mubr.f32.gmra.mxu0 %v4468
    %v4559 = vpop.f32.mrf.mxu0
    %v4560 = vadd.f32 %v2345, %v4559
    %v4561 = vpop.f32.mrf.mxu0
    %4562 = vmatprep.mubr.f32.mxu0 0.0
    %4563 = vmatmul.mubr.f32.gmra.mxu0 %v4471
    %v4564 = vpop.f32.mrf.mxu0
    %v4565 = vadd.f32 %v2345, %v4564
    %v4566 = vpop.f32.mrf.mxu0
    %4567 = vmatprep.mubr.f32.mxu0 0.0
    %4568 = vmatmul.mubr.f32.gmra.mxu0 %v4474
    %v4569 = vpop.f32.mrf.mxu0
    %v4570 = vadd.f32 %v2345, %v4569
    %v4571 = vpop.f32.mrf.mxu0
    %4572 = vmatprep.mubr.f32.mxu0 0.0
    %4573 = vmatmul.mubr.f32.gmra.mxu0 %v4477
    %v4574 = vpop.f32.mrf.mxu0
    %v4575 = vadd.f32 %v2345, %v4574
    %v4576 = vpop.f32.mrf.mxu0
    %4577 = vmatprep.mubr.f32.mxu0 0.0
    %4578 = vmatmul.mubr.f32.gmra.mxu0 %v4480
    %v4579 = vpop.f32.mrf.mxu0
    %v4580 = vadd.f32 %v2345, %v4579
    %v4581 = vpop.f32.mrf.mxu0
    %4582 = vmatprep.mubr.f32.mxu0 0.0
    %4583 = vmatmul.mubr.f32.gmra.mxu0 %v4483
    %v4584 = vpop.f32.mrf.mxu0
    %v4585 = vadd.f32 %v2345, %v4584
    %v4586 = vpop.f32.mrf.mxu0
    %4587 = vmatprep.mubr.f32.mxu0 0.0
    %4588 = vmatmul.mubr.f32.gmra.mxu0 %v4486
    %v4589 = vpop.f32.mrf.mxu0
    %v4590 = vadd.f32 %v2345, %v4589
    %v4591 = vpop.f32.mrf.mxu0
    %4592 = vdwg.mxu0
    %4601 = vrot.lane.b32.xlu0 %v4555, 64
    %v4602 = vpop.permute.xlu0 %4601
    %4603 = vrot.lane.b32.xlu0 %v4560, 64
    %v4604 = vpop.permute.xlu0 %4603
    %4605 = vrot.lane.b32.xlu0 %v4565, 64
    %v4606 = vpop.permute.xlu0 %4605
    %4607 = vrot.lane.b32.xlu0 %v4570, 64
    %v4608 = vpop.permute.xlu0 %4607
    %4609 = vrot.lane.b32.xlu0 %v4575, 64
    %v4610 = vpop.permute.xlu0 %4609
    %4611 = vrot.lane.b32.xlu0 %v4580, 64
    %v4612 = vpop.permute.xlu0 %4611
    %4613 = vrot.lane.b32.xlu0 %v4585, 64
    %v4614 = vpop.permute.xlu0 %4613
    %4615 = vrot.lane.b32.xlu0 %v4590, 64
    %v4616 = vpop.permute.xlu0 %4615
    %v4625 = vsel %vm121, %v2438, %v4602
    %v4626 = vsel %vm121, %v2443, %v4604
    %v4627 = vsel %vm121, %v2448, %v4606
    %v4628 = vsel %vm121, %v2453, %v4608
    %v4629 = vsel %vm121, %v2458, %v4610
    %v4630 = vsel %vm121, %v2463, %v4612
    %v4631 = vsel %vm121, %v2468, %v4614
    %v4632 = vsel %vm121, %v2473, %v4616
    %4633 = vst [vmem:[#allocation2] sm:$0xff] %v4625
    %4634 = vst [vmem:[#allocation2 + $0x8] sm:$0xff] %v4626
    %4635 = vst [vmem:[#allocation2 + $0x10] sm:$0xff] %v4627
    %4636 = vst [vmem:[#allocation2 + $0x18] sm:$0xff] %v4628
    %4637 = vst [vmem:[#allocation2 + $0x20] sm:$0xff] %v4629
    %4638 = vst [vmem:[#allocation2 + $0x28] sm:$0xff] %v4630
    %4639 = vst [vmem:[#allocation2 + $0x30] sm:$0xff] %v4631
    %4640 = vst [vmem:[#allocation2 + $0x38] sm:$0xff] %v4632
    // Predicated region
    $region26: #{tpu_custom_call.1} parent=1 // pred_check
      _
    $region27: #{tpu_custom_call.1} parent=1 // pred_check_branch
      %4642 = sbr.rel (0) target = $region29
    $region28: #{tpu_custom_call.1} parent=1 // pred_region
      %s4644 = ssub.s32 1024, 1024
      %4645 = vsyncadd [#allocation3], %s4644
      %s4646 = sshll.u32 [#allocation2], 4
      %s4647 = int_to_ptr.vmem [resolvable:$true] %s4646
      %4652 = dma.vmem_to_hbm [thread:$0]  %s4647, 1024, %s6, [#allocation3], 128, 128, 8
    $region29: #{tpu_custom_call.1} parent=1 // pred_fallthru
      _
    // Predicated region
    $region30: #{tpu_custom_call.1} parent=1 // pred_check
      _
    $region31: #{tpu_custom_call.1} parent=1 // pred_check_branch
      %4654 = sbr.rel (0) target = $region33
    $region32: #{tpu_custom_call.1} parent=1 // pred_region
      %4655 = dma.done [#allocation3], 1024
    $region33: #{tpu_custom_call.1} parent=1 // pred_fallthru
      _
    %4656 = vsyncpa [#allocation3], 1

</llo_original>
